<compile_context>
chip_gen: v5e
topology: v5e:2x2
jax: 0.10.0
libtpu: 0.0.40
codegen_flags: <defaults>
</compile_context>

<pallas_src>
import jax
import jax.numpy as jnp
from jax.experimental import pallas as pl
from jax.experimental.pallas import tpu as pltpu


def _layernorm(x, w, b, eps=1e-5):
    mu = jnp.mean(x, axis=-1, keepdims=True)
    var = jnp.mean((x - mu) ** 2, axis=-1, keepdims=True)
    return (x - mu) * jax.lax.rsqrt(var + eps) * w + b


def make_encoder_head_kernel(n_heads, d_model, tile_b, num_patch, n_layers):
    d_head = d_model // n_heads
    cdt = jnp.bfloat16  # MXU operand dtype; accumulation stays f32
    R = tile_b * num_patch
    D = d_model

    def kernel(x_in_ref, wp_ref, emb_ref,
               wqkv_ref, bqkv_ref, wo_ref, bo_ref,
               ln1w_ref, ln1b_ref, w1_ref, b1_ref, w2_ref, b2_ref,
               ln2w_ref, ln2b_ref,
               lnfw_ref, lnfb_ref, wh_ref, bh_ref,
               o_ref, x_sc):
        l = pl.program_id(1)

        # ----- learned patch embedding, only on the first layer step -----
        @pl.when(l == 0)
        def _():
            xp = x_in_ref[...].astype(cdt)                       # (R, P)
            x0 = jnp.dot(xp, wp_ref[...], preferred_element_type=jnp.float32)
            # emb = positional embedding + patch-embed bias, pre-tiled to (R, D)
            x_sc[...] = x0 + emb_ref[...]

        x = x_sc[...]                                            # (R, D) f32

        # per-layer weights (layer-indexed blocks; leading dim is 1)
        wqkv, bqkv = wqkv_ref[0], bqkv_ref[0]
        wo, bo = wo_ref[0], bo_ref[0]
        ln1w, ln1b = ln1w_ref[0], ln1b_ref[0]
        w1, b1 = w1_ref[0], b1_ref[0]
        w2, b2 = w2_ref[0], b2_ref[0]
        ln2w, ln2b = ln2w_ref[0], ln2b_ref[0]

        # ----- multi-head full attention (FullAttention, mask_flag=False) -----
        xb = x.astype(cdt)
        qkv = jnp.dot(xb, wqkv, preferred_element_type=jnp.float32) + bqkv
        # softmax scale already folded into Wq/bq on the host
        q3 = qkv[:, :D].reshape(tile_b, num_patch, D).astype(cdt)
        k3 = qkv[:, D:2 * D].reshape(tile_b, num_patch, D).astype(cdt)
        v3 = qkv[:, 2 * D:].reshape(tile_b, num_patch, D).astype(cdt)

        heads = []
        for h in range(n_heads):
            sl = slice(h * d_head, (h + 1) * d_head)
            s = jnp.einsum('bnd,bmd->bnm', q3[..., sl], k3[..., sl],
                           preferred_element_type=jnp.float32)
            s = s - jnp.max(s, axis=-1, keepdims=True)
            p = jnp.exp(s)
            p = p * pl.reciprocal(jnp.sum(p, axis=-1, keepdims=True),
                                  approx=True)
            heads.append(jnp.einsum('bnm,bmd->bnd', p.astype(cdt),
                                    v3[..., sl],
                                    preferred_element_type=jnp.float32))
        attn = jnp.concatenate(heads, axis=-1).reshape(R, D)
        attn = jnp.dot(attn.astype(cdt), wo,
                       preferred_element_type=jnp.float32) + bo

        # ----- post-norm transformer block (Informer/PatchTST EncoderLayer) -----
        x1 = _layernorm(x + attn, ln1w, ln1b)
        y = jnp.dot(x1.astype(cdt), w1, preferred_element_type=jnp.float32) + b1
        # TODO(synk): PyTorch F.gelu default is the exact erf form; tanh
        # approximation used here for guaranteed Mosaic lowering (~1e-3 close).
        y = jax.nn.gelu(y, approximate=True)
        y = jnp.dot(y.astype(cdt), w2, preferred_element_type=jnp.float32) + b2
        x2 = _layernorm(x1 + y, ln2w, ln2b)
        x_sc[...] = x2

        # ----- final LayerNorm + PretrainHead, only on the last layer step -----
        @pl.when(l == n_layers - 1)
        def _():
            xf = _layernorm(x2, lnfw_ref[...], lnfb_ref[...])
            out = jnp.dot(xf.astype(cdt), wh_ref[...],
                          preferred_element_type=jnp.float32) + bh_ref[...]
            o_ref[...] = out.astype(o_ref.dtype)

    return kernel


def _pick_tile_b(bt, num_patch):
    """Series tile so tile_b*num_patch ~ 256 rows, tile_b a multiple of 8."""
    target_rows = 256
    tb = -(-target_rows // num_patch)      # ceil
    tb = -(-tb // 8) * 8                   # round up to multiple of 8
    bt_pad8 = -(-bt // 8) * 8
    return max(8, min(tb, bt_pad8))


def encoder_head_pallas(x_patch_masked, params, *, n_layers, n_heads, tile_b=None):
    """x_patch_masked: [bs*nvars, num_patch, patch_len] -> same shape (f32)."""
    Bt, N, P = x_patch_masked.shape
    D = params['wp'].shape[1]

    if tile_b is None:
        tile_b = _pick_tile_b(Bt, N)
    Bt_pad = -(-Bt // tile_b) * tile_b
    if Bt_pad != Bt:
        x_patch_masked = jnp.pad(
            x_patch_masked, ((0, Bt_pad - Bt), (0, 0), (0, 0)))
    R = tile_b * N

    # Flatten to 2-D [Bt_pad*N, P]: each grid step reads/writes full rows, so
    # the HBM-side DMA is one contiguous chunk per batch tile.
    x_flat = x_patch_masked.reshape(Bt_pad * N, P)

    cdt = jnp.bfloat16
    scale = 1.0 / ((D // n_heads) ** 0.5)

    # Fused QKV weights/bias with the softmax scale folded into Q.
    wqkv = jnp.concatenate(
        [params['wq'] * scale, params['wk'], params['wv']], axis=-1).astype(cdt)
    bqkv = jnp.concatenate(
        [params['bq'] * scale, params['bk'], params['bv']], axis=-1
    ).astype(jnp.float32)

    # Positional embedding + patch-embed bias, pre-tiled to the row tile (R, D).
    emb = jnp.tile(params['pos'] + params['bp'], (tile_b, 1)).astype(jnp.float32)

    glob_head = [params['wp'].astype(cdt), emb]
    per_layer = [
        wqkv, bqkv,
        params['wo'].astype(cdt), params['bo'].astype(jnp.float32),
        params['ln1w'].astype(jnp.float32), params['ln1b'].astype(jnp.float32),
        params['w1'].astype(cdt), params['b1'].astype(jnp.float32),
        params['w2'].astype(cdt), params['b2'].astype(jnp.float32),
        params['ln2w'].astype(jnp.float32), params['ln2b'].astype(jnp.float32),
    ]
    glob_tail = [
        params['lnfw'].astype(jnp.float32), params['lnfb'].astype(jnp.float32),
        params['wh'].astype(cdt), params['bh'].astype(jnp.float32),
    ]

    def const_spec(a):
        zeros = (0,) * a.ndim
        return pl.BlockSpec(a.shape, lambda b, l, z=zeros: z)

    def layer_spec(a):
        tail = (0,) * (a.ndim - 1)
        return pl.BlockSpec((1,) + a.shape[1:], lambda b, l, t=tail: (l,) + t)

    in_specs = ([pl.BlockSpec((R, P), lambda b, l: (b, 0))]
                + [const_spec(a) for a in glob_head]
                + [layer_spec(a) for a in per_layer]
                + [const_spec(a) for a in glob_tail])

    kernel = make_encoder_head_kernel(
        n_heads=n_heads, d_model=D, tile_b=tile_b, num_patch=N,
        n_layers=n_layers)

    out = pl.pallas_call(
        kernel,
        grid=(Bt_pad // tile_b, n_layers),
        in_specs=in_specs,
        out_specs=pl.BlockSpec((R, P), lambda b, l: (b, 0)),
        out_shape=jax.ShapeDtypeStruct((Bt_pad * N, P), jnp.float32),
        scratch_shapes=[pltpu.VMEM((R, D), jnp.float32)],  # residual stream
        compiler_params=pltpu.CompilerParams(
            dimension_semantics=("parallel", "arbitrary"),
            vmem_limit_bytes=48 * 1024 * 1024),
    )(x_flat, *glob_head, *per_layer, *glob_tail)

    out = out.reshape(Bt_pad, N, P)
    return out[:Bt]


def pretrain_model_forward(params, x_enc, x_mark_enc=None, x_dec=None, x_mark_dec=None,
                           *, mask_key, patch_len, stride, mask_ratio, n_layers, n_heads):
    """Returns (x, x_patch, mask) like PretrainModel.forward (x_mark_*/x_dec unused)."""
    bs, seq_len, nvars = x_enc.shape

    # --- RevIN 'norm' (instance norm over time with learnable affine) ---
    mu = jnp.mean(x_enc, axis=1, keepdims=True)
    std = jnp.sqrt(jnp.var(x_enc, axis=1, keepdims=True) + 1e-5)
    xn = (x_enc - mu) / std * params['revin_w'] + params['revin_b']

    # permute -> [bs, nvars, seq_len]
    xn = jnp.transpose(xn, (0, 2, 1))

    # --- patching (padding = 0) ---
    num_patch = (seq_len - patch_len) // stride + 1
    idx = jnp.arange(num_patch)[:, None] * stride + jnp.arange(patch_len)[None, :]
    x_patch = xn[:, :, idx]  # [bs, nvars, num_patch, patch_len]

    # --- random masking (MAE-style, exactly floor(mask_ratio*num_patch) masked) ---
    len_keep = int(num_patch * (1.0 - mask_ratio))
    noise = jax.random.uniform(mask_key, (bs, nvars, num_patch))
    ids_shuffle = jnp.argsort(noise, axis=-1)
    ids_restore = jnp.argsort(ids_shuffle, axis=-1)
    mask0 = (jnp.arange(num_patch) >= len_keep).astype(jnp.float32)
    mask = jnp.take_along_axis(jnp.broadcast_to(mask0, (bs, nvars, num_patch)),
                               ids_restore, axis=-1)  # 1 = masked
    x_masked = x_patch * (1.0 - mask)[..., None]

    # --- fused Pallas kernel: embed -> encoder -> final LN -> head ---
    xm = x_masked.reshape(bs * nvars, num_patch, patch_len)
    enc = encoder_head_pallas(xm, params, n_layers=n_layers, n_heads=n_heads)

    out = enc.reshape(bs, nvars, num_patch, patch_len)
    out = jnp.transpose(out, (0, 2, 1, 3))  # PretrainHead permute(0, 2, 1, 3)
    return out, x_patch, mask


def init_params(key, *, enc_in, seq_len, patch_len, stride, d_model, d_ff, e_layers):
    num_patch = (seq_len - patch_len) // stride + 1
    keys = iter(jax.random.split(key, 64))

    def lin(fan_in, shape):
        bound = 1.0 / (fan_in ** 0.5)
        return jax.random.uniform(next(keys), shape, jnp.float32, -bound, bound)

    L = e_layers
    p = {
        'revin_w': jnp.ones((enc_in,), jnp.float32),
        'revin_b': jnp.zeros((enc_in,), jnp.float32),
        'wp': lin(patch_len, (patch_len, d_model)),
        'bp': lin(patch_len, (1, d_model)),
        'pos': 0.02 * jax.random.normal(next(keys), (num_patch, d_model), jnp.float32),
        'wq': lin(d_model, (L, d_model, d_model)),
        'bq': lin(d_model, (L, 1, d_model)),
        'wk': lin(d_model, (L, d_model, d_model)),
        'bk': lin(d_model, (L, 1, d_model)),
        'wv': lin(d_model, (L, d_model, d_model)),
        'bv': lin(d_model, (L, 1, d_model)),
        'wo': lin(d_model, (L, d_model, d_model)),
        'bo': lin(d_model, (L, 1, d_model)),
        'ln1w': jnp.ones((L, 1, d_model), jnp.float32),
        'ln1b': jnp.zeros((L, 1, d_model), jnp.float32),
        'w1': lin(d_model, (L, d_model, d_ff)),
        'b1': lin(d_model, (L, 1, d_ff)),
        'w2': lin(d_ff, (L, d_ff, d_model)),
        'b2': lin(d_ff, (L, 1, d_model)),
        'ln2w': jnp.ones((L, 1, d_model), jnp.float32),
        'ln2b': jnp.zeros((L, 1, d_model), jnp.float32),
        'lnfw': jnp.ones((1, d_model), jnp.float32),
        'lnfb': jnp.zeros((1, d_model), jnp.float32),
        'wh': lin(d_model, (d_model, patch_len)),
        'bh': lin(d_model, (1, patch_len)),
    }
    return p


if __name__ == "__main__":
    # small config consistent with the module
    bs, seq_len, enc_in = 2, 16, 4
    patch_len, stride = 4, 4
    d_model, n_heads, d_ff, e_layers = 32, 4, 64, 2
    mask_ratio = 0.4

    key = jax.random.PRNGKey(0)
    k_x, k_p, k_m = jax.random.split(key, 3)

    x_enc = jax.random.normal(k_x, (bs, seq_len, enc_in), jnp.float32)
    x_mark_enc = jnp.zeros((bs, seq_len, 4), jnp.float32)   # unused by forward
    x_dec = jnp.zeros((bs, seq_len, enc_in), jnp.float32)   # unused by forward
    x_mark_dec = jnp.zeros((bs, seq_len, 4), jnp.float32)   # unused by forward

    params = init_params(k_p, enc_in=enc_in, seq_len=seq_len, patch_len=patch_len,
                         stride=stride, d_model=d_model, d_ff=d_ff, e_layers=e_layers)

    out, x_patch, mask = pretrain_model_forward(
        params, x_enc, x_mark_enc, x_dec, x_mark_dec,
        mask_key=k_m, patch_len=patch_len, stride=stride, mask_ratio=mask_ratio,
        n_layers=e_layers, n_heads=n_heads)

    jax.block_until_ready((out, x_patch, mask))
    num_patch = (seq_len - patch_len) // stride + 1
    assert out.shape == (bs, num_patch, enc_in, patch_len)
    assert x_patch.shape == (bs, enc_in, num_patch, patch_len)
    assert mask.shape == (bs, enc_in, num_patch)
    assert bool(jnp.all(jnp.isfinite(out)))
    print("KERNEL_OK")
</pallas_src>

<mosaic_0001>
module attributes {stable_mosaic.version = 11 : i64} {
  func.func @kernel(%arg0: i32, %arg1: i32, %arg2: memref<32x4xf32, #tpu.memory_space<vmem>>, %arg3: memref<4x32xbf16, #tpu.memory_space<vmem>>, %arg4: memref<32x32xf32, #tpu.memory_space<vmem>>, %arg5: memref<1x32x96xbf16, #tpu.memory_space<vmem>>, %arg6: memref<1x1x96xf32, #tpu.memory_space<vmem>>, %arg7: memref<1x32x32xbf16, #tpu.memory_space<vmem>>, %arg8: memref<1x1x32xf32, #tpu.memory_space<vmem>>, %arg9: memref<1x1x32xf32, #tpu.memory_space<vmem>>, %arg10: memref<1x1x32xf32, #tpu.memory_space<vmem>>, %arg11: memref<1x32x64xbf16, #tpu.memory_space<vmem>>, %arg12: memref<1x1x64xf32, #tpu.memory_space<vmem>>, %arg13: memref<1x64x32xbf16, #tpu.memory_space<vmem>>, %arg14: memref<1x1x32xf32, #tpu.memory_space<vmem>>, %arg15: memref<1x1x32xf32, #tpu.memory_space<vmem>>, %arg16: memref<1x1x32xf32, #tpu.memory_space<vmem>>, %arg17: memref<1x32xf32, #tpu.memory_space<vmem>>, %arg18: memref<1x32xf32, #tpu.memory_space<vmem>>, %arg19: memref<32x4xbf16, #tpu.memory_space<vmem>>, %arg20: memref<1x4xf32, #tpu.memory_space<vmem>>, %arg21: memref<32x4xf32, #tpu.memory_space<vmem>>, %arg22: memref<32x32xf32, #tpu.memory_space<vmem>>) attributes {dimension_semantics = [#tpu.dimension_semantics<parallel>, #tpu.dimension_semantics<arbitrary>], iteration_bounds = array<i64: 1, 2>, scalar_prefetch = 0 : i64, scratch_operands = 1 : i64, tpu.core_type = #tpu.core_type<tc>, window_params = [{transform_indices = @transform_0, window_bounds = array<i64: 32, 4>}, {pipeline_mode = #tpu.pipeline_mode<synchronous>, transform_indices = @transform_1, window_bounds = array<i64: 4, 32>}, {pipeline_mode = #tpu.pipeline_mode<synchronous>, transform_indices = @transform_2, window_bounds = array<i64: 32, 32>}, {transform_indices = @transform_3, window_bounds = array<i64: 1, 32, 96>}, {transform_indices = @transform_4, window_bounds = array<i64: 1, 1, 96>}, {transform_indices = @transform_5, window_bounds = array<i64: 1, 32, 32>}, {transform_indices = @transform_6, window_bounds = array<i64: 1, 1, 32>}, {transform_indices = @transform_7, window_bounds = array<i64: 1, 1, 32>}, {transform_indices = @transform_8, window_bounds = array<i64: 1, 1, 32>}, {transform_indices = @transform_9, window_bounds = array<i64: 1, 32, 64>}, {transform_indices = @transform_10, window_bounds = array<i64: 1, 1, 64>}, {transform_indices = @transform_11, window_bounds = array<i64: 1, 64, 32>}, {transform_indices = @transform_12, window_bounds = array<i64: 1, 1, 32>}, {transform_indices = @transform_13, window_bounds = array<i64: 1, 1, 32>}, {transform_indices = @transform_14, window_bounds = array<i64: 1, 1, 32>}, {pipeline_mode = #tpu.pipeline_mode<synchronous>, transform_indices = @transform_15, window_bounds = array<i64: 1, 32>}, {pipeline_mode = #tpu.pipeline_mode<synchronous>, transform_indices = @transform_16, window_bounds = array<i64: 1, 32>}, {pipeline_mode = #tpu.pipeline_mode<synchronous>, transform_indices = @transform_17, window_bounds = array<i64: 32, 4>}, {pipeline_mode = #tpu.pipeline_mode<synchronous>, transform_indices = @transform_18, window_bounds = array<i64: 1, 4>}, {transform_indices = @transform_19, window_bounds = array<i64: 32, 4>}]} {
    %c0_i32 = arith.constant 0 : i32
    %0 = arith.cmpi eq, %arg1, %c0_i32 : i32
    %1 = arith.extui %0 : i1 to i32
    %c0_i32_0 = arith.constant 0 : i32
    %2 = arith.cmpi ne, %1, %c0_i32_0 : i32
    scf.if %2 {
      %c0_74 = arith.constant 0 : index
      %c0_75 = arith.constant 0 : index
      %182 = vector.load %arg2[%c0_74, %c0_75] : memref<32x4xf32, #tpu.memory_space<vmem>>, vector<32x4xf32>
      %183 = arith.truncf %182 : vector<32x4xf32> to vector<32x4xbf16>
      %c0_76 = arith.constant 0 : index
      %c0_77 = arith.constant 0 : index
      %184 = vector.load %arg3[%c0_76, %c0_77] : memref<4x32xbf16, #tpu.memory_space<vmem>>, vector<4x32xbf16>
      %cst_78 = arith.constant dense<0.000000e+00> : vector<32x32xf32>
      %185 = tpu.matmul %183, %184, %cst_78 {dimension_numbers = #tpu.dot_dimension_numbers<[1], [0], [0], [1], [0, 0, 1, 1], [], []>} : vector<32x4xbf16>, vector<4x32xbf16>, vector<32x32xf32> -> vector<32x32xf32>
      %c0_79 = arith.constant 0 : index
      %c0_80 = arith.constant 0 : index
      %186 = vector.load %arg4[%c0_79, %c0_80] : memref<32x32xf32, #tpu.memory_space<vmem>>, vector<32x32xf32>
      %187 = arith.addf %185, %186 : vector<32x32xf32>
      %c0_81 = arith.constant 0 : index
      %c0_82 = arith.constant 0 : index
      %188 = vector.load %arg22[%c0_81, %c0_82] : memref<32x32xf32, #tpu.memory_space<vmem>>, vector<32x32xf32>
      tpu.vector_store %arg22[%c0_81, %c0_82], %187 {strides = array<i32>} : memref<32x32xf32, #tpu.memory_space<vmem>>, vector<32x32xf32>,
    } else {
    }
    %c0 = arith.constant 0 : index
    %c0_1 = arith.constant 0 : index
    %3 = vector.load %arg22[%c0, %c0_1] : memref<32x32xf32, #tpu.memory_space<vmem>>, vector<32x32xf32>
    %c0_2 = arith.constant 0 : index
    %c0_3 = arith.constant 0 : index
    %c0_4 = arith.constant 0 : index
    %4 = vector.load %arg5[%c0_2, %c0_3, %c0_4] : memref<1x32x96xbf16, #tpu.memory_space<vmem>>, vector<1x32x96xbf16>
    %5 = vector.shape_cast %4 : vector<1x32x96xbf16> to vector<32x96xbf16>
    %c0_5 = arith.constant 0 : index
    %c0_6 = arith.constant 0 : index
    %c0_7 = arith.constant 0 : index
    %6 = vector.load %arg6[%c0_5, %c0_6, %c0_7] : memref<1x1x96xf32, #tpu.memory_space<vmem>>, vector<1x1x96xf32>
    %7 = vector.shape_cast %6 : vector<1x1x96xf32> to vector<1x96xf32>
    %c0_8 = arith.constant 0 : index
    %c0_9 = arith.constant 0 : index
    %c0_10 = arith.constant 0 : index
    %8 = vector.load %arg7[%c0_8, %c0_9, %c0_10] : memref<1x32x32xbf16, #tpu.memory_space<vmem>>, vector<1x32x32xbf16>
    %9 = vector.shape_cast %8 : vector<1x32x32xbf16> to vector<32x32xbf16>
    %c0_11 = arith.constant 0 : index
    %c0_12 = arith.constant 0 : index
    %c0_13 = arith.constant 0 : index
    %10 = vector.load %arg8[%c0_11, %c0_12, %c0_13] : memref<1x1x32xf32, #tpu.memory_space<vmem>>, vector<1x1x32xf32>
    %11 = vector.shape_cast %10 : vector<1x1x32xf32> to vector<1x32xf32>
    %c0_14 = arith.constant 0 : index
    %c0_15 = arith.constant 0 : index
    %c0_16 = arith.constant 0 : index
    %12 = vector.load %arg9[%c0_14, %c0_15, %c0_16] : memref<1x1x32xf32, #tpu.memory_space<vmem>>, vector<1x1x32xf32>
    %13 = vector.shape_cast %12 : vector<1x1x32xf32> to vector<1x32xf32>
    %c0_17 = arith.constant 0 : index
    %c0_18 = arith.constant 0 : index
    %c0_19 = arith.constant 0 : index
    %14 = vector.load %arg10[%c0_17, %c0_18, %c0_19] : memref<1x1x32xf32, #tpu.memory_space<vmem>>, vector<1x1x32xf32>
    %15 = vector.shape_cast %14 : vector<1x1x32xf32> to vector<1x32xf32>
    %c0_20 = arith.constant 0 : index
    %c0_21 = arith.constant 0 : index
    %c0_22 = arith.constant 0 : index
    %16 = vector.load %arg11[%c0_20, %c0_21, %c0_22] : memref<1x32x64xbf16, #tpu.memory_space<vmem>>, vector<1x32x64xbf16>
    %17 = vector.shape_cast %16 : vector<1x32x64xbf16> to vector<32x64xbf16>
    %c0_23 = arith.constant 0 : index
    %c0_24 = arith.constant 0 : index
    %c0_25 = arith.constant 0 : index
    %18 = vector.load %arg12[%c0_23, %c0_24, %c0_25] : memref<1x1x64xf32, #tpu.memory_space<vmem>>, vector<1x1x64xf32>
    %19 = vector.shape_cast %18 : vector<1x1x64xf32> to vector<1x64xf32>
    %c0_26 = arith.constant 0 : index
    %c0_27 = arith.constant 0 : index
    %c0_28 = arith.constant 0 : index
    %20 = vector.load %arg13[%c0_26, %c0_27, %c0_28] : memref<1x64x32xbf16, #tpu.memory_space<vmem>>, vector<1x64x32xbf16>
    %21 = vector.shape_cast %20 : vector<1x64x32xbf16> to vector<64x32xbf16>
    %c0_29 = arith.constant 0 : index
    %c0_30 = arith.constant 0 : index
    %c0_31 = arith.constant 0 : index
    %22 = vector.load %arg14[%c0_29, %c0_30, %c0_31] : memref<1x1x32xf32, #tpu.memory_space<vmem>>, vector<1x1x32xf32>
    %23 = vector.shape_cast %22 : vector<1x1x32xf32> to vector<1x32xf32>
    %c0_32 = arith.constant 0 : index
    %c0_33 = arith.constant 0 : index
    %c0_34 = arith.constant 0 : index
    %24 = vector.load %arg15[%c0_32, %c0_33, %c0_34] : memref<1x1x32xf32, #tpu.memory_space<vmem>>, vector<1x1x32xf32>
    %25 = vector.shape_cast %24 : vector<1x1x32xf32> to vector<1x32xf32>
    %c0_35 = arith.constant 0 : index
    %c0_36 = arith.constant 0 : index
    %c0_37 = arith.constant 0 : index
    %26 = vector.load %arg16[%c0_35, %c0_36, %c0_37] : memref<1x1x32xf32, #tpu.memory_space<vmem>>, vector<1x1x32xf32>
    %27 = vector.shape_cast %26 : vector<1x1x32xf32> to vector<1x32xf32>
    %28 = arith.truncf %3 : vector<32x32xf32> to vector<32x32xbf16>
    %cst = arith.constant dense<0.000000e+00> : vector<32x96xf32>
    %29 = tpu.matmul %28, %5, %cst {dimension_numbers = #tpu.dot_dimension_numbers<[1], [0], [0], [1], [0, 0, 1, 1], [], []>} : vector<32x32xbf16>, vector<32x96xbf16>, vector<32x96xf32> -> vector<32x96xf32>
    %30 = vector.broadcast %7 : vector<1x96xf32> to vector<32x96xf32>
    %31 = arith.addf %29, %30 : vector<32x96xf32>
    %32 = vector.extract_strided_slice %31 {offsets = [0, 0], sizes = [32, 32], strides = [1, 1]} : vector<32x96xf32> to vector<32x32xf32>
    %33 = vector.shape_cast %32 : vector<32x32xf32> to vector<8x4x32xf32>
    %34 = arith.truncf %33 : vector<8x4x32xf32> to vector<8x4x32xbf16>
    %35 = vector.extract_strided_slice %31 {offsets = [0, 32], sizes = [32, 32], strides = [1, 1]} : vector<32x96xf32> to vector<32x32xf32>
    %36 = vector.shape_cast %35 : vector<32x32xf32> to vector<8x4x32xf32>
    %37 = arith.truncf %36 : vector<8x4x32xf32> to vector<8x4x32xbf16>
    %38 = vector.extract_strided_slice %31 {offsets = [0, 64], sizes = [32, 32], strides = [1, 1]} : vector<32x96xf32> to vector<32x32xf32>
    %39 = vector.shape_cast %38 : vector<32x32xf32> to vector<8x4x32xf32>
    %40 = arith.truncf %39 : vector<8x4x32xf32> to vector<8x4x32xbf16>
    %41 = vector.extract_strided_slice %34 {offsets = [0, 0, 0], sizes = [8, 4, 8], strides = [1, 1, 1]} : vector<8x4x32xbf16> to vector<8x4x8xbf16>
    %42 = vector.extract_strided_slice %37 {offsets = [0, 0, 0], sizes = [8, 4, 8], strides = [1, 1, 1]} : vector<8x4x32xbf16> to vector<8x4x8xbf16>
    "tpu.trace_start"() <{level = 10 : i32, message = "bnd,bmd->bnm"}> : () -> ()
    %cst_38 = arith.constant dense<0.000000e+00> : vector<8x4x4xf32>
    %43 = tpu.matmul %41, %42, %cst_38 {dimension_numbers = #tpu.dot_dimension_numbers<[2], [2], [1], [1], [0, 0, 0, 1, 1, 1], [0], [0]>} : vector<8x4x8xbf16>, vector<8x4x8xbf16>, vector<8x4x4xf32> -> vector<8x4x4xf32>
    "tpu.trace_stop"() : () -> ()
    %cst_39 = arith.constant dense<0xFF800000> : vector<8x4xf32>
    %44 = vector.multi_reduction <maximumf>, %43, %cst_39 [2] : vector<8x4x4xf32> to vector<8x4xf32>
    %45 = vector.shape_cast %44 : vector<8x4xf32> to vector<8x4x1xf32>
    %46 = vector.broadcast %45 : vector<8x4x1xf32> to vector<8x4x4xf32>
    %47 = arith.subf %43, %46 : vector<8x4x4xf32>
    %48 = math.exp %47 : vector<8x4x4xf32>
    %cst_40 = arith.constant dense<0.000000e+00> : vector<8x4xf32>
    %49 = vector.multi_reduction <add>, %48, %cst_40 [2] : vector<8x4x4xf32> to vector<8x4xf32>
    %50 = vector.shape_cast %49 : vector<8x4xf32> to vector<8x4x1xf32>
    %51 = tpu.reciprocal %50 {approx = true} : vector<8x4x1xf32> -> vector<8x4x1xf32>
    %52 = vector.broadcast %51 : vector<8x4x1xf32> to vector<8x4x4xf32>
    %53 = arith.mulf %48, %52 : vector<8x4x4xf32>
    %54 = arith.truncf %53 : vector<8x4x4xf32> to vector<8x4x4xbf16>
    %55 = vector.extract_strided_slice %40 {offsets = [0, 0, 0], sizes = [8, 4, 8], strides = [1, 1, 1]} : vector<8x4x32xbf16> to vector<8x4x8xbf16>
    "tpu.trace_start"() <{level = 10 : i32, message = "bnm,bmd->bnd"}> : () -> ()
    %cst_41 = arith.constant dense<0.000000e+00> : vector<8x4x8xf32>
    %56 = tpu.matmul %54, %55, %cst_41 {dimension_numbers = #tpu.dot_dimension_numbers<[2], [1], [1], [2], [0, 0, 0, 1, 1, 2], [0], [0]>} : vector<8x4x4xbf16>, vector<8x4x8xbf16>, vector<8x4x8xf32> -> vector<8x4x8xf32>
    "tpu.trace_stop"() : () -> ()
    %57 = vector.extract_strided_slice %34 {offsets = [0, 0, 8], sizes = [8, 4, 8], strides = [1, 1, 1]} : vector<8x4x32xbf16> to vector<8x4x8xbf16>
    %58 = vector.extract_strided_slice %37 {offsets = [0, 0, 8], sizes = [8, 4, 8], strides = [1, 1, 1]} : vector<8x4x32xbf16> to vector<8x4x8xbf16>
    "tpu.trace_start"() <{level = 10 : i32, message = "bnd,bmd->bnm"}> : () -> ()
    %cst_42 = arith.constant dense<0.000000e+00> : vector<8x4x4xf32>
    %59 = tpu.matmul %57, %58, %cst_42 {dimension_numbers = #tpu.dot_dimension_numbers<[2], [2], [1], [1], [0, 0, 0, 1, 1, 1], [0], [0]>} : vector<8x4x8xbf16>, vector<8x4x8xbf16>, vector<8x4x4xf32> -> vector<8x4x4xf32>
    "tpu.trace_stop"() : () -> ()
    %cst_43 = arith.constant dense<0xFF800000> : vector<8x4xf32>
    %60 = vector.multi_reduction <maximumf>, %59, %cst_43 [2] : vector<8x4x4xf32> to vector<8x4xf32>
    %61 = vector.shape_cast %60 : vector<8x4xf32> to vector<8x4x1xf32>
    %62 = vector.broadcast %61 : vector<8x4x1xf32> to vector<8x4x4xf32>
    %63 = arith.subf %59, %62 : vector<8x4x4xf32>
    %64 = math.exp %63 : vector<8x4x4xf32>
    %cst_44 = arith.constant dense<0.000000e+00> : vector<8x4xf32>
    %65 = vector.multi_reduction <add>, %64, %cst_44 [2] : vector<8x4x4xf32> to vector<8x4xf32>
    %66 = vector.shape_cast %65 : vector<8x4xf32> to vector<8x4x1xf32>
    %67 = tpu.reciprocal %66 {approx = true} : vector<8x4x1xf32> -> vector<8x4x1xf32>
    %68 = vector.broadcast %67 : vector<8x4x1xf32> to vector<8x4x4xf32>
    %69 = arith.mulf %64, %68 : vector<8x4x4xf32>
    %70 = arith.truncf %69 : vector<8x4x4xf32> to vector<8x4x4xbf16>
    %71 = vector.extract_strided_slice %40 {offsets = [0, 0, 8], sizes = [8, 4, 8], strides = [1, 1, 1]} : vector<8x4x32xbf16> to vector<8x4x8xbf16>
    "tpu.trace_start"() <{level = 10 : i32, message = "bnm,bmd->bnd"}> : () -> ()
    %cst_45 = arith.constant dense<0.000000e+00> : vector<8x4x8xf32>
    %72 = tpu.matmul %70, %71, %cst_45 {dimension_numbers = #tpu.dot_dimension_numbers<[2], [1], [1], [2], [0, 0, 0, 1, 1, 2], [0], [0]>} : vector<8x4x4xbf16>, vector<8x4x8xbf16>, vector<8x4x8xf32> -> vector<8x4x8xf32>
    "tpu.trace_stop"() : () -> ()
    %73 = vector.extract_strided_slice %34 {offsets = [0, 0, 16], sizes = [8, 4, 8], strides = [1, 1, 1]} : vector<8x4x32xbf16> to vector<8x4x8xbf16>
    %74 = vector.extract_strided_slice %37 {offsets = [0, 0, 16], sizes = [8, 4, 8], strides = [1, 1, 1]} : vector<8x4x32xbf16> to vector<8x4x8xbf16>
    "tpu.trace_start"() <{level = 10 : i32, message = "bnd,bmd->bnm"}> : () -> ()
    %cst_46 = arith.constant dense<0.000000e+00> : vector<8x4x4xf32>
    %75 = tpu.matmul %73, %74, %cst_46 {dimension_numbers = #tpu.dot_dimension_numbers<[2], [2], [1], [1], [0, 0, 0, 1, 1, 1], [0], [0]>} : vector<8x4x8xbf16>, vector<8x4x8xbf16>, vector<8x4x4xf32> -> vector<8x4x4xf32>
    "tpu.trace_stop"() : () -> ()
    %cst_47 = arith.constant dense<0xFF800000> : vector<8x4xf32>
    %76 = vector.multi_reduction <maximumf>, %75, %cst_47 [2] : vector<8x4x4xf32> to vector<8x4xf32>
    %77 = vector.shape_cast %76 : vector<8x4xf32> to vector<8x4x1xf32>
    %78 = vector.broadcast %77 : vector<8x4x1xf32> to vector<8x4x4xf32>
    %79 = arith.subf %75, %78 : vector<8x4x4xf32>
    %80 = math.exp %79 : vector<8x4x4xf32>
    %cst_48 = arith.constant dense<0.000000e+00> : vector<8x4xf32>
    %81 = vector.multi_reduction <add>, %80, %cst_48 [2] : vector<8x4x4xf32> to vector<8x4xf32>
    %82 = vector.shape_cast %81 : vector<8x4xf32> to vector<8x4x1xf32>
    %83 = tpu.reciprocal %82 {approx = true} : vector<8x4x1xf32> -> vector<8x4x1xf32>
    %84 = vector.broadcast %83 : vector<8x4x1xf32> to vector<8x4x4xf32>
    %85 = arith.mulf %80, %84 : vector<8x4x4xf32>
    %86 = arith.truncf %85 : vector<8x4x4xf32> to vector<8x4x4xbf16>
    %87 = vector.extract_strided_slice %40 {offsets = [0, 0, 16], sizes = [8, 4, 8], strides = [1, 1, 1]} : vector<8x4x32xbf16> to vector<8x4x8xbf16>
    "tpu.trace_start"() <{level = 10 : i32, message = "bnm,bmd->bnd"}> : () -> ()
    %cst_49 = arith.constant dense<0.000000e+00> : vector<8x4x8xf32>
    %88 = tpu.matmul %86, %87, %cst_49 {dimension_numbers = #tpu.dot_dimension_numbers<[2], [1], [1], [2], [0, 0, 0, 1, 1, 2], [0], [0]>} : vector<8x4x4xbf16>, vector<8x4x8xbf16>, vector<8x4x8xf32> -> vector<8x4x8xf32>
    "tpu.trace_stop"() : () -> ()
    %89 = vector.extract_strided_slice %34 {offsets = [0, 0, 24], sizes = [8, 4, 8], strides = [1, 1, 1]} : vector<8x4x32xbf16> to vector<8x4x8xbf16>
    %90 = vector.extract_strided_slice %37 {offsets = [0, 0, 24], sizes = [8, 4, 8], strides = [1, 1, 1]} : vector<8x4x32xbf16> to vector<8x4x8xbf16>
    "tpu.trace_start"() <{level = 10 : i32, message = "bnd,bmd->bnm"}> : () -> ()
    %cst_50 = arith.constant dense<0.000000e+00> : vector<8x4x4xf32>
    %91 = tpu.matmul %89, %90, %cst_50 {dimension_numbers = #tpu.dot_dimension_numbers<[2], [2], [1], [1], [0, 0, 0, 1, 1, 1], [0], [0]>} : vector<8x4x8xbf16>, vector<8x4x8xbf16>, vector<8x4x4xf32> -> vector<8x4x4xf32>
    "tpu.trace_stop"() : () -> ()
    %cst_51 = arith.constant dense<0xFF800000> : vector<8x4xf32>
    %92 = vector.multi_reduction <maximumf>, %91, %cst_51 [2] : vector<8x4x4xf32> to vector<8x4xf32>
    %93 = vector.shape_cast %92 : vector<8x4xf32> to vector<8x4x1xf32>
    %94 = vector.broadcast %93 : vector<8x4x1xf32> to vector<8x4x4xf32>
    %95 = arith.subf %91, %94 : vector<8x4x4xf32>
    %96 = math.exp %95 : vector<8x4x4xf32>
    %cst_52 = arith.constant dense<0.000000e+00> : vector<8x4xf32>
    %97 = vector.multi_reduction <add>, %96, %cst_52 [2] : vector<8x4x4xf32> to vector<8x4xf32>
    %98 = vector.shape_cast %97 : vector<8x4xf32> to vector<8x4x1xf32>
    %99 = tpu.reciprocal %98 {approx = true} : vector<8x4x1xf32> -> vector<8x4x1xf32>
    %100 = vector.broadcast %99 : vector<8x4x1xf32> to vector<8x4x4xf32>
    %101 = arith.mulf %96, %100 : vector<8x4x4xf32>
    %102 = arith.truncf %101 : vector<8x4x4xf32> to vector<8x4x4xbf16>
    %103 = vector.extract_strided_slice %40 {offsets = [0, 0, 24], sizes = [8, 4, 8], strides = [1, 1, 1]} : vector<8x4x32xbf16> to vector<8x4x8xbf16>
    "tpu.trace_start"() <{level = 10 : i32, message = "bnm,bmd->bnd"}> : () -> ()
    %cst_53 = arith.constant dense<0.000000e+00> : vector<8x4x8xf32>
    %104 = tpu.matmul %102, %103, %cst_53 {dimension_numbers = #tpu.dot_dimension_numbers<[2], [1], [1], [2], [0, 0, 0, 1, 1, 2], [0], [0]>} : vector<8x4x4xbf16>, vector<8x4x8xbf16>, vector<8x4x8xf32> -> vector<8x4x8xf32>
    "tpu.trace_stop"() : () -> ()
    %105 = tpu.concatenate %56, %72, %88, %104 in 2 : vector<8x4x8xf32>, vector<8x4x8xf32>, vector<8x4x8xf32>, vector<8x4x8xf32> -> vector<8x4x32xf32>
    %106 = vector.shape_cast %105 : vector<8x4x32xf32> to vector<32x32xf32>
    %107 = arith.truncf %106 : vector<32x32xf32> to vector<32x32xbf16>
    %cst_54 = arith.constant dense<0.000000e+00> : vector<32x32xf32>
    %108 = tpu.matmul %107, %9, %cst_54 {dimension_numbers = #tpu.dot_dimension_numbers<[1], [0], [0], [1], [0, 0, 1, 1], [], []>} : vector<32x32xbf16>, vector<32x32xbf16>, vector<32x32xf32> -> vector<32x32xf32>
    %109 = vector.broadcast %11 : vector<1x32xf32> to vector<32x32xf32>
    %110 = arith.addf %108, %109 : vector<32x32xf32>
    %111 = arith.addf %3, %110 : vector<32x32xf32>
    %cst_55 = arith.constant dense<0.000000e+00> : vector<32xf32>
    %112 = vector.multi_reduction <add>, %111, %cst_55 [1] : vector<32x32xf32> to vector<32xf32>
    %113 = vector.shape_cast %112 : vector<32xf32> to vector<32x1xf32>
    %cst_56 = arith.constant 3.200000e+01 : f32
    %114 = vector.broadcast %cst_56 : f32 to vector<32x1xf32>
    %115 = arith.divf %113, %114 : vector<32x1xf32>
    %116 = vector.broadcast %115 : vector<32x1xf32> to vector<32x32xf32>
    %117 = arith.subf %111, %116 : vector<32x32xf32>
    %118 = arith.mulf %117, %117 : vector<32x32xf32>
    %cst_57 = arith.constant dense<0.000000e+00> : vector<32xf32>
    %119 = vector.multi_reduction <add>, %118, %cst_57 [1] : vector<32x32xf32> to vector<32xf32>
    %120 = vector.shape_cast %119 : vector<32xf32> to vector<32x1xf32>
    %cst_58 = arith.constant 3.200000e+01 : f32
    %121 = vector.broadcast %cst_58 : f32 to vector<32x1xf32>
    %122 = arith.divf %120, %121 : vector<32x1xf32>
    %123 = vector.broadcast %115 : vector<32x1xf32> to vector<32x32xf32>
    %124 = arith.subf %111, %123 : vector<32x32xf32>
    %cst_59 = arith.constant 9.99999974E-6 : f32
    %125 = vector.broadcast %cst_59 : f32 to vector<32x1xf32>
    %126 = arith.addf %122, %125 : vector<32x1xf32>
    %127 = math.rsqrt %126 : vector<32x1xf32>
    %128 = vector.broadcast %127 : vector<32x1xf32> to vector<32x32xf32>
    %129 = arith.mulf %124, %128 : vector<32x32xf32>
    %130 = vector.broadcast %13 : vector<1x32xf32> to vector<32x32xf32>
    %131 = arith.mulf %129, %130 : vector<32x32xf32>
    %132 = vector.broadcast %15 : vector<1x32xf32> to vector<32x32xf32>
    %133 = arith.addf %131, %132 : vector<32x32xf32>
    %134 = arith.truncf %133 : vector<32x32xf32> to vector<32x32xbf16>
    %cst_60 = arith.constant dense<0.000000e+00> : vector<32x64xf32>
    %135 = tpu.matmul %134, %17, %cst_60 {dimension_numbers = #tpu.dot_dimension_numbers<[1], [0], [0], [1], [0, 0, 1, 1], [], []>} : vector<32x32xbf16>, vector<32x64xbf16>, vector<32x64xf32> -> vector<32x64xf32>
    %136 = vector.broadcast %19 : vector<1x64xf32> to vector<32x64xf32>
    %137 = arith.addf %135, %136 : vector<32x64xf32>
    %138 = arith.mulf %137, %137 : vector<32x64xf32>
    %139 = arith.mulf %137, %138 : vector<32x64xf32>
    %cst_61 = arith.constant 4.471500e-02 : f32
    %140 = vector.broadcast %cst_61 : f32 to vector<32x64xf32>
    %141 = arith.mulf %140, %139 : vector<32x64xf32>
    %142 = arith.addf %137, %141 : vector<32x64xf32>
    %cst_62 = arith.constant 0.797884583 : f32
    %143 = vector.broadcast %cst_62 : f32 to vector<32x64xf32>
    %144 = arith.mulf %143, %142 : vector<32x64xf32>
    %145 = math.tanh %144 : vector<32x64xf32>
    %cst_63 = arith.constant 1.000000e+00 : f32
    %146 = vector.broadcast %cst_63 : f32 to vector<32x64xf32>
    %147 = arith.addf %146, %145 : vector<32x64xf32>
    %cst_64 = arith.constant 5.000000e-01 : f32
    %148 = vector.broadcast %cst_64 : f32 to vector<32x64xf32>
    %149 = arith.mulf %148, %147 : vector<32x64xf32>
    %150 = arith.mulf %137, %149 : vector<32x64xf32>
    %151 = arith.truncf %150 : vector<32x64xf32> to vector<32x64xbf16>
    %cst_65 = arith.constant dense<0.000000e+00> : vector<32x32xf32>
    %152 = tpu.matmul %151, %21, %cst_65 {dimension_numbers = #tpu.dot_dimension_numbers<[1], [0], [0], [1], [0, 0, 1, 1], [], []>} : vector<32x64xbf16>, vector<64x32xbf16>, vector<32x32xf32> -> vector<32x32xf32>
    %153 = vector.broadcast %23 : vector<1x32xf32> to vector<32x32xf32>
    %154 = arith.addf %152, %153 : vector<32x32xf32>
    %155 = arith.addf %133, %154 : vector<32x32xf32>
    %cst_66 = arith.constant dense<0.000000e+00> : vector<32xf32>
    %156 = vector.multi_reduction <add>, %155, %cst_66 [1] : vector<32x32xf32> to vector<32xf32>
    %157 = vector.shape_cast %156 : vector<32xf32> to vector<32x1xf32>
    %cst_67 = arith.constant 3.200000e+01 : f32
    %158 = vector.broadcast %cst_67 : f32 to vector<32x1xf32>
    %159 = arith.divf %157, %158 : vector<32x1xf32>
    %160 = vector.broadcast %159 : vector<32x1xf32> to vector<32x32xf32>
    %161 = arith.subf %155, %160 : vector<32x32xf32>
    %162 = arith.mulf %161, %161 : vector<32x32xf32>
    %cst_68 = arith.constant dense<0.000000e+00> : vector<32xf32>
    %163 = vector.multi_reduction <add>, %162, %cst_68 [1] : vector<32x32xf32> to vector<32xf32>
    %164 = vector.shape_cast %163 : vector<32xf32> to vector<32x1xf32>
    %cst_69 = arith.constant 3.200000e+01 : f32
    %165 = vector.broadcast %cst_69 : f32 to vector<32x1xf32>
    %166 = arith.divf %164, %165 : vector<32x1xf32>
    %167 = vector.broadcast %159 : vector<32x1xf32> to vector<32x32xf32>
    %168 = arith.subf %155, %167 : vector<32x32xf32>
    %cst_70 = arith.constant 9.99999974E-6 : f32
    %169 = vector.broadcast %cst_70 : f32 to vector<32x1xf32>
    %170 = arith.addf %166, %169 : vector<32x1xf32>
    %171 = math.rsqrt %170 : vector<32x1xf32>
    %172 = vector.broadcast %171 : vector<32x1xf32> to vector<32x32xf32>
    %173 = arith.mulf %168, %172 : vector<32x32xf32>
    %174 = vector.broadcast %25 : vector<1x32xf32> to vector<32x32xf32>
    %175 = arith.mulf %173, %174 : vector<32x32xf32>
    %176 = vector.broadcast %27 : vector<1x32xf32> to vector<32x32xf32>
    %177 = arith.addf %175, %176 : vector<32x32xf32>
    %c0_71 = arith.constant 0 : index
    %c0_72 = arith.constant 0 : index
    %178 = vector.load %arg22[%c0_71, %c0_72] : memref<32x32xf32, #tpu.memory_space<vmem>>, vector<32x32xf32>
    tpu.vector_store %arg22[%c0_71, %c0_72], %177 {strides = array<i32>} : memref<32x32xf32, #tpu.memory_space<vmem>>, vector<32x32xf32>,
    %c1_i32 = arith.constant 1 : i32
    %179 = arith.cmpi eq, %arg1, %c1_i32 : i32
    %180 = arith.extui %179 : i1 to i32
    %c0_i32_73 = arith.constant 0 : i32
    %181 = arith.cmpi ne, %180, %c0_i32_73 : i32
    scf.if %181 {
      %c0_74 = arith.constant 0 : index
      %c0_75 = arith.constant 0 : index
      %182 = vector.load %arg17[%c0_74, %c0_75] : memref<1x32xf32, #tpu.memory_space<vmem>>, vector<1x32xf32>
      %c0_76 = arith.constant 0 : index
      %c0_77 = arith.constant 0 : index
      %183 = vector.load %arg18[%c0_76, %c0_77] : memref<1x32xf32, #tpu.memory_space<vmem>>, vector<1x32xf32>
      %cst_78 = arith.constant dense<0.000000e+00> : vector<32xf32>
      %184 = vector.multi_reduction <add>, %177, %cst_78 [1] : vector<32x32xf32> to vector<32xf32>
      %185 = vector.shape_cast %184 : vector<32xf32> to vector<32x1xf32>
      %cst_79 = arith.constant 3.200000e+01 : f32
      %186 = vector.broadcast %cst_79 : f32 to vector<32x1xf32>
      %187 = arith.divf %185, %186 : vector<32x1xf32>
      %188 = vector.broadcast %187 : vector<32x1xf32> to vector<32x32xf32>
      %189 = arith.subf %177, %188 : vector<32x32xf32>
      %190 = arith.mulf %189, %189 : vector<32x32xf32>
      %cst_80 = arith.constant dense<0.000000e+00> : vector<32xf32>
      %191 = vector.multi_reduction <add>, %190, %cst_80 [1] : vector<32x32xf32> to vector<32xf32>
      %192 = vector.shape_cast %191 : vector<32xf32> to vector<32x1xf32>
      %cst_81 = arith.constant 3.200000e+01 : f32
      %193 = vector.broadcast %cst_81 : f32 to vector<32x1xf32>
      %194 = arith.divf %192, %193 : vector<32x1xf32>
      %195 = vector.broadcast %187 : vector<32x1xf32> to vector<32x32xf32>
      %196 = arith.subf %177, %195 : vector<32x32xf32>
      %cst_82 = arith.constant 9.99999974E-6 : f32
      %197 = vector.broadcast %cst_82 : f32 to vector<32x1xf32>
      %198 = arith.addf %194, %197 : vector<32x1xf32>
      %199 = math.rsqrt %198 : vector<32x1xf32>
      %200 = vector.broadcast %199 : vector<32x1xf32> to vector<32x32xf32>
      %201 = arith.mulf %196, %200 : vector<32x32xf32>
      %202 = vector.broadcast %182 : vector<1x32xf32> to vector<32x32xf32>
      %203 = arith.mulf %201, %202 : vector<32x32xf32>
      %204 = vector.broadcast %183 : vector<1x32xf32> to vector<32x32xf32>
      %205 = arith.addf %203, %204 : vector<32x32xf32>
      %206 = arith.truncf %205 : vector<32x32xf32> to vector<32x32xbf16>
      %c0_83 = arith.constant 0 : index
      %c0_84 = arith.constant 0 : index
      %207 = vector.load %arg19[%c0_83, %c0_84] : memref<32x4xbf16, #tpu.memory_space<vmem>>, vector<32x4xbf16>
      %cst_85 = arith.constant dense<0.000000e+00> : vector<32x4xf32>
      %208 = tpu.matmul %206, %207, %cst_85 {dimension_numbers = #tpu.dot_dimension_numbers<[1], [0], [0], [1], [0, 0, 1, 1], [], []>} : vector<32x32xbf16>, vector<32x4xbf16>, vector<32x4xf32> -> vector<32x4xf32>
      %c0_86 = arith.constant 0 : index
      %c0_87 = arith.constant 0 : index
      %209 = vector.load %arg20[%c0_86, %c0_87] : memref<1x4xf32, #tpu.memory_space<vmem>>, vector<1x4xf32>
      %210 = vector.broadcast %209 : vector<1x4xf32> to vector<32x4xf32>
      %211 = arith.addf %208, %210 : vector<32x4xf32>
      %c0_88 = arith.constant 0 : index
      %c0_89 = arith.constant 0 : index
      %212 = vector.load %arg21[%c0_88, %c0_89] : memref<32x4xf32, #tpu.memory_space<vmem>>, vector<32x4xf32>
      tpu.vector_store %arg21[%c0_88, %c0_89], %211 {strides = array<i32>} : memref<32x4xf32, #tpu.memory_space<vmem>>, vector<32x4xf32>,
    } else {
    }
    return
  }
  func.func @transform_0(%arg0: i32, %arg1: i32) -> (i32, i32) {
    %c0_i32 = arith.constant 0 : i32
    %c0_i32_0 = arith.constant 0 : i32
    return %arg0, %c0_i32 : i32, i32
  }
  func.func @transform_1(%arg0: i32, %arg1: i32) -> (i32, i32) {
    %c0_i32 = arith.constant 0 : i32
    %c0_i32_0 = arith.constant 0 : i32
    %c0_i32_1 = arith.constant 0 : i32
    return %c0_i32, %c0_i32_0 : i32, i32
  }
  func.func @transform_2(%arg0: i32, %arg1: i32) -> (i32, i32) {
    %c0_i32 = arith.constant 0 : i32
    %c0_i32_0 = arith.constant 0 : i32
    %c0_i32_1 = arith.constant 0 : i32
    return %c0_i32, %c0_i32_0 : i32, i32
  }
  func.func @transform_3(%arg0: i32, %arg1: i32) -> (i32, i32, i32) {
    %c0_i32 = arith.constant 0 : i32
    %c0_i32_0 = arith.constant 0 : i32
    %c0_i32_1 = arith.constant 0 : i32
    return %arg1, %c0_i32, %c0_i32_0 : i32, i32, i32
  }
  func.func @transform_4(%arg0: i32, %arg1: i32) -> (i32, i32, i32) {
    %c0_i32 = arith.constant 0 : i32
    %c0_i32_0 = arith.constant 0 : i32
    %c0_i32_1 = arith.constant 0 : i32
    return %arg1, %c0_i32, %c0_i32_0 : i32, i32, i32
  }
  func.func @transform_5(%arg0: i32, %arg1: i32) -> (i32, i32, i32) {
    %c0_i32 = arith.constant 0 : i32
    %c0_i32_0 = arith.constant 0 : i32
    %c0_i32_1 = arith.constant 0 : i32
    return %arg1, %c0_i32, %c0_i32_0 : i32, i32, i32
  }
  func.func @transform_6(%arg0: i32, %arg1: i32) -> (i32, i32, i32) {
    %c0_i32 = arith.constant 0 : i32
    %c0_i32_0 = arith.constant 0 : i32
    %c0_i32_1 = arith.constant 0 : i32
    return %arg1, %c0_i32, %c0_i32_0 : i32, i32, i32
  }
  func.func @transform_7(%arg0: i32, %arg1: i32) -> (i32, i32, i32) {
    %c0_i32 = arith.constant 0 : i32
    %c0_i32_0 = arith.constant 0 : i32
    %c0_i32_1 = arith.constant 0 : i32
    return %arg1, %c0_i32, %c0_i32_0 : i32, i32, i32
  }
  func.func @transform_8(%arg0: i32, %arg1: i32) -> (i32, i32, i32) {
    %c0_i32 = arith.constant 0 : i32
    %c0_i32_0 = arith.constant 0 : i32
    %c0_i32_1 = arith.constant 0 : i32
    return %arg1, %c0_i32, %c0_i32_0 : i32, i32, i32
  }
  func.func @transform_9(%arg0: i32, %arg1: i32) -> (i32, i32, i32) {
    %c0_i32 = arith.constant 0 : i32
    %c0_i32_0 = arith.constant 0 : i32
    %c0_i32_1 = arith.constant 0 : i32
    return %arg1, %c0_i32, %c0_i32_0 : i32, i32, i32
  }
  func.func @transform_10(%arg0: i32, %arg1: i32) -> (i32, i32, i32) {
    %c0_i32 = arith.constant 0 : i32
    %c0_i32_0 = arith.constant 0 : i32
    %c0_i32_1 = arith.constant 0 : i32
    return %arg1, %c0_i32, %c0_i32_0 : i32, i32, i32
  }
  func.func @transform_11(%arg0: i32, %arg1: i32) -> (i32, i32, i32) {
    %c0_i32 = arith.constant 0 : i32
    %c0_i32_0 = arith.constant 0 : i32
    %c0_i32_1 = arith.constant 0 : i32
    return %arg1, %c0_i32, %c0_i32_0 : i32, i32, i32
  }
  func.func @transform_12(%arg0: i32, %arg1: i32) -> (i32, i32, i32) {
    %c0_i32 = arith.constant 0 : i32
    %c0_i32_0 = arith.constant 0 : i32
    %c0_i32_1 = arith.constant 0 : i32
    return %arg1, %c0_i32, %c0_i32_0 : i32, i32, i32
  }
  func.func @transform_13(%arg0: i32, %arg1: i32) -> (i32, i32, i32) {
    %c0_i32 = arith.constant 0 : i32
    %c0_i32_0 = arith.constant 0 : i32
    %c0_i32_1 = arith.constant 0 : i32
    return %arg1, %c0_i32, %c0_i32_0 : i32, i32, i32
  }
  func.func @transform_14(%arg0: i32, %arg1: i32) -> (i32, i32, i32) {
    %c0_i32 = arith.constant 0 : i32
    %c0_i32_0 = arith.constant 0 : i32
    %c0_i32_1 = arith.constant 0 : i32
    return %arg1, %c0_i32, %c0_i32_0 : i32, i32, i32
  }
  func.func @transform_15(%arg0: i32, %arg1: i32) -> (i32, i32) {
    %c0_i32 = arith.constant 0 : i32
    %c0_i32_0 = arith.constant 0 : i32
    %c0_i32_1 = arith.constant 0 : i32
    return %c0_i32, %c0_i32_0 : i32, i32
  }
  func.func @transform_16(%arg0: i32, %arg1: i32) -> (i32, i32) {
    %c0_i32 = arith.constant 0 : i32
    %c0_i32_0 = arith.constant 0 : i32
    %c0_i32_1 = arith.constant 0 : i32
    return %c0_i32, %c0_i32_0 : i32, i32
  }
  func.func @transform_17(%arg0: i32, %arg1: i32) -> (i32, i32) {
    %c0_i32 = arith.constant 0 : i32
    %c0_i32_0 = arith.constant 0 : i32
    %c0_i32_1 = arith.constant 0 : i32
    return %c0_i32, %c0_i32_0 : i32, i32
  }
  func.func @transform_18(%arg0: i32, %arg1: i32) -> (i32, i32) {
    %c0_i32 = arith.constant 0 : i32
    %c0_i32_0 = arith.constant 0 : i32
    %c0_i32_1 = arith.constant 0 : i32
    return %c0_i32, %c0_i32_0 : i32, i32
  }
  func.func @transform_19(%arg0: i32, %arg1: i32) -> (i32, i32) {
    %c0_i32 = arith.constant 0 : i32
    %c0_i32_0 = arith.constant 0 : i32
    return %arg0, %c0_i32 : i32, i32
  }
}

</mosaic_0001>

<llo_original>
// kernel: tpu_custom_call.1
$region0: #{tpu_custom_call.1}
  #allocation0 [shape = 'u32[]', space=smem, size = 0x4, offset = 0x4, fixed_abs, tag = 'smem constant byte address 0x4 - core index']
  #allocation1 [shape = 'u32[72,128]{1,0:T(1,128)}', space=vmem, size = 0x9000, scoped, tag = 'internal scratch']
  #allocation2 [shape = 'f32[32,32]{1,0:T(8,128)}', space=vmem, size = 0x4000, scoped, tag = 'scratch operand']
  %s0 = inlined_call_operand.vmem [shape: f32[32,4], index: 0, kind: input, shape index: {}]
  %s1 = inlined_call_operand.vmem [shape: bf16[4,32], index: 1, kind: input, shape index: {}]
  %s2 = inlined_call_operand.vmem [shape: f32[32,32], index: 2, kind: input, shape index: {}]
  %s3 = inlined_call_operand.vmem [shape: bf16[2,32,96], index: 3, kind: input, shape index: {}]
  %s4 = inlined_call_operand.vmem [shape: f32[2,1,96], index: 4, kind: input, shape index: {}]
  %s5 = inlined_call_operand.vmem [shape: bf16[2,32,32], index: 5, kind: input, shape index: {}]
  %s6 = inlined_call_operand.vmem [shape: f32[2,1,32], index: 6, kind: input, shape index: {}]
  %s7 = inlined_call_operand.vmem [shape: f32[2,1,32], index: 7, kind: input, shape index: {}]
  %s8 = inlined_call_operand.vmem [shape: f32[2,1,32], index: 8, kind: input, shape index: {}]
  %s9 = inlined_call_operand.hbm [shape: bf16[2,32,64], index: 9, kind: input, shape index: {}]
  %s10 = inlined_call_operand.vmem [shape: f32[2,1,64], index: 10, kind: input, shape index: {}]
  %s11 = inlined_call_operand.vmem [shape: bf16[2,64,32], index: 11, kind: input, shape index: {}]
  %s12 = inlined_call_operand.vmem [shape: f32[2,1,32], index: 12, kind: input, shape index: {}]
  %s13 = inlined_call_operand.vmem [shape: f32[2,1,32], index: 13, kind: input, shape index: {}]
  %s14 = inlined_call_operand.vmem [shape: f32[2,1,32], index: 14, kind: input, shape index: {}]
  %s15 = inlined_call_operand.vmem [shape: f32[1,32], index: 15, kind: input, shape index: {}]
  %s16 = inlined_call_operand.vmem [shape: f32[1,32], index: 16, kind: input, shape index: {}]
  %s17 = inlined_call_operand.vmem [shape: bf16[32,4], index: 17, kind: input, shape index: {}]
  %s18 = inlined_call_operand.vmem [shape: f32[1,4], index: 18, kind: input, shape index: {}]
  %s19 = inlined_call_operand.vmem [shape: f32[32,4], index: 19, kind: output, shape index: {}]
  %s20 = sld [smem:[#allocation0]]
  $region121: #{tpu_custom_call.1} parent=0
    _
  %s22 = ssub.s32 1, %s20
  %s23 = scalar_select 0, %s22, %s20
  $region1: #{tpu_custom_call.1} parent=0
    #allocation3 [shape = 'u8[16384]{0}', space=vmem, size = 0x4000, scoped, tag = 'input window, operand 9']
    #allocation4 [shape = 's32[2]{0}', space=sflag, size = 0x8, scoped, tag = 'scoped memory for tpu_custom_call.1']
    %24 = vsyncpa [#allocation4], 0
    %s25 = scalar_lea.sflag [#allocation4], 1
    %26 = vsyncpa %s25, 0
    loop: start=0, step=1, limit=4
    $region2: #{tpu_custom_call.1} parent=1 // loop_pre_header
      _
    $region3: #{tpu_custom_call.1} parent=1 // loop_header
      %s28 = sphi 0, %s32
      %p29 = scmp.ge.s32.totalorder %s28, 4
      %s35 = sphi 0, %s47
      %s36 = sphi 0, %s43
      %s37 = sphi 0, %s35
      %s38 = sphi 0, %s36
      %s39 = sphi 0, %s37
      %s40 = sphi 0, %s38
      %s50 = sphi 0, %s52
      %s53 = sphi 0, %s50
      %s54 = sphi 0, %s53
      %s70 = sphi 0, %s54
      %s74 = sphi 0, %s74
      %s76 = sphi 0, %s74
      %s77 = sphi 0, %s76
      %s91 = sphi 0, %s77
      %s95 = sphi 0, %s95
      %s97 = sphi 0, %s95
      %s98 = sphi 0, %s97
      %s112 = sphi 0, %s98
      %s118 = sphi 0, %s120
      %s121 = sphi 0, %s118
      %s122 = sphi 0, %s121
      %s138 = sphi 0, %s122
      %s144 = sphi 0, %s146
      %s147 = sphi 0, %s144
      %s148 = sphi 0, %s147
      %s164 = sphi 0, %s148
      %s170 = sphi 0, %s172
      %s173 = sphi 0, %s170
      %s174 = sphi 0, %s173
      %s190 = sphi 0, %s174
      %s196 = sphi 0, %s198
      %s199 = sphi 0, %s196
      %s200 = sphi 0, %s199
      %s216 = sphi 0, %s200
      %s222 = sphi 0, %s224
      %s225 = sphi 0, %s222
      %s226 = sphi 0, %s225
      %s242 = sphi 0, %s226
      %s248 = sphi 0, %s250
      %s251 = sphi 0, %s248
      %s252 = sphi 0, %s251
      %s268 = sphi 0, %s252
      %s274 = sphi 0, %s276
      %s277 = sphi 0, %s274
      %s278 = sphi 0, %s277
      %s294 = sphi 0, %s278
      %s300 = sphi 0, %s302
      %s303 = sphi 0, %s300
      %s304 = sphi 0, %s303
      %s320 = sphi 0, %s304
      %s326 = sphi 0, %s328
      %s329 = sphi 0, %s326
      %s330 = sphi 0, %s329
      %s346 = sphi 0, %s330
      %s352 = sphi 0, %s354
      %s355 = sphi 0, %s352
      %s356 = sphi 0, %s355
      %s372 = sphi 0, %s356
      %s378 = sphi 0, %s380
      %s381 = sphi 0, %s378
      %s382 = sphi 0, %s381
      %s398 = sphi 0, %s382
      %s404 = sphi 0, %s406
      %s407 = sphi 0, %s404
      %s408 = sphi 0, %s407
      %s424 = sphi 0, %s408
      %s428 = sphi 0, %s428
      %s430 = sphi 0, %s428
      %s431 = sphi 0, %s430
      %s445 = sphi 0, %s431
      %s449 = sphi 0, %s449
      %s451 = sphi 0, %s449
      %s452 = sphi 0, %s451
      %s466 = sphi 0, %s452
      %s470 = sphi 0, %s470
      %s472 = sphi 0, %s470
      %s473 = sphi 0, %s472
      %s487 = sphi 0, %s473
      %s491 = sphi 0, %s491
      %s493 = sphi 0, %s491
      %s494 = sphi 0, %s493
      %s508 = sphi 0, %s494
      %s514 = sphi 0, %s516
      %s517 = sphi 0, %s514
      %s518 = sphi 0, %s517
      %s534 = sphi 0, %s518
    $region4: #{tpu_custom_call.1} parent=1 // loop_header_branch
      %31 = sbr.rel (%p29) target = $region8
    $region5: #{tpu_custom_call.1} parent=1 // loop_body
      %s33 = ssub.s32 %s28, 1
      %s34 = ssub.s32 %s28, 2
      %s41 = sadd.s32 1, %s36
      %p42 = scmp.ge.s32.totalorder %s41, 2
      %s43 = scalar_select %p42, 0, %s41
      %s44 = sadd.s32 1, %s35
      %s45 = scalar_select %p42, %s44, %s35
      %p46 = scmp.ge.s32.totalorder %s45, 1
      %s47 = scalar_select %p46, 0, %s45
      %s48 = ssub.s32 %s35, %s47
      %p49 = scmp.eq.s32.totalorder %s48, 0
      %s51 = sadd.s32 %s50, 1
      %s52 = scalar_select %p49, %s50, %s51
      %p55 = pneg %p49
      %p56 = scmp.eq.s32.totalorder %s28, 1
      %p57 = por %p55, %p56
      %p58 = scmp.ne.s32.totalorder %s50, %s53
      %p59 = scmp.eq.s32.totalorder %s28, 0
      %p60 = por %p58, %p59
      %p61 = scmp.ne.s32.totalorder %s50, %s53
      %p62 = scmp.eq.s32.totalorder %s33, 1
      %p63 = por %p61, %p62
      %p64 = scmp.ne.s32.totalorder %s53, %s54
      %p65 = scmp.eq.s32.totalorder %s33, 0
      %p66 = por %p64, %p65
      %p67 = scmp.ne.s32.totalorder %s53, %s54
      %p68 = scmp.eq.s32.totalorder %s34, 1
      %p69 = por %p67, %p68
      %p71 = scmp.ne.s32.totalorder %s54, %s70
      %p72 = scmp.eq.s32.totalorder %s34, 0
      %p73 = por %p71, %p72
      %s75 = sadd.s32 %s74, 1
      %p78 = scmp.eq.s32.totalorder %s28, 1
      %p79 = scmp.ne.s32.totalorder %s74, %s76
      %p80 = scmp.eq.s32.totalorder %s28, 0
      %p81 = por %p79, %p80
      %p82 = scmp.ne.s32.totalorder %s74, %s76
      %p83 = scmp.eq.s32.totalorder %s33, 1
      %p84 = por %p82, %p83
      %p85 = scmp.ne.s32.totalorder %s76, %s77
      %p86 = scmp.eq.s32.totalorder %s33, 0
      %p87 = por %p85, %p86
      %p88 = scmp.ne.s32.totalorder %s76, %s77
      %p89 = scmp.eq.s32.totalorder %s34, 1
      %p90 = por %p88, %p89
      %p92 = scmp.ne.s32.totalorder %s77, %s91
      %p93 = scmp.eq.s32.totalorder %s34, 0
      %p94 = por %p92, %p93
      %s96 = sadd.s32 %s95, 1
      %p99 = scmp.eq.s32.totalorder %s28, 1
      %p100 = scmp.ne.s32.totalorder %s95, %s97
      %p101 = scmp.eq.s32.totalorder %s28, 0
      %p102 = por %p100, %p101
      %p103 = scmp.ne.s32.totalorder %s95, %s97
      %p104 = scmp.eq.s32.totalorder %s33, 1
      %p105 = por %p103, %p104
      %p106 = scmp.ne.s32.totalorder %s97, %s98
      %p107 = scmp.eq.s32.totalorder %s33, 0
      %p108 = por %p106, %p107
      %p109 = scmp.ne.s32.totalorder %s97, %s98
      %p110 = scmp.eq.s32.totalorder %s34, 1
      %p111 = por %p109, %p110
      %p113 = scmp.ne.s32.totalorder %s98, %s112
      %p114 = scmp.eq.s32.totalorder %s34, 0
      %p115 = por %p113, %p114
      %s116 = ssub.s32 %s36, %s43
      %p117 = scmp.eq.s32.totalorder %s116, 0
      %s119 = sadd.s32 %s118, 1
      %s120 = scalar_select %p117, %s118, %s119
      %p123 = pneg %p117
      %p124 = scmp.eq.s32.totalorder %s28, 1
      %p125 = por %p123, %p124
      %p126 = scmp.ne.s32.totalorder %s118, %s121
      %p127 = scmp.eq.s32.totalorder %s28, 0
      %p128 = por %p126, %p127
      %p129 = scmp.ne.s32.totalorder %s118, %s121
      %p130 = scmp.eq.s32.totalorder %s33, 1
      %p131 = por %p129, %p130
      %p132 = scmp.ne.s32.totalorder %s121, %s122
      %p133 = scmp.eq.s32.totalorder %s33, 0
      %p134 = por %p132, %p133
      %p135 = scmp.ne.s32.totalorder %s121, %s122
      %p136 = scmp.eq.s32.totalorder %s34, 1
      %p137 = por %p135, %p136
      %p139 = scmp.ne.s32.totalorder %s122, %s138
      %p140 = scmp.eq.s32.totalorder %s34, 0
      %p141 = por %p139, %p140
      %s142 = ssub.s32 %s36, %s43
      %p143 = scmp.eq.s32.totalorder %s142, 0
      %s145 = sadd.s32 %s144, 1
      %s146 = scalar_select %p143, %s144, %s145
      %p149 = pneg %p143
      %p150 = scmp.eq.s32.totalorder %s28, 1
      %p151 = por %p149, %p150
      %p152 = scmp.ne.s32.totalorder %s144, %s147
      %p153 = scmp.eq.s32.totalorder %s28, 0
      %p154 = por %p152, %p153
      %p155 = scmp.ne.s32.totalorder %s144, %s147
      %p156 = scmp.eq.s32.totalorder %s33, 1
      %p157 = por %p155, %p156
      %p158 = scmp.ne.s32.totalorder %s147, %s148
      %p159 = scmp.eq.s32.totalorder %s33, 0
      %p160 = por %p158, %p159
      %p161 = scmp.ne.s32.totalorder %s147, %s148
      %p162 = scmp.eq.s32.totalorder %s34, 1
      %p163 = por %p161, %p162
      %p165 = scmp.ne.s32.totalorder %s148, %s164
      %p166 = scmp.eq.s32.totalorder %s34, 0
      %p167 = por %p165, %p166
      %s168 = ssub.s32 %s36, %s43
      %p169 = scmp.eq.s32.totalorder %s168, 0
      %s171 = sadd.s32 %s170, 1
      %s172 = scalar_select %p169, %s170, %s171
      %p175 = pneg %p169
      %p176 = scmp.eq.s32.totalorder %s28, 1
      %p177 = por %p175, %p176
      %p178 = scmp.ne.s32.totalorder %s170, %s173
      %p179 = scmp.eq.s32.totalorder %s28, 0
      %p180 = por %p178, %p179
      %p181 = scmp.ne.s32.totalorder %s170, %s173
      %p182 = scmp.eq.s32.totalorder %s33, 1
      %p183 = por %p181, %p182
      %p184 = scmp.ne.s32.totalorder %s173, %s174
      %p185 = scmp.eq.s32.totalorder %s33, 0
      %p186 = por %p184, %p185
      %p187 = scmp.ne.s32.totalorder %s173, %s174
      %p188 = scmp.eq.s32.totalorder %s34, 1
      %p189 = por %p187, %p188
      %p191 = scmp.ne.s32.totalorder %s174, %s190
      %p192 = scmp.eq.s32.totalorder %s34, 0
      %p193 = por %p191, %p192
      %s194 = ssub.s32 %s36, %s43
      %p195 = scmp.eq.s32.totalorder %s194, 0
      %s197 = sadd.s32 %s196, 1
      %s198 = scalar_select %p195, %s196, %s197
      %p201 = pneg %p195
      %p202 = scmp.eq.s32.totalorder %s28, 1
      %p203 = por %p201, %p202
      %p204 = scmp.ne.s32.totalorder %s196, %s199
      %p205 = scmp.eq.s32.totalorder %s28, 0
      %p206 = por %p204, %p205
      %p207 = scmp.ne.s32.totalorder %s196, %s199
      %p208 = scmp.eq.s32.totalorder %s33, 1
      %p209 = por %p207, %p208
      %p210 = scmp.ne.s32.totalorder %s199, %s200
      %p211 = scmp.eq.s32.totalorder %s33, 0
      %p212 = por %p210, %p211
      %p213 = scmp.ne.s32.totalorder %s199, %s200
      %p214 = scmp.eq.s32.totalorder %s34, 1
      %p215 = por %p213, %p214
      %p217 = scmp.ne.s32.totalorder %s200, %s216
      %p218 = scmp.eq.s32.totalorder %s34, 0
      %p219 = por %p217, %p218
      %s220 = ssub.s32 %s36, %s43
      %p221 = scmp.eq.s32.totalorder %s220, 0
      %s223 = sadd.s32 %s222, 1
      %s224 = scalar_select %p221, %s222, %s223
      %p227 = pneg %p221
      %p228 = scmp.eq.s32.totalorder %s28, 1
      %p229 = por %p227, %p228
      %p230 = scmp.ne.s32.totalorder %s222, %s225
      %p231 = scmp.eq.s32.totalorder %s28, 0
      %p232 = por %p230, %p231
      %p233 = scmp.ne.s32.totalorder %s222, %s225
      %p234 = scmp.eq.s32.totalorder %s33, 1
      %p235 = por %p233, %p234
      %p236 = scmp.ne.s32.totalorder %s225, %s226
      %p237 = scmp.eq.s32.totalorder %s33, 0
      %p238 = por %p236, %p237
      %p239 = scmp.ne.s32.totalorder %s225, %s226
      %p240 = scmp.eq.s32.totalorder %s34, 1
      %p241 = por %p239, %p240
      %p243 = scmp.ne.s32.totalorder %s226, %s242
      %p244 = scmp.eq.s32.totalorder %s34, 0
      %p245 = por %p243, %p244
      %s246 = ssub.s32 %s36, %s43
      %p247 = scmp.eq.s32.totalorder %s246, 0
      %s249 = sadd.s32 %s248, 1
      %s250 = scalar_select %p247, %s248, %s249
      %p253 = pneg %p247
      %p254 = scmp.eq.s32.totalorder %s28, 1
      %p255 = por %p253, %p254
      %p256 = scmp.ne.s32.totalorder %s248, %s251
      %p257 = scmp.eq.s32.totalorder %s28, 0
      %p258 = por %p256, %p257
      %p259 = scmp.ne.s32.totalorder %s248, %s251
      %p260 = scmp.eq.s32.totalorder %s33, 1
      %p261 = por %p259, %p260
      %p262 = scmp.ne.s32.totalorder %s251, %s252
      %p263 = scmp.eq.s32.totalorder %s33, 0
      %p264 = por %p262, %p263
      %p265 = scmp.ne.s32.totalorder %s251, %s252
      %p266 = scmp.eq.s32.totalorder %s34, 1
      %p267 = por %p265, %p266
      %p269 = scmp.ne.s32.totalorder %s252, %s268
      %p270 = scmp.eq.s32.totalorder %s34, 0
      %p271 = por %p269, %p270
      %s272 = ssub.s32 %s36, %s43
      %p273 = scmp.eq.s32.totalorder %s272, 0
      %s275 = sadd.s32 %s274, 1
      %s276 = scalar_select %p273, %s274, %s275
      %p279 = pneg %p273
      %p280 = scmp.eq.s32.totalorder %s28, 1
      %p281 = por %p279, %p280
      %p282 = scmp.ne.s32.totalorder %s274, %s277
      %p283 = scmp.eq.s32.totalorder %s28, 0
      %p284 = por %p282, %p283
      %p285 = scmp.ne.s32.totalorder %s274, %s277
      %p286 = scmp.eq.s32.totalorder %s33, 1
      %p287 = por %p285, %p286
      %p288 = scmp.ne.s32.totalorder %s277, %s278
      %p289 = scmp.eq.s32.totalorder %s33, 0
      %p290 = por %p288, %p289
      %p291 = scmp.ne.s32.totalorder %s277, %s278
      %p292 = scmp.eq.s32.totalorder %s34, 1
      %p293 = por %p291, %p292
      %p295 = scmp.ne.s32.totalorder %s278, %s294
      %p296 = scmp.eq.s32.totalorder %s34, 0
      %p297 = por %p295, %p296
      %s298 = ssub.s32 %s36, %s43
      %p299 = scmp.eq.s32.totalorder %s298, 0
      %s301 = sadd.s32 %s300, 1
      %s302 = scalar_select %p299, %s300, %s301
      %p305 = pneg %p299
      %p306 = scmp.eq.s32.totalorder %s28, 1
      %p307 = por %p305, %p306
      %p308 = scmp.ne.s32.totalorder %s300, %s303
      %p309 = scmp.eq.s32.totalorder %s28, 0
      %p310 = por %p308, %p309
      %p311 = scmp.ne.s32.totalorder %s300, %s303
      %p312 = scmp.eq.s32.totalorder %s33, 1
      %p313 = por %p311, %p312
      %p314 = scmp.ne.s32.totalorder %s303, %s304
      %p315 = scmp.eq.s32.totalorder %s33, 0
      %p316 = por %p314, %p315
      %p317 = scmp.ne.s32.totalorder %s303, %s304
      %p318 = scmp.eq.s32.totalorder %s34, 1
      %p319 = por %p317, %p318
      %p321 = scmp.ne.s32.totalorder %s304, %s320
      %p322 = scmp.eq.s32.totalorder %s34, 0
      %p323 = por %p321, %p322
      %s324 = ssub.s32 %s36, %s43
      %p325 = scmp.eq.s32.totalorder %s324, 0
      %s327 = sadd.s32 %s326, 1
      %s328 = scalar_select %p325, %s326, %s327
      %p331 = pneg %p325
      %p332 = scmp.eq.s32.totalorder %s28, 1
      %p333 = por %p331, %p332
      %p334 = scmp.ne.s32.totalorder %s326, %s329
      %p335 = scmp.eq.s32.totalorder %s28, 0
      %p336 = por %p334, %p335
      %p337 = scmp.ne.s32.totalorder %s326, %s329
      %p338 = scmp.eq.s32.totalorder %s33, 1
      %p339 = por %p337, %p338
      %p340 = scmp.ne.s32.totalorder %s329, %s330
      %p341 = scmp.eq.s32.totalorder %s33, 0
      %p342 = por %p340, %p341
      %p343 = scmp.ne.s32.totalorder %s329, %s330
      %p344 = scmp.eq.s32.totalorder %s34, 1
      %p345 = por %p343, %p344
      %p347 = scmp.ne.s32.totalorder %s330, %s346
      %p348 = scmp.eq.s32.totalorder %s34, 0
      %p349 = por %p347, %p348
      %s350 = ssub.s32 %s36, %s43
      %p351 = scmp.eq.s32.totalorder %s350, 0
      %s353 = sadd.s32 %s352, 1
      %s354 = scalar_select %p351, %s352, %s353
      %p357 = pneg %p351
      %p358 = scmp.eq.s32.totalorder %s28, 1
      %p359 = por %p357, %p358
      %p360 = scmp.ne.s32.totalorder %s352, %s355
      %p361 = scmp.eq.s32.totalorder %s28, 0
      %p362 = por %p360, %p361
      %p363 = scmp.ne.s32.totalorder %s352, %s355
      %p364 = scmp.eq.s32.totalorder %s33, 1
      %p365 = por %p363, %p364
      %p366 = scmp.ne.s32.totalorder %s355, %s356
      %p367 = scmp.eq.s32.totalorder %s33, 0
      %p368 = por %p366, %p367
      %p369 = scmp.ne.s32.totalorder %s355, %s356
      %p370 = scmp.eq.s32.totalorder %s34, 1
      %p371 = por %p369, %p370
      %p373 = scmp.ne.s32.totalorder %s356, %s372
      %p374 = scmp.eq.s32.totalorder %s34, 0
      %p375 = por %p373, %p374
      %s376 = ssub.s32 %s36, %s43
      %p377 = scmp.eq.s32.totalorder %s376, 0
      %s379 = sadd.s32 %s378, 1
      %s380 = scalar_select %p377, %s378, %s379
      %p383 = pneg %p377
      %p384 = scmp.eq.s32.totalorder %s28, 1
      %p385 = por %p383, %p384
      %p386 = scmp.ne.s32.totalorder %s378, %s381
      %p387 = scmp.eq.s32.totalorder %s28, 0
      %p388 = por %p386, %p387
      %p389 = scmp.ne.s32.totalorder %s378, %s381
      %p390 = scmp.eq.s32.totalorder %s33, 1
      %p391 = por %p389, %p390
      %p392 = scmp.ne.s32.totalorder %s381, %s382
      %p393 = scmp.eq.s32.totalorder %s33, 0
      %p394 = por %p392, %p393
      %p395 = scmp.ne.s32.totalorder %s381, %s382
      %p396 = scmp.eq.s32.totalorder %s34, 1
      %p397 = por %p395, %p396
      %p399 = scmp.ne.s32.totalorder %s382, %s398
      %p400 = scmp.eq.s32.totalorder %s34, 0
      %p401 = por %p399, %p400
      %s402 = ssub.s32 %s36, %s43
      %p403 = scmp.eq.s32.totalorder %s402, 0
      %s405 = sadd.s32 %s404, 1
      %s406 = scalar_select %p403, %s404, %s405
      %p409 = pneg %p403
      %p410 = scmp.eq.s32.totalorder %s28, 1
      %p411 = por %p409, %p410
      %p412 = scmp.ne.s32.totalorder %s404, %s407
      %p413 = scmp.eq.s32.totalorder %s28, 0
      %p414 = por %p412, %p413
      %p415 = scmp.ne.s32.totalorder %s404, %s407
      %p416 = scmp.eq.s32.totalorder %s33, 1
      %p417 = por %p415, %p416
      %p418 = scmp.ne.s32.totalorder %s407, %s408
      %p419 = scmp.eq.s32.totalorder %s33, 0
      %p420 = por %p418, %p419
      %p421 = scmp.ne.s32.totalorder %s407, %s408
      %p422 = scmp.eq.s32.totalorder %s34, 1
      %p423 = por %p421, %p422
      %p425 = scmp.ne.s32.totalorder %s408, %s424
      %p426 = scmp.eq.s32.totalorder %s34, 0
      %p427 = por %p425, %p426
      %s429 = sadd.s32 %s428, 1
      %p432 = scmp.eq.s32.totalorder %s28, 1
      %p433 = scmp.ne.s32.totalorder %s428, %s430
      %p434 = scmp.eq.s32.totalorder %s28, 0
      %p435 = por %p433, %p434
      %p436 = scmp.ne.s32.totalorder %s428, %s430
      %p437 = scmp.eq.s32.totalorder %s33, 1
      %p438 = por %p436, %p437
      %p439 = scmp.ne.s32.totalorder %s430, %s431
      %p440 = scmp.eq.s32.totalorder %s33, 0
      %p441 = por %p439, %p440
      %p442 = scmp.ne.s32.totalorder %s430, %s431
      %p443 = scmp.eq.s32.totalorder %s34, 1
      %p444 = por %p442, %p443
      %p446 = scmp.ne.s32.totalorder %s431, %s445
      %p447 = scmp.eq.s32.totalorder %s34, 0
      %p448 = por %p446, %p447
      %s450 = sadd.s32 %s449, 1
      %p453 = scmp.eq.s32.totalorder %s28, 1
      %p454 = scmp.ne.s32.totalorder %s449, %s451
      %p455 = scmp.eq.s32.totalorder %s28, 0
      %p456 = por %p454, %p455
      %p457 = scmp.ne.s32.totalorder %s449, %s451
      %p458 = scmp.eq.s32.totalorder %s33, 1
      %p459 = por %p457, %p458
      %p460 = scmp.ne.s32.totalorder %s451, %s452
      %p461 = scmp.eq.s32.totalorder %s33, 0
      %p462 = por %p460, %p461
      %p463 = scmp.ne.s32.totalorder %s451, %s452
      %p464 = scmp.eq.s32.totalorder %s34, 1
      %p465 = por %p463, %p464
      %p467 = scmp.ne.s32.totalorder %s452, %s466
      %p468 = scmp.eq.s32.totalorder %s34, 0
      %p469 = por %p467, %p468
      %s471 = sadd.s32 %s470, 1
      %p474 = scmp.eq.s32.totalorder %s28, 1
      %p475 = scmp.ne.s32.totalorder %s470, %s472
      %p476 = scmp.eq.s32.totalorder %s28, 0
      %p477 = por %p475, %p476
      %p478 = scmp.ne.s32.totalorder %s470, %s472
      %p479 = scmp.eq.s32.totalorder %s33, 1
      %p480 = por %p478, %p479
      %p481 = scmp.ne.s32.totalorder %s472, %s473
      %p482 = scmp.eq.s32.totalorder %s33, 0
      %p483 = por %p481, %p482
      %p484 = scmp.ne.s32.totalorder %s472, %s473
      %p485 = scmp.eq.s32.totalorder %s34, 1
      %p486 = por %p484, %p485
      %p488 = scmp.ne.s32.totalorder %s473, %s487
      %p489 = scmp.eq.s32.totalorder %s34, 0
      %p490 = por %p488, %p489
      %s492 = sadd.s32 %s491, 1
      %p495 = scmp.eq.s32.totalorder %s28, 1
      %p496 = scmp.ne.s32.totalorder %s491, %s493
      %p497 = scmp.eq.s32.totalorder %s28, 0
      %p498 = por %p496, %p497
      %p499 = scmp.ne.s32.totalorder %s491, %s493
      %p500 = scmp.eq.s32.totalorder %s33, 1
      %p501 = por %p499, %p500
      %p502 = scmp.ne.s32.totalorder %s493, %s494
      %p503 = scmp.eq.s32.totalorder %s33, 0
      %p504 = por %p502, %p503
      %p505 = scmp.ne.s32.totalorder %s493, %s494
      %p506 = scmp.eq.s32.totalorder %s34, 1
      %p507 = por %p505, %p506
      %p509 = scmp.ne.s32.totalorder %s494, %s508
      %p510 = scmp.eq.s32.totalorder %s34, 0
      %p511 = por %p509, %p510
      %s512 = ssub.s32 %s35, %s47
      %p513 = scmp.eq.s32.totalorder %s512, 0
      %s515 = sadd.s32 %s514, 1
      %s516 = scalar_select %p513, %s514, %s515
      %p519 = pneg %p513
      %p520 = scmp.eq.s32.totalorder %s28, 1
      %p521 = por %p519, %p520
      %p522 = scmp.ne.s32.totalorder %s514, %s517
      %p523 = scmp.eq.s32.totalorder %s28, 0
      %p524 = por %p522, %p523
      %p525 = scmp.ne.s32.totalorder %s514, %s517
      %p526 = scmp.eq.s32.totalorder %s33, 1
      %p527 = por %p525, %p526
      %p528 = scmp.ne.s32.totalorder %s517, %s518
      %p529 = scmp.eq.s32.totalorder %s33, 0
      %p530 = por %p528, %p529
      %p531 = scmp.ne.s32.totalorder %s517, %s518
      %p532 = scmp.eq.s32.totalorder %s34, 1
      %p533 = por %p531, %p532
      %p535 = scmp.ne.s32.totalorder %s518, %s534
      %p536 = scmp.eq.s32.totalorder %s34, 0
      %p537 = por %p535, %p536
      %p538 = scmp.le.s32.totalorder 1, %s28
      %p539 = scmp.lt.s32.totalorder %s28, 3
      %p540 = pnand %p538, %p539
      %p541 = pneg %p540
      // Predicated region
      $region9: #{tpu_custom_call.1} parent=5 // pred_check
        _
      $region10: #{tpu_custom_call.1} parent=5 // pred_check_branch
        %543 = sbr.rel (%p540) target = $region12
      $region11: #{tpu_custom_call.1} parent=5 // pred_region
        %s544 = ssub.s32 %s28, 1
        // Predicated region
        $region13: #{tpu_custom_call.1} parent=11 // pred_check
          %p545 = pneg %p66
        $region14: #{tpu_custom_call.1} parent=11 // pred_check_branch
          %547 = sbr.rel (%p545) target = $region16
        $region15: #{tpu_custom_call.1} parent=11 // pred_region
          %s548 = smul.u32 4, %s37
          %p549 = scmp.lt.s32.totalorder %s548, 3
          %s550 = scalar_select %p549, %s548, 3
          %s551 = smul.addr %s550, 8
          %s552 = scalar_lea.vmem %s0, %s551
          %s553 = smul.u32 4, %s37
        $region16: #{tpu_custom_call.1} parent=11 // pred_fallthru
          _
        // Predicated region
        $region17: #{tpu_custom_call.1} parent=11 // pred_check
          %p554 = pneg %p87
        $region18: #{tpu_custom_call.1} parent=11 // pred_check_branch
          %556 = sbr.rel (%p554) target = $region20
        $region19: #{tpu_custom_call.1} parent=11 // pred_region
          _
        $region20: #{tpu_custom_call.1} parent=11 // pred_fallthru
          _
        // Predicated region
        $region21: #{tpu_custom_call.1} parent=11 // pred_check
          %p557 = pneg %p108
        $region22: #{tpu_custom_call.1} parent=11 // pred_check_branch
          %559 = sbr.rel (%p557) target = $region24
        $region23: #{tpu_custom_call.1} parent=11 // pred_region
          _
        $region24: #{tpu_custom_call.1} parent=11 // pred_fallthru
          _
        // Predicated region
        $region25: #{tpu_custom_call.1} parent=11 // pred_check
          %p560 = pneg %p441
        $region26: #{tpu_custom_call.1} parent=11 // pred_check_branch
          %562 = sbr.rel (%p560) target = $region28
        $region27: #{tpu_custom_call.1} parent=11 // pred_region
          _
        $region28: #{tpu_custom_call.1} parent=11 // pred_fallthru
          _
        // Predicated region
        $region29: #{tpu_custom_call.1} parent=11 // pred_check
          %p563 = pneg %p462
        $region30: #{tpu_custom_call.1} parent=11 // pred_check_branch
          %565 = sbr.rel (%p563) target = $region32
        $region31: #{tpu_custom_call.1} parent=11 // pred_region
          _
        $region32: #{tpu_custom_call.1} parent=11 // pred_fallthru
          _
        // Predicated region
        $region33: #{tpu_custom_call.1} parent=11 // pred_check
          %p566 = pneg %p483
        $region34: #{tpu_custom_call.1} parent=11 // pred_check_branch
          %568 = sbr.rel (%p566) target = $region36
        $region35: #{tpu_custom_call.1} parent=11 // pred_region
          _
        $region36: #{tpu_custom_call.1} parent=11 // pred_fallthru
          _
        // Predicated region
        $region37: #{tpu_custom_call.1} parent=11 // pred_check
          %p569 = pneg %p504
        $region38: #{tpu_custom_call.1} parent=11 // pred_check_branch
          %571 = sbr.rel (%p569) target = $region40
        $region39: #{tpu_custom_call.1} parent=11 // pred_region
          _
        $region40: #{tpu_custom_call.1} parent=11 // pred_fallthru
          _
      $region12: #{tpu_custom_call.1} parent=5 // pred_fallthru
        _
      %p572 = scmp.lt.s32.totalorder %s28, 2
      // Predicated region
      $region41: #{tpu_custom_call.1} parent=5 // pred_check
        %p573 = pneg %p572
      $region42: #{tpu_custom_call.1} parent=5 // pred_check_branch
        %575 = sbr.rel (%p573) target = $region44
      $region43: #{tpu_custom_call.1} parent=5 // pred_region
        // Predicated region
        $region45: #{tpu_custom_call.1} parent=43 // pred_check
          %p576 = pneg %p128
        $region46: #{tpu_custom_call.1} parent=43 // pred_check_branch
          %578 = sbr.rel (%p576) target = $region48
        $region47: #{tpu_custom_call.1} parent=43 // pred_region
          %p579 = scmp.lt.s32.totalorder %s36, 1
          %s580 = scalar_select %p579, %s36, 1
          %s581 = smul.addr %s580, 4
          %s582 = smul.addr %s581, 4
          %s583 = scalar_lea.vmem %s3, %s582
        $region48: #{tpu_custom_call.1} parent=43 // pred_fallthru
          _
        // Predicated region
        $region49: #{tpu_custom_call.1} parent=43 // pred_check
          %p584 = pneg %p154
        $region50: #{tpu_custom_call.1} parent=43 // pred_check_branch
          %586 = sbr.rel (%p584) target = $region52
        $region51: #{tpu_custom_call.1} parent=43 // pred_region
          %p587 = scmp.lt.s32.totalorder %s36, 1
          %s588 = scalar_select %p587, %s36, 1
          %s589 = scalar_lea.vmem %s4, %s588
        $region52: #{tpu_custom_call.1} parent=43 // pred_fallthru
          _
        // Predicated region
        $region53: #{tpu_custom_call.1} parent=43 // pred_check
          %p590 = pneg %p180
        $region54: #{tpu_custom_call.1} parent=43 // pred_check_branch
          %592 = sbr.rel (%p590) target = $region56
        $region55: #{tpu_custom_call.1} parent=43 // pred_region
          %p593 = scmp.lt.s32.totalorder %s36, 1
          %s594 = scalar_select %p593, %s36, 1
          %s595 = smul.addr %s594, 4
          %s596 = smul.addr %s595, 4
          %s597 = scalar_lea.vmem %s5, %s596
        $region56: #{tpu_custom_call.1} parent=43 // pred_fallthru
          _
        // Predicated region
        $region57: #{tpu_custom_call.1} parent=43 // pred_check
          %p598 = pneg %p206
        $region58: #{tpu_custom_call.1} parent=43 // pred_check_branch
          %600 = sbr.rel (%p598) target = $region60
        $region59: #{tpu_custom_call.1} parent=43 // pred_region
          %p601 = scmp.lt.s32.totalorder %s36, 1
          %s602 = scalar_select %p601, %s36, 1
          %s603 = scalar_lea.vmem %s6, %s602
        $region60: #{tpu_custom_call.1} parent=43 // pred_fallthru
          _
        // Predicated region
        $region61: #{tpu_custom_call.1} parent=43 // pred_check
          %p604 = pneg %p232
        $region62: #{tpu_custom_call.1} parent=43 // pred_check_branch
          %606 = sbr.rel (%p604) target = $region64
        $region63: #{tpu_custom_call.1} parent=43 // pred_region
          %p607 = scmp.lt.s32.totalorder %s36, 1
          %s608 = scalar_select %p607, %s36, 1
          %s609 = scalar_lea.vmem %s7, %s608
        $region64: #{tpu_custom_call.1} parent=43 // pred_fallthru
          _
        // Predicated region
        $region65: #{tpu_custom_call.1} parent=43 // pred_check
          %p610 = pneg %p258
        $region66: #{tpu_custom_call.1} parent=43 // pred_check_branch
          %612 = sbr.rel (%p610) target = $region68
        $region67: #{tpu_custom_call.1} parent=43 // pred_region
          %p613 = scmp.lt.s32.totalorder %s36, 1
          %s614 = scalar_select %p613, %s36, 1
          %s615 = scalar_lea.vmem %s8, %s614
        $region68: #{tpu_custom_call.1} parent=43 // pred_fallthru
          _
        // Predicated region
        $region69: #{tpu_custom_call.1} parent=43 // pred_check
          %p616 = pneg %p284
        $region70: #{tpu_custom_call.1} parent=43 // pred_check_branch
          %618 = sbr.rel (%p616) target = $region72
        $region71: #{tpu_custom_call.1} parent=43 // pred_region
          %s619 = sand.u32 %s274, 1
          %s620 = scalar_lea.sflag [#allocation4], %s619
          %s621 = sand.u32 %s274, 1
          %s622 = smul.addr %s621, 16
          %s623 = scalar_lea.vmem [#allocation3], %s622
          %625 = vsyncadd %s620, 0
          %s626 = smul.addr %s36, 4
          %s627 = smul.addr %s626, 4
          %s628 = scalar_lea.hbm %s9, %s627
          %s629 = sshll.u32 %s628, 4
          %s630 = int_to_ptr.hbm [resolvable:$true] %s629
          %s631 = sshll.u32 %s623, 4
          %s632 = int_to_ptr.vmem [resolvable:$true] %s631
          %637 = dma.hbm_to_vmem [thread:$0]  %s630, 256, %s632, %s620, 64, 64, 4
        $region72: #{tpu_custom_call.1} parent=43 // pred_fallthru
          _
        // Predicated region
        $region73: #{tpu_custom_call.1} parent=43 // pred_check
          %p638 = pneg %p310
        $region74: #{tpu_custom_call.1} parent=43 // pred_check_branch
          %640 = sbr.rel (%p638) target = $region76
        $region75: #{tpu_custom_call.1} parent=43 // pred_region
          %p641 = scmp.lt.s32.totalorder %s36, 1
          %s642 = scalar_select %p641, %s36, 1
          %s643 = scalar_lea.vmem %s10, %s642
        $region76: #{tpu_custom_call.1} parent=43 // pred_fallthru
          _
        // Predicated region
        $region77: #{tpu_custom_call.1} parent=43 // pred_check
          %p644 = pneg %p336
        $region78: #{tpu_custom_call.1} parent=43 // pred_check_branch
          %646 = sbr.rel (%p644) target = $region80
        $region79: #{tpu_custom_call.1} parent=43 // pred_region
          %p647 = scmp.lt.s32.totalorder %s36, 1
          %s648 = scalar_select %p647, %s36, 1
          %s649 = smul.addr %s648, 8
          %s650 = smul.addr %s649, 4
          %s651 = scalar_lea.vmem %s11, %s650
        $region80: #{tpu_custom_call.1} parent=43 // pred_fallthru
          _
        // Predicated region
        $region81: #{tpu_custom_call.1} parent=43 // pred_check
          %p652 = pneg %p362
        $region82: #{tpu_custom_call.1} parent=43 // pred_check_branch
          %654 = sbr.rel (%p652) target = $region84
        $region83: #{tpu_custom_call.1} parent=43 // pred_region
          %p655 = scmp.lt.s32.totalorder %s36, 1
          %s656 = scalar_select %p655, %s36, 1
          %s657 = scalar_lea.vmem %s12, %s656
        $region84: #{tpu_custom_call.1} parent=43 // pred_fallthru
          _
        // Predicated region
        $region85: #{tpu_custom_call.1} parent=43 // pred_check
          %p658 = pneg %p388
        $region86: #{tpu_custom_call.1} parent=43 // pred_check_branch
          %660 = sbr.rel (%p658) target = $region88
        $region87: #{tpu_custom_call.1} parent=43 // pred_region
          %p661 = scmp.lt.s32.totalorder %s36, 1
          %s662 = scalar_select %p661, %s36, 1
          %s663 = scalar_lea.vmem %s13, %s662
        $region88: #{tpu_custom_call.1} parent=43 // pred_fallthru
          _
        // Predicated region
        $region89: #{tpu_custom_call.1} parent=43 // pred_check
          %p664 = pneg %p414
        $region90: #{tpu_custom_call.1} parent=43 // pred_check_branch
          %666 = sbr.rel (%p664) target = $region92
        $region91: #{tpu_custom_call.1} parent=43 // pred_region
          %p667 = scmp.lt.s32.totalorder %s36, 1
          %s668 = scalar_select %p667, %s36, 1
          %s669 = scalar_lea.vmem %s14, %s668
        $region92: #{tpu_custom_call.1} parent=43 // pred_fallthru
          _
      $region44: #{tpu_custom_call.1} parent=5 // pred_fallthru
        _
      %p670 = scmp.le.s32.totalorder 1, %s28
      %p671 = scmp.lt.s32.totalorder %s28, 3
      %p672 = pnand %p670, %p671
      %p673 = pneg %p672
      // Predicated region
      $region93: #{tpu_custom_call.1} parent=5 // pred_check
        _
      $region94: #{tpu_custom_call.1} parent=5 // pred_check_branch
        %675 = sbr.rel (%p672) target = $region96
      $region95: #{tpu_custom_call.1} parent=5 // pred_region
        %s676 = ssub.s32 %s28, 1
        %s677 = sand.u32 %s277, 1
        %s678 = scalar_lea.sflag [#allocation4], %s677
        %s679 = sand.u32 %s277, 1
        %s680 = smul.addr %s679, 16
        %s681 = scalar_lea.vmem [#allocation3], %s680
        // Predicated region
        $region97: #{tpu_custom_call.1} parent=95 // pred_check
          %p682 = pneg %p290
        $region98: #{tpu_custom_call.1} parent=95 // pred_check_branch
          %684 = sbr.rel (%p682) target = $region100
        $region99: #{tpu_custom_call.1} parent=95 // pred_region
          %686 = dma.done %s678, 256
        $region100: #{tpu_custom_call.1} parent=95 // pred_fallthru
          _
        %s687 = smul.u32 4, %s37
        %p688 = scmp.lt.s32.totalorder %s687, 3
        %s689 = scalar_select %p688, %s687, 3
        %s690 = smul.addr %s689, 8
        %s691 = scalar_lea.vmem %s0, %s690
        %p692 = pneg %p66
        %p693 = pneg %p63
        %p694 = pneg %p87
        %p695 = pneg %p84
        %p696 = pneg %p108
        %p697 = pneg %p105
        %p698 = scmp.lt.s32.totalorder %s38, 1
        %s699 = scalar_select %p698, %s38, 1
        %s700 = smul.addr %s699, 4
        %s701 = smul.addr %s700, 4
        %s702 = scalar_lea.vmem %s3, %s701
        %p703 = pneg %p134
        %p704 = pneg %p131
        %p705 = scmp.lt.s32.totalorder %s38, 1
        %s706 = scalar_select %p705, %s38, 1
        %s707 = scalar_lea.vmem %s4, %s706
        %p708 = pneg %p160
        %p709 = pneg %p157
        %p710 = scmp.lt.s32.totalorder %s38, 1
        %s711 = scalar_select %p710, %s38, 1
        %s712 = smul.addr %s711, 4
        %s713 = smul.addr %s712, 4
        %s714 = scalar_lea.vmem %s5, %s713
        %p715 = pneg %p186
        %p716 = pneg %p183
        %p717 = scmp.lt.s32.totalorder %s38, 1
        %s718 = scalar_select %p717, %s38, 1
        %s719 = scalar_lea.vmem %s6, %s718
        %p720 = pneg %p212
        %p721 = pneg %p209
        %p722 = scmp.lt.s32.totalorder %s38, 1
        %s723 = scalar_select %p722, %s38, 1
        %s724 = scalar_lea.vmem %s7, %s723
        %p725 = pneg %p238
        %p726 = pneg %p235
        %p727 = scmp.lt.s32.totalorder %s38, 1
        %s728 = scalar_select %p727, %s38, 1
        %s729 = scalar_lea.vmem %s8, %s728
        %p730 = pneg %p264
        %p731 = pneg %p261
        %s732 = sand.u32 %s277, 1
        %s733 = scalar_lea.sflag [#allocation4], %s732
        %s734 = sand.u32 %s277, 1
        %s735 = smul.addr %s734, 16
        %s736 = scalar_lea.vmem [#allocation3], %s735
        %p737 = pneg %p290
        %p738 = pneg %p287
        %p739 = scmp.lt.s32.totalorder %s38, 1
        %s740 = scalar_select %p739, %s38, 1
        %s741 = scalar_lea.vmem %s10, %s740
        %p742 = pneg %p316
        %p743 = pneg %p313
        %p744 = scmp.lt.s32.totalorder %s38, 1
        %s745 = scalar_select %p744, %s38, 1
        %s746 = smul.addr %s745, 8
        %s747 = smul.addr %s746, 4
        %s748 = scalar_lea.vmem %s11, %s747
        %p749 = pneg %p342
        %p750 = pneg %p339
        %p751 = scmp.lt.s32.totalorder %s38, 1
        %s752 = scalar_select %p751, %s38, 1
        %s753 = scalar_lea.vmem %s12, %s752
        %p754 = pneg %p368
        %p755 = pneg %p365
        %p756 = scmp.lt.s32.totalorder %s38, 1
        %s757 = scalar_select %p756, %s38, 1
        %s758 = scalar_lea.vmem %s13, %s757
        %p759 = pneg %p394
        %p760 = pneg %p391
        %p761 = scmp.lt.s32.totalorder %s38, 1
        %s762 = scalar_select %p761, %s38, 1
        %s763 = scalar_lea.vmem %s14, %s762
        %p764 = pneg %p420
        %p765 = pneg %p417
        %p766 = pneg %p441
        %p767 = pneg %p438
        %p768 = pneg %p462
        %p769 = pneg %p459
        %p770 = pneg %p483
        %p771 = pneg %p480
        %p772 = pneg %p504
        %p773 = pneg %p501
        %p774 = pneg %p530
        %p775 = pneg %p527
        %s776 = smul.u32 4, %s37
        %p777 = scmp.lt.s32.totalorder %s776, 3
        %s778 = scalar_select %p777, %s776, 3
        %s779 = smul.addr %s778, 8
        %s780 = scalar_lea.vmem %s19, %s779
        %s781 = smul.u32 4, %s37
        %p782 = scmp.lt.s32.totalorder %s781, 3
        %s783 = scalar_select %p782, %s781, 3
        %s784 = smul.addr %s783, 8
        %s785 = scalar_lea.vmem %s0, %s784
        %s786 = smul.u32 4, %s37
        %p787 = scmp.lt.s32.totalorder %s38, 1
        %s788 = scalar_select %p787, %s38, 1
        %s789 = smul.addr %s788, 4
        %s790 = smul.addr %s789, 4
        %s791 = scalar_lea.vmem %s3, %s790
        %p792 = scmp.lt.s32.totalorder %s38, 1
        %s793 = scalar_select %p792, %s38, 1
        %s794 = scalar_lea.vmem %s4, %s793
        %p795 = scmp.lt.s32.totalorder %s38, 1
        %s796 = scalar_select %p795, %s38, 1
        %s797 = smul.addr %s796, 4
        %s798 = smul.addr %s797, 4
        %s799 = scalar_lea.vmem %s5, %s798
        %p800 = scmp.lt.s32.totalorder %s38, 1
        %s801 = scalar_select %p800, %s38, 1
        %s802 = scalar_lea.vmem %s6, %s801
        %p803 = scmp.lt.s32.totalorder %s38, 1
        %s804 = scalar_select %p803, %s38, 1
        %s805 = scalar_lea.vmem %s7, %s804
        %p806 = scmp.lt.s32.totalorder %s38, 1
        %s807 = scalar_select %p806, %s38, 1
        %s808 = scalar_lea.vmem %s8, %s807
        %p809 = scmp.lt.s32.totalorder %s38, 1
        %s810 = scalar_select %p809, %s38, 1
        %s811 = scalar_lea.vmem %s10, %s810
        %p812 = scmp.lt.s32.totalorder %s38, 1
        %s813 = scalar_select %p812, %s38, 1
        %s814 = smul.addr %s813, 8
        %s815 = smul.addr %s814, 4
        %s816 = scalar_lea.vmem %s11, %s815
        %p817 = scmp.lt.s32.totalorder %s38, 1
        %s818 = scalar_select %p817, %s38, 1
        %s819 = scalar_lea.vmem %s12, %s818
        %p820 = scmp.lt.s32.totalorder %s38, 1
        %s821 = scalar_select %p820, %s38, 1
        %s822 = scalar_lea.vmem %s13, %s821
        %p823 = scmp.lt.s32.totalorder %s38, 1
        %s824 = scalar_select %p823, %s38, 1
        %s825 = scalar_lea.vmem %s14, %s824
        %s826 = smul.u32 4, %s37
        %p827 = scmp.lt.s32.totalorder %s826, 3
        %s828 = scalar_select %p827, %s826, 3
        %s829 = smul.addr %s828, 8
        %s830 = scalar_lea.vmem %s19, %s829
        %s831 = smul.u32 4, %s37
        %p833 = scmp.eq.s32.totalorder %s38, 0
        // Predicated region
        $region101: #{tpu_custom_call.1} parent=95 // pred_check
          %p834 = pneg %p833
        $region102: #{tpu_custom_call.1} parent=95 // pred_check_branch
          %836 = sbr.rel (%p834) target = $region104
        $region103: #{tpu_custom_call.1} parent=95 // pred_region
          %v837 = vld [vmem:[%s785] sm:$0xff]
          %v838 = vld [vmem:[%s785 + $0x8] sm:$0xff]
          %v839 = vld [vmem:[%s785 + $0x10] sm:$0xff]
          %v840 = vld [vmem:[%s785 + $0x18] sm:$0xff]
          %v841 = vpack.c.bf16 %v838, %v837
          %v842 = vpack.c.bf16 %v840, %v839
          %v843 = vld [vmem:[%s1] sm:$0x3]
          %v844 = vld [vmem:[%s2] sm:$0xff]
          %v845 = vld [vmem:[%s2 + $0x8] sm:$0xff]
          %v846 = vld [vmem:[%s2 + $0x10] sm:$0xff]
          %v847 = vld [vmem:[%s2 + $0x18] sm:$0xff]
          %vm848 = vcmask 31744
          %v850 = vsel %vm848, %v841, 0
          %v853 = vsel %vm848, %v842, 0
          %vm855 = vcmask 1041408
          %v857 = vsel %vm855, %v843, 0
          %859 = vmatpush.bf16.msra.mxu0 0
          %860 = vmatpush.bf16.msra.mxu0 0
          %861 = vmatpush.bf16.msra.mxu0 0
          %862 = vmatpush.bf16.msra.mxu0 0
          %863 = vmatpush.bf16.msra.mxu0 0
          %864 = vmatpush.bf16.msra.mxu0 0
          %865 = vmatpush.bf16.msra.mxu0 0
          %866 = vmatpush.bf16.msra.mxu0 %v857
          %867 = vmatmul.bf16.gmra.mxu0 %v850
          %v868 = vpop.f32.mrf.mxu0
          %v869 = vadd.f32 %v844, %v868
          %v870 = vpop.f32.mrf.mxu0
          %v871 = vadd.f32 %v845, %v870
          %872 = vmatmul.bf16.gmra.mxu0 %v853
          %v873 = vpop.f32.mrf.mxu0
          %v874 = vadd.f32 %v846, %v873
          %v875 = vpop.f32.mrf.mxu0
          %v876 = vadd.f32 %v847, %v875
          %877 = vdwg.mxu0
          %vm878 = vcmask 261120
          %879 = vst.msk [vmem:[#allocation2] sm:$0xff] %vm878, %v869
          %880 = vst.msk [vmem:[#allocation2 + $0x8] sm:$0xff] %vm878, %v871
          %881 = vst.msk [vmem:[#allocation2 + $0x10] sm:$0xff] %vm878, %v874
          %882 = vst.msk [vmem:[#allocation2 + $0x18] sm:$0xff] %vm878, %v876
        $region104: #{tpu_custom_call.1} parent=95 // pred_fallthru
          _
        %v883 = vld [vmem:[#allocation2] sm:$0xff]
        %v884 = vld [vmem:[#allocation2 + $0x8] sm:$0xff]
        %v885 = vld [vmem:[#allocation2 + $0x10] sm:$0xff]
        %v886 = vld [vmem:[#allocation2 + $0x18] sm:$0xff]
        %v887 = vld [vmem:[%s791] sm:$0xf]
        %v888 = vld [vmem:[%s791 + $0x4] sm:$0xf]
        %v889 = vld [vmem:[%s791 + $0x8] sm:$0xf]
        %v890 = vld [vmem:[%s791 + $0xc] sm:$0xf]
        %v891 = vld [vmem:[%s794] sm:$0x1]
        %v892 = vld [vmem:[%s799] sm:$0xf]
        %v893 = vld [vmem:[%s799 + $0x4] sm:$0xf]
        %v894 = vld [vmem:[%s799 + $0x8] sm:$0xf]
        %v895 = vld [vmem:[%s799 + $0xc] sm:$0xf]
        %v896 = vld [vmem:[%s802] sm:$0x1]
        %v897 = vld [vmem:[%s805] sm:$0x1]
        %v898 = vld [vmem:[%s808] sm:$0x1]
        %v899 = vld [vmem:[%s681] sm:$0xf]
        %v900 = vld [vmem:[%s681 + $0x4] sm:$0xf]
        %v901 = vld [vmem:[%s681 + $0x8] sm:$0xf]
        %v902 = vld [vmem:[%s681 + $0xc] sm:$0xf]
        %v903 = vld [vmem:[%s811] sm:$0x1]
        %v904 = vld [vmem:[%s816] sm:$0xf]
        %v905 = vld [vmem:[%s816 + $0x4] sm:$0xf]
        %v906 = vld [vmem:[%s816 + $0x8] sm:$0xf]
        %v907 = vld [vmem:[%s816 + $0xc] sm:$0xf]
        %v908 = vld [vmem:[%s816 + $0x10] sm:$0xf]
        %v909 = vld [vmem:[%s816 + $0x14] sm:$0xf]
        %v910 = vld [vmem:[%s816 + $0x18] sm:$0xf]
        %v911 = vld [vmem:[%s816 + $0x1c] sm:$0xf]
        %v912 = vld [vmem:[%s819] sm:$0x1]
        %v913 = vld [vmem:[%s822] sm:$0x1]
        %v914 = vld [vmem:[%s825] sm:$0x1]
        %v915 = vpack.c.bf16 %v884, %v883
        %v916 = vpack.c.bf16 %v886, %v885
        %v918 = vperm.slane %v891, 0
        %v924 = vunpack.c.l.b16 %v887
        %v925 = vunpack.c.l.b16 %v888
        %v926 = vunpack.c.l.b16 %v889
        %v927 = vunpack.c.l.b16 %v890
        %v928 = vpack.c.b16 %v925, %v924
        %v929 = vpack.c.b16 %v927, %v926
        %vm932 = vcmask 261120
        %v934 = vsel %vm932, %v915, 0
        %v937 = vsel %vm932, %v916, 0
        %939 = vmatpush.bf16.msra.mxu0 0
        %940 = vmatpush.bf16.msra.mxu0 0
        %941 = vmatpush.bf16.msra.mxu0 0
        %942 = vmatpush.bf16.msra.mxu0 0
        %943 = vmatpush.bf16.msra.mxu0 0
        %944 = vmatpush.bf16.msra.mxu0 0
        %945 = vmatpush.bf16.msra.mxu0 %v929
        %946 = vmatpush.bf16.msra.mxu0 %v928
        %947 = vmatmul.bf16.gmra.mxu0 %v934
        %v948 = vpop.f32.mrf.mxu0
        %v949 = vadd.f32 %v918, %v948
        %v950 = vpop.f32.mrf.mxu0
        %v951 = vadd.f32 %v918, %v950
        %952 = vmatmul.bf16.gmra.mxu0 %v937
        %v953 = vpop.f32.mrf.mxu0
        %v954 = vadd.f32 %v918, %v953
        %v955 = vpop.f32.mrf.mxu0
        %v956 = vadd.f32 %v918, %v955
        %957 = vdwg.mxu0
        %v962 = vrot.slane %v949, 4
        %v963 = vrot.slane %v951, 4
        %v964 = vrot.slane %v954, 4
        %v965 = vrot.slane %v956, 4
        %v970 = vpack.c.bf16 %v949, %v949
        %v971 = vpack.c.bf16 %v962, %v962
        %v972 = vpack.c.bf16 %v951, %v951
        %v973 = vpack.c.bf16 %v963, %v963
        %v974 = vpack.c.bf16 %v954, %v954
        %v975 = vpack.c.bf16 %v964, %v964
        %v976 = vpack.c.bf16 %v956, %v956
        %v977 = vpack.c.bf16 %v965, %v965
        %v979 = vunpack.c.l.b16 %v970
        %v980 = vpack.c.b16 %v979, %v979
        %981 = vrot.lane.b32.xlu0 %v980, 96
        %v982 = vpop.permute.xlu0 %981
        %vm983 = vcmask 64512
        %v985 = vsel %vm983, %v970, 0
        %v988 = vsel %vm983, %v982, 0
        %990 = vmatpush.bf16.xpose.msra.mxu0 0
        %991 = vmatpush.bf16.xpose.msra.mxu0 0
        %992 = vmatpush.bf16.xpose.msra.mxu0 0
        %993 = vmatpush.bf16.xpose.msra.mxu0 0
        %994 = vmatpush.bf16.xpose.msra.mxu0 0
        %995 = vmatpush.bf16.xpose.msra.mxu0 0
        %996 = vmatpush.bf16.xpose.msra.mxu0 0
        %997 = vmatpush.bf16.xpose.msra.mxu0 %v988
        %998 = vmatmul.bf16.gmra.mxu0 %v985
        %v999 = vpop.f32.mrf.mxu0
        %v1000 = vadd.f32 0.0, %v999
        %v1001 = vpop.f32.mrf.mxu0
        %1002 = vdwg.mxu0
        %v1004 = vunpack.c.l.b16 %v971
        %v1005 = vpack.c.b16 %v1004, %v1004
        %1006 = vrot.lane.b32.xlu0 %v1005, 96
        %v1007 = vpop.permute.xlu0 %1006
        %v1009 = vsel %vm983, %v971, 0
        %v1012 = vsel %vm983, %v1007, 0
        %1014 = vmatpush.bf16.xpose.msra.mxu0 0
        %1015 = vmatpush.bf16.xpose.msra.mxu0 0
        %1016 = vmatpush.bf16.xpose.msra.mxu0 0
        %1017 = vmatpush.bf16.xpose.msra.mxu0 0
        %1018 = vmatpush.bf16.xpose.msra.mxu0 0
        %1019 = vmatpush.bf16.xpose.msra.mxu0 0
        %1020 = vmatpush.bf16.xpose.msra.mxu0 0
        %1021 = vmatpush.bf16.xpose.msra.mxu0 %v1012
        %1022 = vmatmul.bf16.gmra.mxu0 %v1009
        %v1023 = vpop.f32.mrf.mxu0
        %v1024 = vadd.f32 0.0, %v1023
        %v1025 = vpop.f32.mrf.mxu0
        %1026 = vdwg.mxu0
        %v1028 = vunpack.c.l.b16 %v972
        %v1029 = vpack.c.b16 %v1028, %v1028
        %1030 = vrot.lane.b32.xlu0 %v1029, 96
        %v1031 = vpop.permute.xlu0 %1030
        %v1033 = vsel %vm983, %v972, 0
        %v1036 = vsel %vm983, %v1031, 0
        %1038 = vmatpush.bf16.xpose.msra.mxu0 0
        %1039 = vmatpush.bf16.xpose.msra.mxu0 0
        %1040 = vmatpush.bf16.xpose.msra.mxu0 0
        %1041 = vmatpush.bf16.xpose.msra.mxu0 0
        %1042 = vmatpush.bf16.xpose.msra.mxu0 0
        %1043 = vmatpush.bf16.xpose.msra.mxu0 0
        %1044 = vmatpush.bf16.xpose.msra.mxu0 0
        %1045 = vmatpush.bf16.xpose.msra.mxu0 %v1036
        %1046 = vmatmul.bf16.gmra.mxu0 %v1033
        %v1047 = vpop.f32.mrf.mxu0
        %v1048 = vadd.f32 0.0, %v1047
        %v1049 = vpop.f32.mrf.mxu0
        %1050 = vdwg.mxu0
        %v1052 = vunpack.c.l.b16 %v973
        %v1053 = vpack.c.b16 %v1052, %v1052
        %1054 = vrot.lane.b32.xlu0 %v1053, 96
        %v1055 = vpop.permute.xlu0 %1054
        %v1057 = vsel %vm983, %v973, 0
        %v1060 = vsel %vm983, %v1055, 0
        %1062 = vmatpush.bf16.xpose.msra.mxu0 0
        %1063 = vmatpush.bf16.xpose.msra.mxu0 0
        %1064 = vmatpush.bf16.xpose.msra.mxu0 0
        %1065 = vmatpush.bf16.xpose.msra.mxu0 0
        %1066 = vmatpush.bf16.xpose.msra.mxu0 0
        %1067 = vmatpush.bf16.xpose.msra.mxu0 0
        %1068 = vmatpush.bf16.xpose.msra.mxu0 0
        %1069 = vmatpush.bf16.xpose.msra.mxu0 %v1060
        %1070 = vmatmul.bf16.gmra.mxu0 %v1057
        %v1071 = vpop.f32.mrf.mxu0
        %v1072 = vadd.f32 0.0, %v1071
        %v1073 = vpop.f32.mrf.mxu0
        %1074 = vdwg.mxu0
        %v1076 = vunpack.c.l.b16 %v974
        %v1077 = vpack.c.b16 %v1076, %v1076
        %1078 = vrot.lane.b32.xlu0 %v1077, 96
        %v1079 = vpop.permute.xlu0 %1078
        %v1081 = vsel %vm983, %v974, 0
        %v1084 = vsel %vm983, %v1079, 0
        %1086 = vmatpush.bf16.xpose.msra.mxu0 0
        %1087 = vmatpush.bf16.xpose.msra.mxu0 0
        %1088 = vmatpush.bf16.xpose.msra.mxu0 0
        %1089 = vmatpush.bf16.xpose.msra.mxu0 0
        %1090 = vmatpush.bf16.xpose.msra.mxu0 0
        %1091 = vmatpush.bf16.xpose.msra.mxu0 0
        %1092 = vmatpush.bf16.xpose.msra.mxu0 0
        %1093 = vmatpush.bf16.xpose.msra.mxu0 %v1084
        %1094 = vmatmul.bf16.gmra.mxu0 %v1081
        %v1095 = vpop.f32.mrf.mxu0
        %v1096 = vadd.f32 0.0, %v1095
        %v1097 = vpop.f32.mrf.mxu0
        %1098 = vdwg.mxu0
        %v1100 = vunpack.c.l.b16 %v975
        %v1101 = vpack.c.b16 %v1100, %v1100
        %1102 = vrot.lane.b32.xlu0 %v1101, 96
        %v1103 = vpop.permute.xlu0 %1102
        %v1105 = vsel %vm983, %v975, 0
        %v1108 = vsel %vm983, %v1103, 0
        %1110 = vmatpush.bf16.xpose.msra.mxu0 0
        %1111 = vmatpush.bf16.xpose.msra.mxu0 0
        %1112 = vmatpush.bf16.xpose.msra.mxu0 0
        %1113 = vmatpush.bf16.xpose.msra.mxu0 0
        %1114 = vmatpush.bf16.xpose.msra.mxu0 0
        %1115 = vmatpush.bf16.xpose.msra.mxu0 0
        %1116 = vmatpush.bf16.xpose.msra.mxu0 0
        %1117 = vmatpush.bf16.xpose.msra.mxu0 %v1108
        %1118 = vmatmul.bf16.gmra.mxu0 %v1105
        %v1119 = vpop.f32.mrf.mxu0
        %v1120 = vadd.f32 0.0, %v1119
        %v1121 = vpop.f32.mrf.mxu0
        %1122 = vdwg.mxu0
        %v1124 = vunpack.c.l.b16 %v976
        %v1125 = vpack.c.b16 %v1124, %v1124
        %1126 = vrot.lane.b32.xlu0 %v1125, 96
        %v1127 = vpop.permute.xlu0 %1126
        %v1129 = vsel %vm983, %v976, 0
        %v1132 = vsel %vm983, %v1127, 0
        %1134 = vmatpush.bf16.xpose.msra.mxu0 0
        %1135 = vmatpush.bf16.xpose.msra.mxu0 0
        %1136 = vmatpush.bf16.xpose.msra.mxu0 0
        %1137 = vmatpush.bf16.xpose.msra.mxu0 0
        %1138 = vmatpush.bf16.xpose.msra.mxu0 0
        %1139 = vmatpush.bf16.xpose.msra.mxu0 0
        %1140 = vmatpush.bf16.xpose.msra.mxu0 0
        %1141 = vmatpush.bf16.xpose.msra.mxu0 %v1132
        %1142 = vmatmul.bf16.gmra.mxu0 %v1129
        %v1143 = vpop.f32.mrf.mxu0
        %v1144 = vadd.f32 0.0, %v1143
        %v1145 = vpop.f32.mrf.mxu0
        %1146 = vdwg.mxu0
        %v1148 = vunpack.c.l.b16 %v977
        %v1149 = vpack.c.b16 %v1148, %v1148
        %1150 = vrot.lane.b32.xlu0 %v1149, 96
        %v1151 = vpop.permute.xlu0 %1150
        %v1153 = vsel %vm983, %v977, 0
        %v1156 = vsel %vm983, %v1151, 0
        %1158 = vmatpush.bf16.xpose.msra.mxu0 0
        %1159 = vmatpush.bf16.xpose.msra.mxu0 0
        %1160 = vmatpush.bf16.xpose.msra.mxu0 0
        %1161 = vmatpush.bf16.xpose.msra.mxu0 0
        %1162 = vmatpush.bf16.xpose.msra.mxu0 0
        %1163 = vmatpush.bf16.xpose.msra.mxu0 0
        %1164 = vmatpush.bf16.xpose.msra.mxu0 0
        %1165 = vmatpush.bf16.xpose.msra.mxu0 %v1156
        %1166 = vmatmul.bf16.gmra.mxu0 %v1153
        %v1167 = vpop.f32.mrf.mxu0
        %v1168 = vadd.f32 0.0, %v1167
        %v1169 = vpop.f32.mrf.mxu0
        %1170 = vdwg.mxu0
        %vm1171 = vcmask 27648
        %v1172 = vsel %vm1171, %v1000, -inf
        %1173 = vmax.xlane.f32.xlu0 %v1172
        %v1174 = vpop.xlane.xlu0 %1173
        %v1175 = vsel %vm1171, %v1024, -inf
        %1176 = vmax.xlane.f32.xlu0 %v1175
        %v1177 = vpop.xlane.xlu0 %1176
        %v1178 = vsel %vm1171, %v1048, -inf
        %1179 = vmax.xlane.f32.xlu0 %v1178
        %v1180 = vpop.xlane.xlu0 %1179
        %v1181 = vsel %vm1171, %v1072, -inf
        %1182 = vmax.xlane.f32.xlu0 %v1181
        %v1183 = vpop.xlane.xlu0 %1182
        %v1184 = vsel %vm1171, %v1096, -inf
        %1185 = vmax.xlane.f32.xlu0 %v1184
        %v1186 = vpop.xlane.xlu0 %1185
        %v1187 = vsel %vm1171, %v1120, -inf
        %1188 = vmax.xlane.f32.xlu0 %v1187
        %v1189 = vpop.xlane.xlu0 %1188
        %v1190 = vsel %vm1171, %v1144, -inf
        %1191 = vmax.xlane.f32.xlu0 %v1190
        %v1192 = vpop.xlane.xlu0 %1191
        %v1193 = vsel %vm1171, %v1168, -inf
        %1194 = vmax.xlane.f32.xlu0 %v1193
        %v1195 = vpop.xlane.xlu0 %1194
        %v1196 = vsub.f32 %v1000, %v1174
        %v1197 = vsub.f32 %v1024, %v1177
        %v1198 = vsub.f32 %v1048, %v1180
        %v1199 = vsub.f32 %v1072, %v1183
        %v1200 = vsub.f32 %v1096, %v1186
        %v1201 = vsub.f32 %v1120, %v1189
        %v1202 = vsub.f32 %v1144, %v1192
        %v1203 = vsub.f32 %v1168, %v1195
        %v1204 = vmul.f32 %v1196, 1.442695
        %v1205 = vpow.pop %v1204
        %v1206 = vmul.f32 %v1197, 1.442695
        %v1207 = vpow.pop %v1206
        %v1208 = vmul.f32 %v1198, 1.442695
        %v1209 = vpow.pop %v1208
        %v1210 = vmul.f32 %v1199, 1.442695
        %v1211 = vpow.pop %v1210
        %v1212 = vmul.f32 %v1200, 1.442695
        %v1213 = vpow.pop %v1212
        %v1214 = vmul.f32 %v1201, 1.442695
        %v1215 = vpow.pop %v1214
        %v1216 = vmul.f32 %v1202, 1.442695
        %v1217 = vpow.pop %v1216
        %v1218 = vmul.f32 %v1203, 1.442695
        %v1219 = vpow.pop %v1218
        %v1220 = vsel %vm1171, %v1205, 0.0
        %1221 = vadd.xlane.f32.xlu0 %v1220
        %v1222 = vpop.xlane.xlu0 %1221
        %v1223 = vsel %vm1171, %v1207, 0.0
        %1224 = vadd.xlane.f32.xlu0 %v1223
        %v1225 = vpop.xlane.xlu0 %1224
        %v1226 = vsel %vm1171, %v1209, 0.0
        %1227 = vadd.xlane.f32.xlu0 %v1226
        %v1228 = vpop.xlane.xlu0 %1227
        %v1229 = vsel %vm1171, %v1211, 0.0
        %1230 = vadd.xlane.f32.xlu0 %v1229
        %v1231 = vpop.xlane.xlu0 %1230
        %v1232 = vsel %vm1171, %v1213, 0.0
        %1233 = vadd.xlane.f32.xlu0 %v1232
        %v1234 = vpop.xlane.xlu0 %1233
        %v1235 = vsel %vm1171, %v1215, 0.0
        %1236 = vadd.xlane.f32.xlu0 %v1235
        %v1237 = vpop.xlane.xlu0 %1236
        %v1238 = vsel %vm1171, %v1217, 0.0
        %1239 = vadd.xlane.f32.xlu0 %v1238
        %v1240 = vpop.xlane.xlu0 %1239
        %v1241 = vsel %vm1171, %v1219, 0.0
        %1242 = vadd.xlane.f32.xlu0 %v1241
        %v1243 = vpop.xlane.xlu0 %1242
        %v1244 = vrcp.pop %v1222
        %v1245 = vrcp.pop %v1225
        %v1246 = vrcp.pop %v1228
        %v1247 = vrcp.pop %v1231
        %v1248 = vrcp.pop %v1234
        %v1249 = vrcp.pop %v1237
        %v1250 = vrcp.pop %v1240
        %v1251 = vrcp.pop %v1243
        %v1252 = vmul.f32 %v1205, %v1244
        %v1253 = vmul.f32 %v1207, %v1245
        %v1254 = vmul.f32 %v1209, %v1246
        %v1255 = vmul.f32 %v1211, %v1247
        %v1256 = vmul.f32 %v1213, %v1248
        %v1257 = vmul.f32 %v1215, %v1249
        %v1258 = vmul.f32 %v1217, %v1250
        %v1259 = vmul.f32 %v1219, %v1251
        %v1260 = vpack.c.bf16 %v1252, %v1252
        %v1261 = vpack.c.bf16 %v1253, %v1253
        %v1262 = vpack.c.bf16 %v1254, %v1254
        %v1263 = vpack.c.bf16 %v1255, %v1255
        %v1264 = vpack.c.bf16 %v1256, %v1256
        %v1265 = vpack.c.bf16 %v1257, %v1257
        %v1266 = vpack.c.bf16 %v1258, %v1258
        %v1267 = vpack.c.bf16 %v1259, %v1259
        %1268 = vrot.lane.b32.xlu0 %v980, 64
        %v1269 = vpop.permute.xlu0 %1268
        %vm1270 = vcmask 31744
        %v1272 = vsel %vm1270, %v1260, 0
        %vm1274 = vcmask 1041408
        %v1276 = vsel %vm1274, %v1269, 0
        %1278 = vmatpush.bf16.msra.mxu0 0
        %1279 = vmatpush.bf16.msra.mxu0 0
        %1280 = vmatpush.bf16.msra.mxu0 0
        %1281 = vmatpush.bf16.msra.mxu0 0
        %1282 = vmatpush.bf16.msra.mxu0 0
        %1283 = vmatpush.bf16.msra.mxu0 0
        %1284 = vmatpush.bf16.msra.mxu0 0
        %1285 = vmatpush.bf16.msra.mxu0 %v1276
        %1286 = vmatmul.bf16.gmra.mxu0 %v1272
        %v1287 = vpop.f32.mrf.mxu0
        %v1288 = vadd.f32 0.0, %v1287
        %v1289 = vpop.f32.mrf.mxu0
        %1290 = vdwg.mxu0
        %1291 = vrot.lane.b32.xlu0 %v1005, 64
        %v1292 = vpop.permute.xlu0 %1291
        %v1294 = vsel %vm1270, %v1261, 0
        %v1297 = vsel %vm1274, %v1292, 0
        %1299 = vmatpush.bf16.msra.mxu0 0
        %1300 = vmatpush.bf16.msra.mxu0 0
        %1301 = vmatpush.bf16.msra.mxu0 0
        %1302 = vmatpush.bf16.msra.mxu0 0
        %1303 = vmatpush.bf16.msra.mxu0 0
        %1304 = vmatpush.bf16.msra.mxu0 0
        %1305 = vmatpush.bf16.msra.mxu0 0
        %1306 = vmatpush.bf16.msra.mxu0 %v1297
        %1307 = vmatmul.bf16.gmra.mxu0 %v1294
        %v1308 = vpop.f32.mrf.mxu0
        %v1309 = vadd.f32 0.0, %v1308
        %v1310 = vpop.f32.mrf.mxu0
        %1311 = vdwg.mxu0
        %1312 = vrot.lane.b32.xlu0 %v1029, 64
        %v1313 = vpop.permute.xlu0 %1312
        %v1315 = vsel %vm1270, %v1262, 0
        %v1318 = vsel %vm1274, %v1313, 0
        %1320 = vmatpush.bf16.msra.mxu0 0
        %1321 = vmatpush.bf16.msra.mxu0 0
        %1322 = vmatpush.bf16.msra.mxu0 0
        %1323 = vmatpush.bf16.msra.mxu0 0
        %1324 = vmatpush.bf16.msra.mxu0 0
        %1325 = vmatpush.bf16.msra.mxu0 0
        %1326 = vmatpush.bf16.msra.mxu0 0
        %1327 = vmatpush.bf16.msra.mxu0 %v1318
        %1328 = vmatmul.bf16.gmra.mxu0 %v1315
        %v1329 = vpop.f32.mrf.mxu0
        %v1330 = vadd.f32 0.0, %v1329
        %v1331 = vpop.f32.mrf.mxu0
        %1332 = vdwg.mxu0
        %1333 = vrot.lane.b32.xlu0 %v1053, 64
        %v1334 = vpop.permute.xlu0 %1333
        %v1336 = vsel %vm1270, %v1263, 0
        %v1339 = vsel %vm1274, %v1334, 0
        %1341 = vmatpush.bf16.msra.mxu0 0
        %1342 = vmatpush.bf16.msra.mxu0 0
        %1343 = vmatpush.bf16.msra.mxu0 0
        %1344 = vmatpush.bf16.msra.mxu0 0
        %1345 = vmatpush.bf16.msra.mxu0 0
        %1346 = vmatpush.bf16.msra.mxu0 0
        %1347 = vmatpush.bf16.msra.mxu0 0
        %1348 = vmatpush.bf16.msra.mxu0 %v1339
        %1349 = vmatmul.bf16.gmra.mxu0 %v1336
        %v1350 = vpop.f32.mrf.mxu0
        %v1351 = vadd.f32 0.0, %v1350
        %v1352 = vpop.f32.mrf.mxu0
        %1353 = vdwg.mxu0
        %1354 = vrot.lane.b32.xlu0 %v1077, 64
        %v1355 = vpop.permute.xlu0 %1354
        %v1357 = vsel %vm1270, %v1264, 0
        %v1360 = vsel %vm1274, %v1355, 0
        %1362 = vmatpush.bf16.msra.mxu0 0
        %1363 = vmatpush.bf16.msra.mxu0 0
        %1364 = vmatpush.bf16.msra.mxu0 0
        %1365 = vmatpush.bf16.msra.mxu0 0
        %1366 = vmatpush.bf16.msra.mxu0 0
        %1367 = vmatpush.bf16.msra.mxu0 0
        %1368 = vmatpush.bf16.msra.mxu0 0
        %1369 = vmatpush.bf16.msra.mxu0 %v1360
        %1370 = vmatmul.bf16.gmra.mxu0 %v1357
        %v1371 = vpop.f32.mrf.mxu0
        %v1372 = vadd.f32 0.0, %v1371
        %v1373 = vpop.f32.mrf.mxu0
        %1374 = vdwg.mxu0
        %1375 = vrot.lane.b32.xlu0 %v1101, 64
        %v1376 = vpop.permute.xlu0 %1375
        %v1378 = vsel %vm1270, %v1265, 0
        %v1381 = vsel %vm1274, %v1376, 0
        %1383 = vmatpush.bf16.msra.mxu0 0
        %1384 = vmatpush.bf16.msra.mxu0 0
        %1385 = vmatpush.bf16.msra.mxu0 0
        %1386 = vmatpush.bf16.msra.mxu0 0
        %1387 = vmatpush.bf16.msra.mxu0 0
        %1388 = vmatpush.bf16.msra.mxu0 0
        %1389 = vmatpush.bf16.msra.mxu0 0
        %1390 = vmatpush.bf16.msra.mxu0 %v1381
        %1391 = vmatmul.bf16.gmra.mxu0 %v1378
        %v1392 = vpop.f32.mrf.mxu0
        %v1393 = vadd.f32 0.0, %v1392
        %v1394 = vpop.f32.mrf.mxu0
        %1395 = vdwg.mxu0
        %1396 = vrot.lane.b32.xlu0 %v1125, 64
        %v1397 = vpop.permute.xlu0 %1396
        %v1399 = vsel %vm1270, %v1266, 0
        %v1402 = vsel %vm1274, %v1397, 0
        %1404 = vmatpush.bf16.msra.mxu0 0
        %1405 = vmatpush.bf16.msra.mxu0 0
        %1406 = vmatpush.bf16.msra.mxu0 0
        %1407 = vmatpush.bf16.msra.mxu0 0
        %1408 = vmatpush.bf16.msra.mxu0 0
        %1409 = vmatpush.bf16.msra.mxu0 0
        %1410 = vmatpush.bf16.msra.mxu0 0
        %1411 = vmatpush.bf16.msra.mxu0 %v1402
        %1412 = vmatmul.bf16.gmra.mxu0 %v1399
        %v1413 = vpop.f32.mrf.mxu0
        %v1414 = vadd.f32 0.0, %v1413
        %v1415 = vpop.f32.mrf.mxu0
        %1416 = vdwg.mxu0
        %1417 = vrot.lane.b32.xlu0 %v1149, 64
        %v1418 = vpop.permute.xlu0 %1417
        %v1420 = vsel %vm1270, %v1267, 0
        %v1423 = vsel %vm1274, %v1418, 0
        %1425 = vmatpush.bf16.msra.mxu0 0
        %1426 = vmatpush.bf16.msra.mxu0 0
        %1427 = vmatpush.bf16.msra.mxu0 0
        %1428 = vmatpush.bf16.msra.mxu0 0
        %1429 = vmatpush.bf16.msra.mxu0 0
        %1430 = vmatpush.bf16.msra.mxu0 0
        %1431 = vmatpush.bf16.msra.mxu0 0
        %1432 = vmatpush.bf16.msra.mxu0 %v1423
        %1433 = vmatmul.bf16.gmra.mxu0 %v1420
        %v1434 = vpop.f32.mrf.mxu0
        %v1435 = vadd.f32 0.0, %v1434
        %v1436 = vpop.f32.mrf.mxu0
        %1437 = vdwg.mxu0
        %1438 = vrot.lane.b32.xlu0 %v980, 120
        %v1439 = vpop.permute.xlu0 %1438
        %1440 = vrot.lane.b32.xlu0 %v980, 88
        %v1441 = vpop.permute.xlu0 %1440
        %v1443 = vsel %vm983, %v1439, 0
        %v1446 = vsel %vm983, %v1441, 0
        %1448 = vmatpush.bf16.xpose.msra.mxu0 0
        %1449 = vmatpush.bf16.xpose.msra.mxu0 0
        %1450 = vmatpush.bf16.xpose.msra.mxu0 0
        %1451 = vmatpush.bf16.xpose.msra.mxu0 0
        %1452 = vmatpush.bf16.xpose.msra.mxu0 0
        %1453 = vmatpush.bf16.xpose.msra.mxu0 0
        %1454 = vmatpush.bf16.xpose.msra.mxu0 0
        %1455 = vmatpush.bf16.xpose.msra.mxu0 %v1446
        %1456 = vmatmul.bf16.gmra.mxu0 %v1443
        %v1457 = vpop.f32.mrf.mxu0
        %v1458 = vadd.f32 0.0, %v1457
        %v1459 = vpop.f32.mrf.mxu0
        %1460 = vdwg.mxu0
        %1461 = vrot.lane.b32.xlu0 %v1005, 120
        %v1462 = vpop.permute.xlu0 %1461
        %1463 = vrot.lane.b32.xlu0 %v1005, 88
        %v1464 = vpop.permute.xlu0 %1463
        %v1466 = vsel %vm983, %v1462, 0
        %v1469 = vsel %vm983, %v1464, 0
        %1471 = vmatpush.bf16.xpose.msra.mxu0 0
        %1472 = vmatpush.bf16.xpose.msra.mxu0 0
        %1473 = vmatpush.bf16.xpose.msra.mxu0 0
        %1474 = vmatpush.bf16.xpose.msra.mxu0 0
        %1475 = vmatpush.bf16.xpose.msra.mxu0 0
        %1476 = vmatpush.bf16.xpose.msra.mxu0 0
        %1477 = vmatpush.bf16.xpose.msra.mxu0 0
        %1478 = vmatpush.bf16.xpose.msra.mxu0 %v1469
        %1479 = vmatmul.bf16.gmra.mxu0 %v1466
        %v1480 = vpop.f32.mrf.mxu0
        %v1481 = vadd.f32 0.0, %v1480
        %v1482 = vpop.f32.mrf.mxu0
        %1483 = vdwg.mxu0
        %1484 = vrot.lane.b32.xlu0 %v1029, 120
        %v1485 = vpop.permute.xlu0 %1484
        %1486 = vrot.lane.b32.xlu0 %v1029, 88
        %v1487 = vpop.permute.xlu0 %1486
        %v1489 = vsel %vm983, %v1485, 0
        %v1492 = vsel %vm983, %v1487, 0
        %1494 = vmatpush.bf16.xpose.msra.mxu0 0
        %1495 = vmatpush.bf16.xpose.msra.mxu0 0
        %1496 = vmatpush.bf16.xpose.msra.mxu0 0
        %1497 = vmatpush.bf16.xpose.msra.mxu0 0
        %1498 = vmatpush.bf16.xpose.msra.mxu0 0
        %1499 = vmatpush.bf16.xpose.msra.mxu0 0
        %1500 = vmatpush.bf16.xpose.msra.mxu0 0
        %1501 = vmatpush.bf16.xpose.msra.mxu0 %v1492
        %1502 = vmatmul.bf16.gmra.mxu0 %v1489
        %v1503 = vpop.f32.mrf.mxu0
        %v1504 = vadd.f32 0.0, %v1503
        %v1505 = vpop.f32.mrf.mxu0
        %1506 = vdwg.mxu0
        %1507 = vrot.lane.b32.xlu0 %v1053, 120
        %v1508 = vpop.permute.xlu0 %1507
        %1509 = vrot.lane.b32.xlu0 %v1053, 88
        %v1510 = vpop.permute.xlu0 %1509
        %v1512 = vsel %vm983, %v1508, 0
        %v1515 = vsel %vm983, %v1510, 0
        %1517 = vmatpush.bf16.xpose.msra.mxu0 0
        %1518 = vmatpush.bf16.xpose.msra.mxu0 0
        %1519 = vmatpush.bf16.xpose.msra.mxu0 0
        %1520 = vmatpush.bf16.xpose.msra.mxu0 0
        %1521 = vmatpush.bf16.xpose.msra.mxu0 0
        %1522 = vmatpush.bf16.xpose.msra.mxu0 0
        %1523 = vmatpush.bf16.xpose.msra.mxu0 0
        %1524 = vmatpush.bf16.xpose.msra.mxu0 %v1515
        %1525 = vmatmul.bf16.gmra.mxu0 %v1512
        %v1526 = vpop.f32.mrf.mxu0
        %v1527 = vadd.f32 0.0, %v1526
        %v1528 = vpop.f32.mrf.mxu0
        %1529 = vdwg.mxu0
        %1530 = vrot.lane.b32.xlu0 %v1077, 120
        %v1531 = vpop.permute.xlu0 %1530
        %1532 = vrot.lane.b32.xlu0 %v1077, 88
        %v1533 = vpop.permute.xlu0 %1532
        %v1535 = vsel %vm983, %v1531, 0
        %v1538 = vsel %vm983, %v1533, 0
        %1540 = vmatpush.bf16.xpose.msra.mxu0 0
        %1541 = vmatpush.bf16.xpose.msra.mxu0 0
        %1542 = vmatpush.bf16.xpose.msra.mxu0 0
        %1543 = vmatpush.bf16.xpose.msra.mxu0 0
        %1544 = vmatpush.bf16.xpose.msra.mxu0 0
        %1545 = vmatpush.bf16.xpose.msra.mxu0 0
        %1546 = vmatpush.bf16.xpose.msra.mxu0 0
        %1547 = vmatpush.bf16.xpose.msra.mxu0 %v1538
        %1548 = vmatmul.bf16.gmra.mxu0 %v1535
        %v1549 = vpop.f32.mrf.mxu0
        %v1550 = vadd.f32 0.0, %v1549
        %v1551 = vpop.f32.mrf.mxu0
        %1552 = vdwg.mxu0
        %1553 = vrot.lane.b32.xlu0 %v1101, 120
        %v1554 = vpop.permute.xlu0 %1553
        %1555 = vrot.lane.b32.xlu0 %v1101, 88
        %v1556 = vpop.permute.xlu0 %1555
        %v1558 = vsel %vm983, %v1554, 0
        %v1561 = vsel %vm983, %v1556, 0
        %1563 = vmatpush.bf16.xpose.msra.mxu0 0
        %1564 = vmatpush.bf16.xpose.msra.mxu0 0
        %1565 = vmatpush.bf16.xpose.msra.mxu0 0
        %1566 = vmatpush.bf16.xpose.msra.mxu0 0
        %1567 = vmatpush.bf16.xpose.msra.mxu0 0
        %1568 = vmatpush.bf16.xpose.msra.mxu0 0
        %1569 = vmatpush.bf16.xpose.msra.mxu0 0
        %1570 = vmatpush.bf16.xpose.msra.mxu0 %v1561
        %1571 = vmatmul.bf16.gmra.mxu0 %v1558
        %v1572 = vpop.f32.mrf.mxu0
        %v1573 = vadd.f32 0.0, %v1572
        %v1574 = vpop.f32.mrf.mxu0
        %1575 = vdwg.mxu0
        %1576 = vrot.lane.b32.xlu0 %v1125, 120
        %v1577 = vpop.permute.xlu0 %1576
        %1578 = vrot.lane.b32.xlu0 %v1125, 88
        %v1579 = vpop.permute.xlu0 %1578
        %v1581 = vsel %vm983, %v1577, 0
        %v1584 = vsel %vm983, %v1579, 0
        %1586 = vmatpush.bf16.xpose.msra.mxu0 0
        %1587 = vmatpush.bf16.xpose.msra.mxu0 0
        %1588 = vmatpush.bf16.xpose.msra.mxu0 0
        %1589 = vmatpush.bf16.xpose.msra.mxu0 0
        %1590 = vmatpush.bf16.xpose.msra.mxu0 0
        %1591 = vmatpush.bf16.xpose.msra.mxu0 0
        %1592 = vmatpush.bf16.xpose.msra.mxu0 0
        %1593 = vmatpush.bf16.xpose.msra.mxu0 %v1584
        %1594 = vmatmul.bf16.gmra.mxu0 %v1581
        %v1595 = vpop.f32.mrf.mxu0
        %v1596 = vadd.f32 0.0, %v1595
        %v1597 = vpop.f32.mrf.mxu0
        %1598 = vdwg.mxu0
        %1599 = vrot.lane.b32.xlu0 %v1149, 120
        %v1600 = vpop.permute.xlu0 %1599
        %1601 = vrot.lane.b32.xlu0 %v1149, 88
        %v1602 = vpop.permute.xlu0 %1601
        %v1604 = vsel %vm983, %v1600, 0
        %v1607 = vsel %vm983, %v1602, 0
        %1609 = vmatpush.bf16.xpose.msra.mxu0 0
        %1610 = vmatpush.bf16.xpose.msra.mxu0 0
        %1611 = vmatpush.bf16.xpose.msra.mxu0 0
        %1612 = vmatpush.bf16.xpose.msra.mxu0 0
        %1613 = vmatpush.bf16.xpose.msra.mxu0 0
        %1614 = vmatpush.bf16.xpose.msra.mxu0 0
        %1615 = vmatpush.bf16.xpose.msra.mxu0 0
        %1616 = vmatpush.bf16.xpose.msra.mxu0 %v1607
        %1617 = vmatmul.bf16.gmra.mxu0 %v1604
        %v1618 = vpop.f32.mrf.mxu0
        %v1619 = vadd.f32 0.0, %v1618
        %v1620 = vpop.f32.mrf.mxu0
        %1621 = vdwg.mxu0
        %v1622 = vsel %vm1171, %v1458, -inf
        %1623 = vmax.xlane.f32.xlu0 %v1622
        %v1624 = vpop.xlane.xlu0 %1623
        %v1625 = vsel %vm1171, %v1481, -inf
        %1626 = vmax.xlane.f32.xlu0 %v1625
        %v1627 = vpop.xlane.xlu0 %1626
        %v1628 = vsel %vm1171, %v1504, -inf
        %1629 = vmax.xlane.f32.xlu0 %v1628
        %v1630 = vpop.xlane.xlu0 %1629
        %v1631 = vsel %vm1171, %v1527, -inf
        %1632 = vmax.xlane.f32.xlu0 %v1631
        %v1633 = vpop.xlane.xlu0 %1632
        %v1634 = vsel %vm1171, %v1550, -inf
        %1635 = vmax.xlane.f32.xlu0 %v1634
        %v1636 = vpop.xlane.xlu0 %1635
        %v1637 = vsel %vm1171, %v1573, -inf
        %1638 = vmax.xlane.f32.xlu0 %v1637
        %v1639 = vpop.xlane.xlu0 %1638
        %v1640 = vsel %vm1171, %v1596, -inf
        %1641 = vmax.xlane.f32.xlu0 %v1640
        %v1642 = vpop.xlane.xlu0 %1641
        %v1643 = vsel %vm1171, %v1619, -inf
        %1644 = vmax.xlane.f32.xlu0 %v1643
        %v1645 = vpop.xlane.xlu0 %1644
        %v1646 = vsub.f32 %v1458, %v1624
        %v1647 = vsub.f32 %v1481, %v1627
        %v1648 = vsub.f32 %v1504, %v1630
        %v1649 = vsub.f32 %v1527, %v1633
        %v1650 = vsub.f32 %v1550, %v1636
        %v1651 = vsub.f32 %v1573, %v1639
        %v1652 = vsub.f32 %v1596, %v1642
        %v1653 = vsub.f32 %v1619, %v1645
        %v1654 = vmul.f32 %v1646, 1.442695
        %v1655 = vpow.pop %v1654
        %v1656 = vmul.f32 %v1647, 1.442695
        %v1657 = vpow.pop %v1656
        %v1658 = vmul.f32 %v1648, 1.442695
        %v1659 = vpow.pop %v1658
        %v1660 = vmul.f32 %v1649, 1.442695
        %v1661 = vpow.pop %v1660
        %v1662 = vmul.f32 %v1650, 1.442695
        %v1663 = vpow.pop %v1662
        %v1664 = vmul.f32 %v1651, 1.442695
        %v1665 = vpow.pop %v1664
        %v1666 = vmul.f32 %v1652, 1.442695
        %v1667 = vpow.pop %v1666
        %v1668 = vmul.f32 %v1653, 1.442695
        %v1669 = vpow.pop %v1668
        %v1670 = vsel %vm1171, %v1655, 0.0
        %1671 = vadd.xlane.f32.xlu0 %v1670
        %v1672 = vpop.xlane.xlu0 %1671
        %v1673 = vsel %vm1171, %v1657, 0.0
        %1674 = vadd.xlane.f32.xlu0 %v1673
        %v1675 = vpop.xlane.xlu0 %1674
        %v1676 = vsel %vm1171, %v1659, 0.0
        %1677 = vadd.xlane.f32.xlu0 %v1676
        %v1678 = vpop.xlane.xlu0 %1677
        %v1679 = vsel %vm1171, %v1661, 0.0
        %1680 = vadd.xlane.f32.xlu0 %v1679
        %v1681 = vpop.xlane.xlu0 %1680
        %v1682 = vsel %vm1171, %v1663, 0.0
        %1683 = vadd.xlane.f32.xlu0 %v1682
        %v1684 = vpop.xlane.xlu0 %1683
        %v1685 = vsel %vm1171, %v1665, 0.0
        %1686 = vadd.xlane.f32.xlu0 %v1685
        %v1687 = vpop.xlane.xlu0 %1686
        %v1688 = vsel %vm1171, %v1667, 0.0
        %1689 = vadd.xlane.f32.xlu0 %v1688
        %v1690 = vpop.xlane.xlu0 %1689
        %v1691 = vsel %vm1171, %v1669, 0.0
        %1692 = vadd.xlane.f32.xlu0 %v1691
        %v1693 = vpop.xlane.xlu0 %1692
        %v1694 = vrcp.pop %v1672
        %v1695 = vrcp.pop %v1675
        %v1696 = vrcp.pop %v1678
        %v1697 = vrcp.pop %v1681
        %v1698 = vrcp.pop %v1684
        %v1699 = vrcp.pop %v1687
        %v1700 = vrcp.pop %v1690
        %v1701 = vrcp.pop %v1693
        %v1702 = vmul.f32 %v1655, %v1694
        %v1703 = vmul.f32 %v1657, %v1695
        %v1704 = vmul.f32 %v1659, %v1696
        %v1705 = vmul.f32 %v1661, %v1697
        %v1706 = vmul.f32 %v1663, %v1698
        %v1707 = vmul.f32 %v1665, %v1699
        %v1708 = vmul.f32 %v1667, %v1700
        %v1709 = vmul.f32 %v1669, %v1701
        %v1710 = vpack.c.bf16 %v1702, %v1702
        %v1711 = vpack.c.bf16 %v1703, %v1703
        %v1712 = vpack.c.bf16 %v1704, %v1704
        %v1713 = vpack.c.bf16 %v1705, %v1705
        %v1714 = vpack.c.bf16 %v1706, %v1706
        %v1715 = vpack.c.bf16 %v1707, %v1707
        %v1716 = vpack.c.bf16 %v1708, %v1708
        %v1717 = vpack.c.bf16 %v1709, %v1709
        %1718 = vrot.lane.b32.xlu0 %v980, 56
        %v1719 = vpop.permute.xlu0 %1718
        %v1721 = vsel %vm1270, %v1710, 0
        %v1724 = vsel %vm1274, %v1719, 0
        %1726 = vmatpush.bf16.msra.mxu0 0
        %1727 = vmatpush.bf16.msra.mxu0 0
        %1728 = vmatpush.bf16.msra.mxu0 0
        %1729 = vmatpush.bf16.msra.mxu0 0
        %1730 = vmatpush.bf16.msra.mxu0 0
        %1731 = vmatpush.bf16.msra.mxu0 0
        %1732 = vmatpush.bf16.msra.mxu0 0
        %1733 = vmatpush.bf16.msra.mxu0 %v1724
        %1734 = vmatmul.bf16.gmra.mxu0 %v1721
        %v1735 = vpop.f32.mrf.mxu0
        %v1736 = vadd.f32 0.0, %v1735
        %v1737 = vpop.f32.mrf.mxu0
        %1738 = vdwg.mxu0
        %1739 = vrot.lane.b32.xlu0 %v1005, 56
        %v1740 = vpop.permute.xlu0 %1739
        %v1742 = vsel %vm1270, %v1711, 0
        %v1745 = vsel %vm1274, %v1740, 0
        %1747 = vmatpush.bf16.msra.mxu0 0
        %1748 = vmatpush.bf16.msra.mxu0 0
        %1749 = vmatpush.bf16.msra.mxu0 0
        %1750 = vmatpush.bf16.msra.mxu0 0
        %1751 = vmatpush.bf16.msra.mxu0 0
        %1752 = vmatpush.bf16.msra.mxu0 0
        %1753 = vmatpush.bf16.msra.mxu0 0
        %1754 = vmatpush.bf16.msra.mxu0 %v1745
        %1755 = vmatmul.bf16.gmra.mxu0 %v1742
        %v1756 = vpop.f32.mrf.mxu0
        %v1757 = vadd.f32 0.0, %v1756
        %v1758 = vpop.f32.mrf.mxu0
        %1759 = vdwg.mxu0
        %1760 = vrot.lane.b32.xlu0 %v1029, 56
        %v1761 = vpop.permute.xlu0 %1760
        %v1763 = vsel %vm1270, %v1712, 0
        %v1766 = vsel %vm1274, %v1761, 0
        %1768 = vmatpush.bf16.msra.mxu0 0
        %1769 = vmatpush.bf16.msra.mxu0 0
        %1770 = vmatpush.bf16.msra.mxu0 0
        %1771 = vmatpush.bf16.msra.mxu0 0
        %1772 = vmatpush.bf16.msra.mxu0 0
        %1773 = vmatpush.bf16.msra.mxu0 0
        %1774 = vmatpush.bf16.msra.mxu0 0
        %1775 = vmatpush.bf16.msra.mxu0 %v1766
        %1776 = vmatmul.bf16.gmra.mxu0 %v1763
        %v1777 = vpop.f32.mrf.mxu0
        %v1778 = vadd.f32 0.0, %v1777
        %v1779 = vpop.f32.mrf.mxu0
        %1780 = vdwg.mxu0
        %1781 = vrot.lane.b32.xlu0 %v1053, 56
        %v1782 = vpop.permute.xlu0 %1781
        %v1784 = vsel %vm1270, %v1713, 0
        %v1787 = vsel %vm1274, %v1782, 0
        %1789 = vmatpush.bf16.msra.mxu0 0
        %1790 = vmatpush.bf16.msra.mxu0 0
        %1791 = vmatpush.bf16.msra.mxu0 0
        %1792 = vmatpush.bf16.msra.mxu0 0
        %1793 = vmatpush.bf16.msra.mxu0 0
        %1794 = vmatpush.bf16.msra.mxu0 0
        %1795 = vmatpush.bf16.msra.mxu0 0
        %1796 = vmatpush.bf16.msra.mxu0 %v1787
        %1797 = vmatmul.bf16.gmra.mxu0 %v1784
        %v1798 = vpop.f32.mrf.mxu0
        %v1799 = vadd.f32 0.0, %v1798
        %v1800 = vpop.f32.mrf.mxu0
        %1801 = vdwg.mxu0
        %1802 = vrot.lane.b32.xlu0 %v1077, 56
        %v1803 = vpop.permute.xlu0 %1802
        %v1805 = vsel %vm1270, %v1714, 0
        %v1808 = vsel %vm1274, %v1803, 0
        %1810 = vmatpush.bf16.msra.mxu0 0
        %1811 = vmatpush.bf16.msra.mxu0 0
        %1812 = vmatpush.bf16.msra.mxu0 0
        %1813 = vmatpush.bf16.msra.mxu0 0
        %1814 = vmatpush.bf16.msra.mxu0 0
        %1815 = vmatpush.bf16.msra.mxu0 0
        %1816 = vmatpush.bf16.msra.mxu0 0
        %1817 = vmatpush.bf16.msra.mxu0 %v1808
        %1818 = vmatmul.bf16.gmra.mxu0 %v1805
        %v1819 = vpop.f32.mrf.mxu0
        %v1820 = vadd.f32 0.0, %v1819
        %v1821 = vpop.f32.mrf.mxu0
        %1822 = vdwg.mxu0
        %1823 = vrot.lane.b32.xlu0 %v1101, 56
        %v1824 = vpop.permute.xlu0 %1823
        %v1826 = vsel %vm1270, %v1715, 0
        %v1829 = vsel %vm1274, %v1824, 0
        %1831 = vmatpush.bf16.msra.mxu0 0
        %1832 = vmatpush.bf16.msra.mxu0 0
        %1833 = vmatpush.bf16.msra.mxu0 0
        %1834 = vmatpush.bf16.msra.mxu0 0
        %1835 = vmatpush.bf16.msra.mxu0 0
        %1836 = vmatpush.bf16.msra.mxu0 0
        %1837 = vmatpush.bf16.msra.mxu0 0
        %1838 = vmatpush.bf16.msra.mxu0 %v1829
        %1839 = vmatmul.bf16.gmra.mxu0 %v1826
        %v1840 = vpop.f32.mrf.mxu0
        %v1841 = vadd.f32 0.0, %v1840
        %v1842 = vpop.f32.mrf.mxu0
        %1843 = vdwg.mxu0
        %1844 = vrot.lane.b32.xlu0 %v1125, 56
        %v1845 = vpop.permute.xlu0 %1844
        %v1847 = vsel %vm1270, %v1716, 0
        %v1850 = vsel %vm1274, %v1845, 0
        %1852 = vmatpush.bf16.msra.mxu0 0
        %1853 = vmatpush.bf16.msra.mxu0 0
        %1854 = vmatpush.bf16.msra.mxu0 0
        %1855 = vmatpush.bf16.msra.mxu0 0
        %1856 = vmatpush.bf16.msra.mxu0 0
        %1857 = vmatpush.bf16.msra.mxu0 0
        %1858 = vmatpush.bf16.msra.mxu0 0
        %1859 = vmatpush.bf16.msra.mxu0 %v1850
        %1860 = vmatmul.bf16.gmra.mxu0 %v1847
        %v1861 = vpop.f32.mrf.mxu0
        %v1862 = vadd.f32 0.0, %v1861
        %v1863 = vpop.f32.mrf.mxu0
        %1864 = vdwg.mxu0
        %1865 = vrot.lane.b32.xlu0 %v1149, 56
        %v1866 = vpop.permute.xlu0 %1865
        %v1868 = vsel %vm1270, %v1717, 0
        %v1871 = vsel %vm1274, %v1866, 0
        %1873 = vmatpush.bf16.msra.mxu0 0
        %1874 = vmatpush.bf16.msra.mxu0 0
        %1875 = vmatpush.bf16.msra.mxu0 0
        %1876 = vmatpush.bf16.msra.mxu0 0
        %1877 = vmatpush.bf16.msra.mxu0 0
        %1878 = vmatpush.bf16.msra.mxu0 0
        %1879 = vmatpush.bf16.msra.mxu0 0
        %1880 = vmatpush.bf16.msra.mxu0 %v1871
        %1881 = vmatmul.bf16.gmra.mxu0 %v1868
        %v1882 = vpop.f32.mrf.mxu0
        %v1883 = vadd.f32 0.0, %v1882
        %v1884 = vpop.f32.mrf.mxu0
        %1885 = vdwg.mxu0
        %1886 = vrot.lane.b32.xlu0 %v980, 112
        %v1887 = vpop.permute.xlu0 %1886
        %1888 = vrot.lane.b32.xlu0 %v980, 80
        %v1889 = vpop.permute.xlu0 %1888
        %v1891 = vsel %vm983, %v1887, 0
        %v1894 = vsel %vm983, %v1889, 0
        %1896 = vmatpush.bf16.xpose.msra.mxu0 0
        %1897 = vmatpush.bf16.xpose.msra.mxu0 0
        %1898 = vmatpush.bf16.xpose.msra.mxu0 0
        %1899 = vmatpush.bf16.xpose.msra.mxu0 0
        %1900 = vmatpush.bf16.xpose.msra.mxu0 0
        %1901 = vmatpush.bf16.xpose.msra.mxu0 0
        %1902 = vmatpush.bf16.xpose.msra.mxu0 0
        %1903 = vmatpush.bf16.xpose.msra.mxu0 %v1894
        %1904 = vmatmul.bf16.gmra.mxu0 %v1891
        %v1905 = vpop.f32.mrf.mxu0
        %v1906 = vadd.f32 0.0, %v1905
        %v1907 = vpop.f32.mrf.mxu0
        %1908 = vdwg.mxu0
        %1909 = vrot.lane.b32.xlu0 %v1005, 112
        %v1910 = vpop.permute.xlu0 %1909
        %1911 = vrot.lane.b32.xlu0 %v1005, 80
        %v1912 = vpop.permute.xlu0 %1911
        %v1914 = vsel %vm983, %v1910, 0
        %v1917 = vsel %vm983, %v1912, 0
        %1919 = vmatpush.bf16.xpose.msra.mxu0 0
        %1920 = vmatpush.bf16.xpose.msra.mxu0 0
        %1921 = vmatpush.bf16.xpose.msra.mxu0 0
        %1922 = vmatpush.bf16.xpose.msra.mxu0 0
        %1923 = vmatpush.bf16.xpose.msra.mxu0 0
        %1924 = vmatpush.bf16.xpose.msra.mxu0 0
        %1925 = vmatpush.bf16.xpose.msra.mxu0 0
        %1926 = vmatpush.bf16.xpose.msra.mxu0 %v1917
        %1927 = vmatmul.bf16.gmra.mxu0 %v1914
        %v1928 = vpop.f32.mrf.mxu0
        %v1929 = vadd.f32 0.0, %v1928
        %v1930 = vpop.f32.mrf.mxu0
        %1931 = vdwg.mxu0
        %1932 = vrot.lane.b32.xlu0 %v1029, 112
        %v1933 = vpop.permute.xlu0 %1932
        %1934 = vrot.lane.b32.xlu0 %v1029, 80
        %v1935 = vpop.permute.xlu0 %1934
        %v1937 = vsel %vm983, %v1933, 0
        %v1940 = vsel %vm983, %v1935, 0
        %1942 = vmatpush.bf16.xpose.msra.mxu0 0
        %1943 = vmatpush.bf16.xpose.msra.mxu0 0
        %1944 = vmatpush.bf16.xpose.msra.mxu0 0
        %1945 = vmatpush.bf16.xpose.msra.mxu0 0
        %1946 = vmatpush.bf16.xpose.msra.mxu0 0
        %1947 = vmatpush.bf16.xpose.msra.mxu0 0
        %1948 = vmatpush.bf16.xpose.msra.mxu0 0
        %1949 = vmatpush.bf16.xpose.msra.mxu0 %v1940
        %1950 = vmatmul.bf16.gmra.mxu0 %v1937
        %v1951 = vpop.f32.mrf.mxu0
        %v1952 = vadd.f32 0.0, %v1951
        %v1953 = vpop.f32.mrf.mxu0
        %1954 = vdwg.mxu0
        %1955 = vrot.lane.b32.xlu0 %v1053, 112
        %v1956 = vpop.permute.xlu0 %1955
        %1957 = vrot.lane.b32.xlu0 %v1053, 80
        %v1958 = vpop.permute.xlu0 %1957
        %v1960 = vsel %vm983, %v1956, 0
        %v1963 = vsel %vm983, %v1958, 0
        %1965 = vmatpush.bf16.xpose.msra.mxu0 0
        %1966 = vmatpush.bf16.xpose.msra.mxu0 0
        %1967 = vmatpush.bf16.xpose.msra.mxu0 0
        %1968 = vmatpush.bf16.xpose.msra.mxu0 0
        %1969 = vmatpush.bf16.xpose.msra.mxu0 0
        %1970 = vmatpush.bf16.xpose.msra.mxu0 0
        %1971 = vmatpush.bf16.xpose.msra.mxu0 0
        %1972 = vmatpush.bf16.xpose.msra.mxu0 %v1963
        %1973 = vmatmul.bf16.gmra.mxu0 %v1960
        %v1974 = vpop.f32.mrf.mxu0
        %v1975 = vadd.f32 0.0, %v1974
        %v1976 = vpop.f32.mrf.mxu0
        %1977 = vdwg.mxu0
        %1978 = vrot.lane.b32.xlu0 %v1077, 112
        %v1979 = vpop.permute.xlu0 %1978
        %1980 = vrot.lane.b32.xlu0 %v1077, 80
        %v1981 = vpop.permute.xlu0 %1980
        %v1983 = vsel %vm983, %v1979, 0
        %v1986 = vsel %vm983, %v1981, 0
        %1988 = vmatpush.bf16.xpose.msra.mxu0 0
        %1989 = vmatpush.bf16.xpose.msra.mxu0 0
        %1990 = vmatpush.bf16.xpose.msra.mxu0 0
        %1991 = vmatpush.bf16.xpose.msra.mxu0 0
        %1992 = vmatpush.bf16.xpose.msra.mxu0 0
        %1993 = vmatpush.bf16.xpose.msra.mxu0 0
        %1994 = vmatpush.bf16.xpose.msra.mxu0 0
        %1995 = vmatpush.bf16.xpose.msra.mxu0 %v1986
        %1996 = vmatmul.bf16.gmra.mxu0 %v1983
        %v1997 = vpop.f32.mrf.mxu0
        %v1998 = vadd.f32 0.0, %v1997
        %v1999 = vpop.f32.mrf.mxu0
        %2000 = vdwg.mxu0
        %2001 = vrot.lane.b32.xlu0 %v1101, 112
        %v2002 = vpop.permute.xlu0 %2001
        %2003 = vrot.lane.b32.xlu0 %v1101, 80
        %v2004 = vpop.permute.xlu0 %2003
        %v2006 = vsel %vm983, %v2002, 0
        %v2009 = vsel %vm983, %v2004, 0
        %2011 = vmatpush.bf16.xpose.msra.mxu0 0
        %2012 = vmatpush.bf16.xpose.msra.mxu0 0
        %2013 = vmatpush.bf16.xpose.msra.mxu0 0
        %2014 = vmatpush.bf16.xpose.msra.mxu0 0
        %2015 = vmatpush.bf16.xpose.msra.mxu0 0
        %2016 = vmatpush.bf16.xpose.msra.mxu0 0
        %2017 = vmatpush.bf16.xpose.msra.mxu0 0
        %2018 = vmatpush.bf16.xpose.msra.mxu0 %v2009
        %2019 = vmatmul.bf16.gmra.mxu0 %v2006
        %v2020 = vpop.f32.mrf.mxu0
        %v2021 = vadd.f32 0.0, %v2020
        %v2022 = vpop.f32.mrf.mxu0
        %2023 = vdwg.mxu0
        %2024 = vrot.lane.b32.xlu0 %v1125, 112
        %v2025 = vpop.permute.xlu0 %2024
        %2026 = vrot.lane.b32.xlu0 %v1125, 80
        %v2027 = vpop.permute.xlu0 %2026
        %v2029 = vsel %vm983, %v2025, 0
        %v2032 = vsel %vm983, %v2027, 0
        %2034 = vmatpush.bf16.xpose.msra.mxu0 0
        %2035 = vmatpush.bf16.xpose.msra.mxu0 0
        %2036 = vmatpush.bf16.xpose.msra.mxu0 0
        %2037 = vmatpush.bf16.xpose.msra.mxu0 0
        %2038 = vmatpush.bf16.xpose.msra.mxu0 0
        %2039 = vmatpush.bf16.xpose.msra.mxu0 0
        %2040 = vmatpush.bf16.xpose.msra.mxu0 0
        %2041 = vmatpush.bf16.xpose.msra.mxu0 %v2032
        %2042 = vmatmul.bf16.gmra.mxu0 %v2029
        %v2043 = vpop.f32.mrf.mxu0
        %v2044 = vadd.f32 0.0, %v2043
        %v2045 = vpop.f32.mrf.mxu0
        %2046 = vdwg.mxu0
        %2047 = vrot.lane.b32.xlu0 %v1149, 112
        %v2048 = vpop.permute.xlu0 %2047
        %2049 = vrot.lane.b32.xlu0 %v1149, 80
        %v2050 = vpop.permute.xlu0 %2049
        %v2052 = vsel %vm983, %v2048, 0
        %v2055 = vsel %vm983, %v2050, 0
        %2057 = vmatpush.bf16.xpose.msra.mxu0 0
        %2058 = vmatpush.bf16.xpose.msra.mxu0 0
        %2059 = vmatpush.bf16.xpose.msra.mxu0 0
        %2060 = vmatpush.bf16.xpose.msra.mxu0 0
        %2061 = vmatpush.bf16.xpose.msra.mxu0 0
        %2062 = vmatpush.bf16.xpose.msra.mxu0 0
        %2063 = vmatpush.bf16.xpose.msra.mxu0 0
        %2064 = vmatpush.bf16.xpose.msra.mxu0 %v2055
        %2065 = vmatmul.bf16.gmra.mxu0 %v2052
        %v2066 = vpop.f32.mrf.mxu0
        %v2067 = vadd.f32 0.0, %v2066
        %v2068 = vpop.f32.mrf.mxu0
        %2069 = vdwg.mxu0
        %v2070 = vsel %vm1171, %v1906, -inf
        %2071 = vmax.xlane.f32.xlu0 %v2070
        %v2072 = vpop.xlane.xlu0 %2071
        %v2073 = vsel %vm1171, %v1929, -inf
        %2074 = vmax.xlane.f32.xlu0 %v2073
        %v2075 = vpop.xlane.xlu0 %2074
        %v2076 = vsel %vm1171, %v1952, -inf
        %2077 = vmax.xlane.f32.xlu0 %v2076
        %v2078 = vpop.xlane.xlu0 %2077
        %v2079 = vsel %vm1171, %v1975, -inf
        %2080 = vmax.xlane.f32.xlu0 %v2079
        %v2081 = vpop.xlane.xlu0 %2080
        %v2082 = vsel %vm1171, %v1998, -inf
        %2083 = vmax.xlane.f32.xlu0 %v2082
        %v2084 = vpop.xlane.xlu0 %2083
        %v2085 = vsel %vm1171, %v2021, -inf
        %2086 = vmax.xlane.f32.xlu0 %v2085
        %v2087 = vpop.xlane.xlu0 %2086
        %v2088 = vsel %vm1171, %v2044, -inf
        %2089 = vmax.xlane.f32.xlu0 %v2088
        %v2090 = vpop.xlane.xlu0 %2089
        %v2091 = vsel %vm1171, %v2067, -inf
        %2092 = vmax.xlane.f32.xlu0 %v2091
        %v2093 = vpop.xlane.xlu0 %2092
        %v2094 = vsub.f32 %v1906, %v2072
        %v2095 = vsub.f32 %v1929, %v2075
        %v2096 = vsub.f32 %v1952, %v2078
        %v2097 = vsub.f32 %v1975, %v2081
        %v2098 = vsub.f32 %v1998, %v2084
        %v2099 = vsub.f32 %v2021, %v2087
        %v2100 = vsub.f32 %v2044, %v2090
        %v2101 = vsub.f32 %v2067, %v2093
        %v2102 = vmul.f32 %v2094, 1.442695
        %v2103 = vpow.pop %v2102
        %v2104 = vmul.f32 %v2095, 1.442695
        %v2105 = vpow.pop %v2104
        %v2106 = vmul.f32 %v2096, 1.442695
        %v2107 = vpow.pop %v2106
        %v2108 = vmul.f32 %v2097, 1.442695
        %v2109 = vpow.pop %v2108
        %v2110 = vmul.f32 %v2098, 1.442695
        %v2111 = vpow.pop %v2110
        %v2112 = vmul.f32 %v2099, 1.442695
        %v2113 = vpow.pop %v2112
        %v2114 = vmul.f32 %v2100, 1.442695
        %v2115 = vpow.pop %v2114
        %v2116 = vmul.f32 %v2101, 1.442695
        %v2117 = vpow.pop %v2116
        %v2118 = vsel %vm1171, %v2103, 0.0
        %2119 = vadd.xlane.f32.xlu0 %v2118
        %v2120 = vpop.xlane.xlu0 %2119
        %v2121 = vsel %vm1171, %v2105, 0.0
        %2122 = vadd.xlane.f32.xlu0 %v2121
        %v2123 = vpop.xlane.xlu0 %2122
        %v2124 = vsel %vm1171, %v2107, 0.0
        %2125 = vadd.xlane.f32.xlu0 %v2124
        %v2126 = vpop.xlane.xlu0 %2125
        %v2127 = vsel %vm1171, %v2109, 0.0
        %2128 = vadd.xlane.f32.xlu0 %v2127
        %v2129 = vpop.xlane.xlu0 %2128
        %v2130 = vsel %vm1171, %v2111, 0.0
        %2131 = vadd.xlane.f32.xlu0 %v2130
        %v2132 = vpop.xlane.xlu0 %2131
        %v2133 = vsel %vm1171, %v2113, 0.0
        %2134 = vadd.xlane.f32.xlu0 %v2133
        %v2135 = vpop.xlane.xlu0 %2134
        %v2136 = vsel %vm1171, %v2115, 0.0
        %2137 = vadd.xlane.f32.xlu0 %v2136
        %v2138 = vpop.xlane.xlu0 %2137
        %v2139 = vsel %vm1171, %v2117, 0.0
        %2140 = vadd.xlane.f32.xlu0 %v2139
        %v2141 = vpop.xlane.xlu0 %2140
        %v2142 = vrcp.pop %v2120
        %v2143 = vrcp.pop %v2123
        %v2144 = vrcp.pop %v2126
        %v2145 = vrcp.pop %v2129
        %v2146 = vrcp.pop %v2132
        %v2147 = vrcp.pop %v2135
        %v2148 = vrcp.pop %v2138
        %v2149 = vrcp.pop %v2141
        %v2150 = vmul.f32 %v2103, %v2142
        %v2151 = vmul.f32 %v2105, %v2143
        %v2152 = vmul.f32 %v2107, %v2144
        %v2153 = vmul.f32 %v2109, %v2145
        %v2154 = vmul.f32 %v2111, %v2146
        %v2155 = vmul.f32 %v2113, %v2147
        %v2156 = vmul.f32 %v2115, %v2148
        %v2157 = vmul.f32 %v2117, %v2149
        %v2158 = vpack.c.bf16 %v2150, %v2150
        %v2159 = vpack.c.bf16 %v2151, %v2151
        %v2160 = vpack.c.bf16 %v2152, %v2152
        %v2161 = vpack.c.bf16 %v2153, %v2153
        %v2162 = vpack.c.bf16 %v2154, %v2154
        %v2163 = vpack.c.bf16 %v2155, %v2155
        %v2164 = vpack.c.bf16 %v2156, %v2156
        %v2165 = vpack.c.bf16 %v2157, %v2157
        %2166 = vrot.lane.b32.xlu0 %v980, 48
        %v2167 = vpop.permute.xlu0 %2166
        %v2169 = vsel %vm1270, %v2158, 0
        %v2172 = vsel %vm1274, %v2167, 0
        %2174 = vmatpush.bf16.msra.mxu0 0
        %2175 = vmatpush.bf16.msra.mxu0 0
        %2176 = vmatpush.bf16.msra.mxu0 0
        %2177 = vmatpush.bf16.msra.mxu0 0
        %2178 = vmatpush.bf16.msra.mxu0 0
        %2179 = vmatpush.bf16.msra.mxu0 0
        %2180 = vmatpush.bf16.msra.mxu0 0
        %2181 = vmatpush.bf16.msra.mxu0 %v2172
        %2182 = vmatmul.bf16.gmra.mxu0 %v2169
        %v2183 = vpop.f32.mrf.mxu0
        %v2184 = vadd.f32 0.0, %v2183
        %v2185 = vpop.f32.mrf.mxu0
        %2186 = vdwg.mxu0
        %2187 = vrot.lane.b32.xlu0 %v1005, 48
        %v2188 = vpop.permute.xlu0 %2187
        %v2190 = vsel %vm1270, %v2159, 0
        %v2193 = vsel %vm1274, %v2188, 0
        %2195 = vmatpush.bf16.msra.mxu0 0
        %2196 = vmatpush.bf16.msra.mxu0 0
        %2197 = vmatpush.bf16.msra.mxu0 0
        %2198 = vmatpush.bf16.msra.mxu0 0
        %2199 = vmatpush.bf16.msra.mxu0 0
        %2200 = vmatpush.bf16.msra.mxu0 0
        %2201 = vmatpush.bf16.msra.mxu0 0
        %2202 = vmatpush.bf16.msra.mxu0 %v2193
        %2203 = vmatmul.bf16.gmra.mxu0 %v2190
        %v2204 = vpop.f32.mrf.mxu0
        %v2205 = vadd.f32 0.0, %v2204
        %v2206 = vpop.f32.mrf.mxu0
        %2207 = vdwg.mxu0
        %2208 = vrot.lane.b32.xlu0 %v1029, 48
        %v2209 = vpop.permute.xlu0 %2208
        %v2211 = vsel %vm1270, %v2160, 0
        %v2214 = vsel %vm1274, %v2209, 0
        %2216 = vmatpush.bf16.msra.mxu0 0
        %2217 = vmatpush.bf16.msra.mxu0 0
        %2218 = vmatpush.bf16.msra.mxu0 0
        %2219 = vmatpush.bf16.msra.mxu0 0
        %2220 = vmatpush.bf16.msra.mxu0 0
        %2221 = vmatpush.bf16.msra.mxu0 0
        %2222 = vmatpush.bf16.msra.mxu0 0
        %2223 = vmatpush.bf16.msra.mxu0 %v2214
        %2224 = vmatmul.bf16.gmra.mxu0 %v2211
        %v2225 = vpop.f32.mrf.mxu0
        %v2226 = vadd.f32 0.0, %v2225
        %v2227 = vpop.f32.mrf.mxu0
        %2228 = vdwg.mxu0
        %2229 = vrot.lane.b32.xlu0 %v1053, 48
        %v2230 = vpop.permute.xlu0 %2229
        %v2232 = vsel %vm1270, %v2161, 0
        %v2235 = vsel %vm1274, %v2230, 0
        %2237 = vmatpush.bf16.msra.mxu0 0
        %2238 = vmatpush.bf16.msra.mxu0 0
        %2239 = vmatpush.bf16.msra.mxu0 0
        %2240 = vmatpush.bf16.msra.mxu0 0
        %2241 = vmatpush.bf16.msra.mxu0 0
        %2242 = vmatpush.bf16.msra.mxu0 0
        %2243 = vmatpush.bf16.msra.mxu0 0
        %2244 = vmatpush.bf16.msra.mxu0 %v2235
        %2245 = vmatmul.bf16.gmra.mxu0 %v2232
        %v2246 = vpop.f32.mrf.mxu0
        %v2247 = vadd.f32 0.0, %v2246
        %v2248 = vpop.f32.mrf.mxu0
        %2249 = vdwg.mxu0
        %2250 = vrot.lane.b32.xlu0 %v1077, 48
        %v2251 = vpop.permute.xlu0 %2250
        %v2253 = vsel %vm1270, %v2162, 0
        %v2256 = vsel %vm1274, %v2251, 0
        %2258 = vmatpush.bf16.msra.mxu0 0
        %2259 = vmatpush.bf16.msra.mxu0 0
        %2260 = vmatpush.bf16.msra.mxu0 0
        %2261 = vmatpush.bf16.msra.mxu0 0
        %2262 = vmatpush.bf16.msra.mxu0 0
        %2263 = vmatpush.bf16.msra.mxu0 0
        %2264 = vmatpush.bf16.msra.mxu0 0
        %2265 = vmatpush.bf16.msra.mxu0 %v2256
        %2266 = vmatmul.bf16.gmra.mxu0 %v2253
        %v2267 = vpop.f32.mrf.mxu0
        %v2268 = vadd.f32 0.0, %v2267
        %v2269 = vpop.f32.mrf.mxu0
        %2270 = vdwg.mxu0
        %2271 = vrot.lane.b32.xlu0 %v1101, 48
        %v2272 = vpop.permute.xlu0 %2271
        %v2274 = vsel %vm1270, %v2163, 0
        %v2277 = vsel %vm1274, %v2272, 0
        %2279 = vmatpush.bf16.msra.mxu0 0
        %2280 = vmatpush.bf16.msra.mxu0 0
        %2281 = vmatpush.bf16.msra.mxu0 0
        %2282 = vmatpush.bf16.msra.mxu0 0
        %2283 = vmatpush.bf16.msra.mxu0 0
        %2284 = vmatpush.bf16.msra.mxu0 0
        %2285 = vmatpush.bf16.msra.mxu0 0
        %2286 = vmatpush.bf16.msra.mxu0 %v2277
        %2287 = vmatmul.bf16.gmra.mxu0 %v2274
        %v2288 = vpop.f32.mrf.mxu0
        %v2289 = vadd.f32 0.0, %v2288
        %v2290 = vpop.f32.mrf.mxu0
        %2291 = vdwg.mxu0
        %2292 = vrot.lane.b32.xlu0 %v1125, 48
        %v2293 = vpop.permute.xlu0 %2292
        %v2295 = vsel %vm1270, %v2164, 0
        %v2298 = vsel %vm1274, %v2293, 0
        %2300 = vmatpush.bf16.msra.mxu0 0
        %2301 = vmatpush.bf16.msra.mxu0 0
        %2302 = vmatpush.bf16.msra.mxu0 0
        %2303 = vmatpush.bf16.msra.mxu0 0
        %2304 = vmatpush.bf16.msra.mxu0 0
        %2305 = vmatpush.bf16.msra.mxu0 0
        %2306 = vmatpush.bf16.msra.mxu0 0
        %2307 = vmatpush.bf16.msra.mxu0 %v2298
        %2308 = vmatmul.bf16.gmra.mxu0 %v2295
        %v2309 = vpop.f32.mrf.mxu0
        %v2310 = vadd.f32 0.0, %v2309
        %v2311 = vpop.f32.mrf.mxu0
        %2312 = vdwg.mxu0
        %2313 = vrot.lane.b32.xlu0 %v1149, 48
        %v2314 = vpop.permute.xlu0 %2313
        %v2316 = vsel %vm1270, %v2165, 0
        %v2319 = vsel %vm1274, %v2314, 0
        %2321 = vmatpush.bf16.msra.mxu0 0
        %2322 = vmatpush.bf16.msra.mxu0 0
        %2323 = vmatpush.bf16.msra.mxu0 0
        %2324 = vmatpush.bf16.msra.mxu0 0
        %2325 = vmatpush.bf16.msra.mxu0 0
        %2326 = vmatpush.bf16.msra.mxu0 0
        %2327 = vmatpush.bf16.msra.mxu0 0
        %2328 = vmatpush.bf16.msra.mxu0 %v2319
        %2329 = vmatmul.bf16.gmra.mxu0 %v2316
        %v2330 = vpop.f32.mrf.mxu0
        %v2331 = vadd.f32 0.0, %v2330
        %v2332 = vpop.f32.mrf.mxu0
        %2333 = vdwg.mxu0
        %2334 = vrot.lane.b32.xlu0 %v980, 104
        %v2335 = vpop.permute.xlu0 %2334
        %2336 = vrot.lane.b32.xlu0 %v980, 72
        %v2337 = vpop.permute.xlu0 %2336
        %v2339 = vsel %vm983, %v2335, 0
        %v2342 = vsel %vm983, %v2337, 0
        %2344 = vmatpush.bf16.xpose.msra.mxu0 0
        %2345 = vmatpush.bf16.xpose.msra.mxu0 0
        %2346 = vmatpush.bf16.xpose.msra.mxu0 0
        %2347 = vmatpush.bf16.xpose.msra.mxu0 0
        %2348 = vmatpush.bf16.xpose.msra.mxu0 0
        %2349 = vmatpush.bf16.xpose.msra.mxu0 0
        %2350 = vmatpush.bf16.xpose.msra.mxu0 0
        %2351 = vmatpush.bf16.xpose.msra.mxu0 %v2342
        %2352 = vmatmul.bf16.gmra.mxu0 %v2339
        %v2353 = vpop.f32.mrf.mxu0
        %v2354 = vadd.f32 0.0, %v2353
        %v2355 = vpop.f32.mrf.mxu0
        %2356 = vdwg.mxu0
        %2357 = vrot.lane.b32.xlu0 %v1005, 104
        %v2358 = vpop.permute.xlu0 %2357
        %2359 = vrot.lane.b32.xlu0 %v1005, 72
        %v2360 = vpop.permute.xlu0 %2359
        %v2362 = vsel %vm983, %v2358, 0
        %v2365 = vsel %vm983, %v2360, 0
        %2367 = vmatpush.bf16.xpose.msra.mxu0 0
        %2368 = vmatpush.bf16.xpose.msra.mxu0 0
        %2369 = vmatpush.bf16.xpose.msra.mxu0 0
        %2370 = vmatpush.bf16.xpose.msra.mxu0 0
        %2371 = vmatpush.bf16.xpose.msra.mxu0 0
        %2372 = vmatpush.bf16.xpose.msra.mxu0 0
        %2373 = vmatpush.bf16.xpose.msra.mxu0 0
        %2374 = vmatpush.bf16.xpose.msra.mxu0 %v2365
        %2375 = vmatmul.bf16.gmra.mxu0 %v2362
        %v2376 = vpop.f32.mrf.mxu0
        %v2377 = vadd.f32 0.0, %v2376
        %v2378 = vpop.f32.mrf.mxu0
        %2379 = vdwg.mxu0
        %2380 = vrot.lane.b32.xlu0 %v1029, 104
        %v2381 = vpop.permute.xlu0 %2380
        %2382 = vrot.lane.b32.xlu0 %v1029, 72
        %v2383 = vpop.permute.xlu0 %2382
        %v2385 = vsel %vm983, %v2381, 0
        %v2388 = vsel %vm983, %v2383, 0
        %2390 = vmatpush.bf16.xpose.msra.mxu0 0
        %2391 = vmatpush.bf16.xpose.msra.mxu0 0
        %2392 = vmatpush.bf16.xpose.msra.mxu0 0
        %2393 = vmatpush.bf16.xpose.msra.mxu0 0
        %2394 = vmatpush.bf16.xpose.msra.mxu0 0
        %2395 = vmatpush.bf16.xpose.msra.mxu0 0
        %2396 = vmatpush.bf16.xpose.msra.mxu0 0
        %2397 = vmatpush.bf16.xpose.msra.mxu0 %v2388
        %2398 = vmatmul.bf16.gmra.mxu0 %v2385
        %v2399 = vpop.f32.mrf.mxu0
        %v2400 = vadd.f32 0.0, %v2399
        %v2401 = vpop.f32.mrf.mxu0
        %2402 = vdwg.mxu0
        %2403 = vrot.lane.b32.xlu0 %v1053, 104
        %v2404 = vpop.permute.xlu0 %2403
        %2405 = vrot.lane.b32.xlu0 %v1053, 72
        %v2406 = vpop.permute.xlu0 %2405
        %v2408 = vsel %vm983, %v2404, 0
        %v2411 = vsel %vm983, %v2406, 0
        %2413 = vmatpush.bf16.xpose.msra.mxu0 0
        %2414 = vmatpush.bf16.xpose.msra.mxu0 0
        %2415 = vmatpush.bf16.xpose.msra.mxu0 0
        %2416 = vmatpush.bf16.xpose.msra.mxu0 0
        %2417 = vmatpush.bf16.xpose.msra.mxu0 0
        %2418 = vmatpush.bf16.xpose.msra.mxu0 0
        %2419 = vmatpush.bf16.xpose.msra.mxu0 0
        %2420 = vmatpush.bf16.xpose.msra.mxu0 %v2411
        %2421 = vmatmul.bf16.gmra.mxu0 %v2408
        %v2422 = vpop.f32.mrf.mxu0
        %v2423 = vadd.f32 0.0, %v2422
        %v2424 = vpop.f32.mrf.mxu0
        %2425 = vdwg.mxu0
        %2426 = vrot.lane.b32.xlu0 %v1077, 104
        %v2427 = vpop.permute.xlu0 %2426
        %2428 = vrot.lane.b32.xlu0 %v1077, 72
        %v2429 = vpop.permute.xlu0 %2428
        %v2431 = vsel %vm983, %v2427, 0
        %v2434 = vsel %vm983, %v2429, 0
        %2436 = vmatpush.bf16.xpose.msra.mxu0 0
        %2437 = vmatpush.bf16.xpose.msra.mxu0 0
        %2438 = vmatpush.bf16.xpose.msra.mxu0 0
        %2439 = vmatpush.bf16.xpose.msra.mxu0 0
        %2440 = vmatpush.bf16.xpose.msra.mxu0 0
        %2441 = vmatpush.bf16.xpose.msra.mxu0 0
        %2442 = vmatpush.bf16.xpose.msra.mxu0 0
        %2443 = vmatpush.bf16.xpose.msra.mxu0 %v2434
        %2444 = vmatmul.bf16.gmra.mxu0 %v2431
        %v2445 = vpop.f32.mrf.mxu0
        %v2446 = vadd.f32 0.0, %v2445
        %v2447 = vpop.f32.mrf.mxu0
        %2448 = vdwg.mxu0
        %2449 = vrot.lane.b32.xlu0 %v1101, 104
        %v2450 = vpop.permute.xlu0 %2449
        %2451 = vrot.lane.b32.xlu0 %v1101, 72
        %v2452 = vpop.permute.xlu0 %2451
        %v2454 = vsel %vm983, %v2450, 0
        %v2457 = vsel %vm983, %v2452, 0
        %2459 = vmatpush.bf16.xpose.msra.mxu0 0
        %2460 = vmatpush.bf16.xpose.msra.mxu0 0
        %2461 = vmatpush.bf16.xpose.msra.mxu0 0
        %2462 = vmatpush.bf16.xpose.msra.mxu0 0
        %2463 = vmatpush.bf16.xpose.msra.mxu0 0
        %2464 = vmatpush.bf16.xpose.msra.mxu0 0
        %2465 = vmatpush.bf16.xpose.msra.mxu0 0
        %2466 = vmatpush.bf16.xpose.msra.mxu0 %v2457
        %2467 = vmatmul.bf16.gmra.mxu0 %v2454
        %v2468 = vpop.f32.mrf.mxu0
        %v2469 = vadd.f32 0.0, %v2468
        %v2470 = vpop.f32.mrf.mxu0
        %2471 = vdwg.mxu0
        %2472 = vrot.lane.b32.xlu0 %v1125, 104
        %v2473 = vpop.permute.xlu0 %2472
        %2474 = vrot.lane.b32.xlu0 %v1125, 72
        %v2475 = vpop.permute.xlu0 %2474
        %v2477 = vsel %vm983, %v2473, 0
        %v2480 = vsel %vm983, %v2475, 0
        %2482 = vmatpush.bf16.xpose.msra.mxu0 0
        %2483 = vmatpush.bf16.xpose.msra.mxu0 0
        %2484 = vmatpush.bf16.xpose.msra.mxu0 0
        %2485 = vmatpush.bf16.xpose.msra.mxu0 0
        %2486 = vmatpush.bf16.xpose.msra.mxu0 0
        %2487 = vmatpush.bf16.xpose.msra.mxu0 0
        %2488 = vmatpush.bf16.xpose.msra.mxu0 0
        %2489 = vmatpush.bf16.xpose.msra.mxu0 %v2480
        %2490 = vmatmul.bf16.gmra.mxu0 %v2477
        %v2491 = vpop.f32.mrf.mxu0
        %v2492 = vadd.f32 0.0, %v2491
        %v2493 = vpop.f32.mrf.mxu0
        %2494 = vdwg.mxu0
        %2495 = vrot.lane.b32.xlu0 %v1149, 104
        %v2496 = vpop.permute.xlu0 %2495
        %2497 = vrot.lane.b32.xlu0 %v1149, 72
        %v2498 = vpop.permute.xlu0 %2497
        %v2500 = vsel %vm983, %v2496, 0
        %v2503 = vsel %vm983, %v2498, 0
        %2505 = vmatpush.bf16.xpose.msra.mxu0 0
        %2506 = vmatpush.bf16.xpose.msra.mxu0 0
        %2507 = vmatpush.bf16.xpose.msra.mxu0 0
        %2508 = vmatpush.bf16.xpose.msra.mxu0 0
        %2509 = vmatpush.bf16.xpose.msra.mxu0 0
        %2510 = vmatpush.bf16.xpose.msra.mxu0 0
        %2511 = vmatpush.bf16.xpose.msra.mxu0 0
        %2512 = vmatpush.bf16.xpose.msra.mxu0 %v2503
        %2513 = vmatmul.bf16.gmra.mxu0 %v2500
        %v2514 = vpop.f32.mrf.mxu0
        %v2515 = vadd.f32 0.0, %v2514
        %v2516 = vpop.f32.mrf.mxu0
        %2517 = vdwg.mxu0
        %v2518 = vsel %vm1171, %v2354, -inf
        %2519 = vmax.xlane.f32.xlu0 %v2518
        %v2520 = vpop.xlane.xlu0 %2519
        %v2521 = vsel %vm1171, %v2377, -inf
        %2522 = vmax.xlane.f32.xlu0 %v2521
        %v2523 = vpop.xlane.xlu0 %2522
        %v2524 = vsel %vm1171, %v2400, -inf
        %2525 = vmax.xlane.f32.xlu0 %v2524
        %v2526 = vpop.xlane.xlu0 %2525
        %v2527 = vsel %vm1171, %v2423, -inf
        %2528 = vmax.xlane.f32.xlu0 %v2527
        %v2529 = vpop.xlane.xlu0 %2528
        %v2530 = vsel %vm1171, %v2446, -inf
        %2531 = vmax.xlane.f32.xlu0 %v2530
        %v2532 = vpop.xlane.xlu0 %2531
        %v2533 = vsel %vm1171, %v2469, -inf
        %2534 = vmax.xlane.f32.xlu0 %v2533
        %v2535 = vpop.xlane.xlu0 %2534
        %v2536 = vsel %vm1171, %v2492, -inf
        %2537 = vmax.xlane.f32.xlu0 %v2536
        %v2538 = vpop.xlane.xlu0 %2537
        %v2539 = vsel %vm1171, %v2515, -inf
        %2540 = vmax.xlane.f32.xlu0 %v2539
        %v2541 = vpop.xlane.xlu0 %2540
        %v2542 = vsub.f32 %v2354, %v2520
        %v2543 = vsub.f32 %v2377, %v2523
        %v2544 = vsub.f32 %v2400, %v2526
        %v2545 = vsub.f32 %v2423, %v2529
        %v2546 = vsub.f32 %v2446, %v2532
        %v2547 = vsub.f32 %v2469, %v2535
        %v2548 = vsub.f32 %v2492, %v2538
        %v2549 = vsub.f32 %v2515, %v2541
        %v2550 = vmul.f32 %v2542, 1.442695
        %v2551 = vpow.pop %v2550
        %v2552 = vmul.f32 %v2543, 1.442695
        %v2553 = vpow.pop %v2552
        %v2554 = vmul.f32 %v2544, 1.442695
        %v2555 = vpow.pop %v2554
        %v2556 = vmul.f32 %v2545, 1.442695
        %v2557 = vpow.pop %v2556
        %v2558 = vmul.f32 %v2546, 1.442695
        %v2559 = vpow.pop %v2558
        %v2560 = vmul.f32 %v2547, 1.442695
        %v2561 = vpow.pop %v2560
        %v2562 = vmul.f32 %v2548, 1.442695
        %v2563 = vpow.pop %v2562
        %v2564 = vmul.f32 %v2549, 1.442695
        %v2565 = vpow.pop %v2564
        %v2566 = vsel %vm1171, %v2551, 0.0
        %2567 = vadd.xlane.f32.xlu0 %v2566
        %v2568 = vpop.xlane.xlu0 %2567
        %v2569 = vsel %vm1171, %v2553, 0.0
        %2570 = vadd.xlane.f32.xlu0 %v2569
        %v2571 = vpop.xlane.xlu0 %2570
        %v2572 = vsel %vm1171, %v2555, 0.0
        %2573 = vadd.xlane.f32.xlu0 %v2572
        %v2574 = vpop.xlane.xlu0 %2573
        %v2575 = vsel %vm1171, %v2557, 0.0
        %2576 = vadd.xlane.f32.xlu0 %v2575
        %v2577 = vpop.xlane.xlu0 %2576
        %v2578 = vsel %vm1171, %v2559, 0.0
        %2579 = vadd.xlane.f32.xlu0 %v2578
        %v2580 = vpop.xlane.xlu0 %2579
        %v2581 = vsel %vm1171, %v2561, 0.0
        %2582 = vadd.xlane.f32.xlu0 %v2581
        %v2583 = vpop.xlane.xlu0 %2582
        %v2584 = vsel %vm1171, %v2563, 0.0
        %2585 = vadd.xlane.f32.xlu0 %v2584
        %v2586 = vpop.xlane.xlu0 %2585
        %v2587 = vsel %vm1171, %v2565, 0.0
        %2588 = vadd.xlane.f32.xlu0 %v2587
        %v2589 = vpop.xlane.xlu0 %2588
        %v2590 = vrcp.pop %v2568
        %v2591 = vrcp.pop %v2571
        %v2592 = vrcp.pop %v2574
        %v2593 = vrcp.pop %v2577
        %v2594 = vrcp.pop %v2580
        %v2595 = vrcp.pop %v2583
        %v2596 = vrcp.pop %v2586
        %v2597 = vrcp.pop %v2589
        %v2598 = vmul.f32 %v2551, %v2590
        %v2599 = vmul.f32 %v2553, %v2591
        %v2600 = vmul.f32 %v2555, %v2592
        %v2601 = vmul.f32 %v2557, %v2593
        %v2602 = vmul.f32 %v2559, %v2594
        %v2603 = vmul.f32 %v2561, %v2595
        %v2604 = vmul.f32 %v2563, %v2596
        %v2605 = vmul.f32 %v2565, %v2597
        %v2606 = vpack.c.bf16 %v2598, %v2598
        %v2607 = vpack.c.bf16 %v2599, %v2599
        %v2608 = vpack.c.bf16 %v2600, %v2600
        %v2609 = vpack.c.bf16 %v2601, %v2601
        %v2610 = vpack.c.bf16 %v2602, %v2602
        %v2611 = vpack.c.bf16 %v2603, %v2603
        %v2612 = vpack.c.bf16 %v2604, %v2604
        %v2613 = vpack.c.bf16 %v2605, %v2605
        %2614 = vrot.lane.b32.xlu0 %v980, 40
        %v2615 = vpop.permute.xlu0 %2614
        %v2617 = vsel %vm1270, %v2606, 0
        %v2620 = vsel %vm1274, %v2615, 0
        %2622 = vmatpush.bf16.msra.mxu0 0
        %2623 = vmatpush.bf16.msra.mxu0 0
        %2624 = vmatpush.bf16.msra.mxu0 0
        %2625 = vmatpush.bf16.msra.mxu0 0
        %2626 = vmatpush.bf16.msra.mxu0 0
        %2627 = vmatpush.bf16.msra.mxu0 0
        %2628 = vmatpush.bf16.msra.mxu0 0
        %2629 = vmatpush.bf16.msra.mxu0 %v2620
        %2630 = vmatmul.bf16.gmra.mxu0 %v2617
        %v2631 = vpop.f32.mrf.mxu0
        %v2632 = vadd.f32 0.0, %v2631
        %v2633 = vpop.f32.mrf.mxu0
        %2634 = vdwg.mxu0
        %2635 = vrot.lane.b32.xlu0 %v1005, 40
        %v2636 = vpop.permute.xlu0 %2635
        %v2638 = vsel %vm1270, %v2607, 0
        %v2641 = vsel %vm1274, %v2636, 0
        %2643 = vmatpush.bf16.msra.mxu0 0
        %2644 = vmatpush.bf16.msra.mxu0 0
        %2645 = vmatpush.bf16.msra.mxu0 0
        %2646 = vmatpush.bf16.msra.mxu0 0
        %2647 = vmatpush.bf16.msra.mxu0 0
        %2648 = vmatpush.bf16.msra.mxu0 0
        %2649 = vmatpush.bf16.msra.mxu0 0
        %2650 = vmatpush.bf16.msra.mxu0 %v2641
        %2651 = vmatmul.bf16.gmra.mxu0 %v2638
        %v2652 = vpop.f32.mrf.mxu0
        %v2653 = vadd.f32 0.0, %v2652
        %v2654 = vpop.f32.mrf.mxu0
        %2655 = vdwg.mxu0
        %2656 = vrot.lane.b32.xlu0 %v1029, 40
        %v2657 = vpop.permute.xlu0 %2656
        %v2659 = vsel %vm1270, %v2608, 0
        %v2662 = vsel %vm1274, %v2657, 0
        %2664 = vmatpush.bf16.msra.mxu0 0
        %2665 = vmatpush.bf16.msra.mxu0 0
        %2666 = vmatpush.bf16.msra.mxu0 0
        %2667 = vmatpush.bf16.msra.mxu0 0
        %2668 = vmatpush.bf16.msra.mxu0 0
        %2669 = vmatpush.bf16.msra.mxu0 0
        %2670 = vmatpush.bf16.msra.mxu0 0
        %2671 = vmatpush.bf16.msra.mxu0 %v2662
        %2672 = vmatmul.bf16.gmra.mxu0 %v2659
        %v2673 = vpop.f32.mrf.mxu0
        %v2674 = vadd.f32 0.0, %v2673
        %v2675 = vpop.f32.mrf.mxu0
        %2676 = vdwg.mxu0
        %2677 = vrot.lane.b32.xlu0 %v1053, 40
        %v2678 = vpop.permute.xlu0 %2677
        %v2680 = vsel %vm1270, %v2609, 0
        %v2683 = vsel %vm1274, %v2678, 0
        %2685 = vmatpush.bf16.msra.mxu0 0
        %2686 = vmatpush.bf16.msra.mxu0 0
        %2687 = vmatpush.bf16.msra.mxu0 0
        %2688 = vmatpush.bf16.msra.mxu0 0
        %2689 = vmatpush.bf16.msra.mxu0 0
        %2690 = vmatpush.bf16.msra.mxu0 0
        %2691 = vmatpush.bf16.msra.mxu0 0
        %2692 = vmatpush.bf16.msra.mxu0 %v2683
        %2693 = vmatmul.bf16.gmra.mxu0 %v2680
        %v2694 = vpop.f32.mrf.mxu0
        %v2695 = vadd.f32 0.0, %v2694
        %v2696 = vpop.f32.mrf.mxu0
        %2697 = vdwg.mxu0
        %2698 = vrot.lane.b32.xlu0 %v1077, 40
        %v2699 = vpop.permute.xlu0 %2698
        %v2701 = vsel %vm1270, %v2610, 0
        %v2704 = vsel %vm1274, %v2699, 0
        %2706 = vmatpush.bf16.msra.mxu0 0
        %2707 = vmatpush.bf16.msra.mxu0 0
        %2708 = vmatpush.bf16.msra.mxu0 0
        %2709 = vmatpush.bf16.msra.mxu0 0
        %2710 = vmatpush.bf16.msra.mxu0 0
        %2711 = vmatpush.bf16.msra.mxu0 0
        %2712 = vmatpush.bf16.msra.mxu0 0
        %2713 = vmatpush.bf16.msra.mxu0 %v2704
        %2714 = vmatmul.bf16.gmra.mxu0 %v2701
        %v2715 = vpop.f32.mrf.mxu0
        %v2716 = vadd.f32 0.0, %v2715
        %v2717 = vpop.f32.mrf.mxu0
        %2718 = vdwg.mxu0
        %2719 = vrot.lane.b32.xlu0 %v1101, 40
        %v2720 = vpop.permute.xlu0 %2719
        %v2722 = vsel %vm1270, %v2611, 0
        %v2725 = vsel %vm1274, %v2720, 0
        %2727 = vmatpush.bf16.msra.mxu0 0
        %2728 = vmatpush.bf16.msra.mxu0 0
        %2729 = vmatpush.bf16.msra.mxu0 0
        %2730 = vmatpush.bf16.msra.mxu0 0
        %2731 = vmatpush.bf16.msra.mxu0 0
        %2732 = vmatpush.bf16.msra.mxu0 0
        %2733 = vmatpush.bf16.msra.mxu0 0
        %2734 = vmatpush.bf16.msra.mxu0 %v2725
        %2735 = vmatmul.bf16.gmra.mxu0 %v2722
        %v2736 = vpop.f32.mrf.mxu0
        %v2737 = vadd.f32 0.0, %v2736
        %v2738 = vpop.f32.mrf.mxu0
        %2739 = vdwg.mxu0
        %2740 = vrot.lane.b32.xlu0 %v1125, 40
        %v2741 = vpop.permute.xlu0 %2740
        %v2743 = vsel %vm1270, %v2612, 0
        %v2746 = vsel %vm1274, %v2741, 0
        %2748 = vmatpush.bf16.msra.mxu0 0
        %2749 = vmatpush.bf16.msra.mxu0 0
        %2750 = vmatpush.bf16.msra.mxu0 0
        %2751 = vmatpush.bf16.msra.mxu0 0
        %2752 = vmatpush.bf16.msra.mxu0 0
        %2753 = vmatpush.bf16.msra.mxu0 0
        %2754 = vmatpush.bf16.msra.mxu0 0
        %2755 = vmatpush.bf16.msra.mxu0 %v2746
        %2756 = vmatmul.bf16.gmra.mxu0 %v2743
        %v2757 = vpop.f32.mrf.mxu0
        %v2758 = vadd.f32 0.0, %v2757
        %v2759 = vpop.f32.mrf.mxu0
        %2760 = vdwg.mxu0
        %2761 = vrot.lane.b32.xlu0 %v1149, 40
        %v2762 = vpop.permute.xlu0 %2761
        %v2764 = vsel %vm1270, %v2613, 0
        %v2767 = vsel %vm1274, %v2762, 0
        %2769 = vmatpush.bf16.msra.mxu0 0
        %2770 = vmatpush.bf16.msra.mxu0 0
        %2771 = vmatpush.bf16.msra.mxu0 0
        %2772 = vmatpush.bf16.msra.mxu0 0
        %2773 = vmatpush.bf16.msra.mxu0 0
        %2774 = vmatpush.bf16.msra.mxu0 0
        %2775 = vmatpush.bf16.msra.mxu0 0
        %2776 = vmatpush.bf16.msra.mxu0 %v2767
        %2777 = vmatmul.bf16.gmra.mxu0 %v2764
        %v2778 = vpop.f32.mrf.mxu0
        %v2779 = vadd.f32 0.0, %v2778
        %v2780 = vpop.f32.mrf.mxu0
        %2781 = vdwg.mxu0
        %2790 = vrot.lane.b32.xlu0 %v1736, 8
        %v2791 = vpop.permute.xlu0 %2790
        %2792 = vrot.lane.b32.xlu0 %v1757, 8
        %v2793 = vpop.permute.xlu0 %2792
        %2794 = vrot.lane.b32.xlu0 %v1778, 8
        %v2795 = vpop.permute.xlu0 %2794
        %2796 = vrot.lane.b32.xlu0 %v1799, 8
        %v2797 = vpop.permute.xlu0 %2796
        %2798 = vrot.lane.b32.xlu0 %v1820, 8
        %v2799 = vpop.permute.xlu0 %2798
        %2800 = vrot.lane.b32.xlu0 %v1841, 8
        %v2801 = vpop.permute.xlu0 %2800
        %2802 = vrot.lane.b32.xlu0 %v1862, 8
        %v2803 = vpop.permute.xlu0 %2802
        %2804 = vrot.lane.b32.xlu0 %v1883, 8
        %v2805 = vpop.permute.xlu0 %2804
        %2822 = vrot.lane.b32.xlu0 %v2184, 16
        %v2823 = vpop.permute.xlu0 %2822
        %2824 = vrot.lane.b32.xlu0 %v2205, 16
        %v2825 = vpop.permute.xlu0 %2824
        %2826 = vrot.lane.b32.xlu0 %v2226, 16
        %v2827 = vpop.permute.xlu0 %2826
        %2828 = vrot.lane.b32.xlu0 %v2247, 16
        %v2829 = vpop.permute.xlu0 %2828
        %2830 = vrot.lane.b32.xlu0 %v2268, 16
        %v2831 = vpop.permute.xlu0 %2830
        %2832 = vrot.lane.b32.xlu0 %v2289, 16
        %v2833 = vpop.permute.xlu0 %2832
        %2834 = vrot.lane.b32.xlu0 %v2310, 16
        %v2835 = vpop.permute.xlu0 %2834
        %2836 = vrot.lane.b32.xlu0 %v2331, 16
        %v2837 = vpop.permute.xlu0 %2836
        %2854 = vrot.lane.b32.xlu0 %v2632, 24
        %v2855 = vpop.permute.xlu0 %2854
        %2856 = vrot.lane.b32.xlu0 %v2653, 24
        %v2857 = vpop.permute.xlu0 %2856
        %2858 = vrot.lane.b32.xlu0 %v2674, 24
        %v2859 = vpop.permute.xlu0 %2858
        %2860 = vrot.lane.b32.xlu0 %v2695, 24
        %v2861 = vpop.permute.xlu0 %2860
        %2862 = vrot.lane.b32.xlu0 %v2716, 24
        %v2863 = vpop.permute.xlu0 %2862
        %2864 = vrot.lane.b32.xlu0 %v2737, 24
        %v2865 = vpop.permute.xlu0 %2864
        %2866 = vrot.lane.b32.xlu0 %v2758, 24
        %v2867 = vpop.permute.xlu0 %2866
        %2868 = vrot.lane.b32.xlu0 %v2779, 24
        %v2869 = vpop.permute.xlu0 %2868
        %v2878 = vsel %vm983, %v1288, %v2791
        %v2879 = vsel %vm983, %v1309, %v2793
        %v2880 = vsel %vm983, %v1330, %v2795
        %v2881 = vsel %vm983, %v1351, %v2797
        %v2882 = vsel %vm983, %v1372, %v2799
        %v2883 = vsel %vm983, %v1393, %v2801
        %v2884 = vsel %vm983, %v1414, %v2803
        %v2885 = vsel %vm983, %v1435, %v2805
        %vm2886 = vcmask 130048
        %v2887 = vsel %vm2886, %v2878, %v2823
        %v2888 = vsel %vm2886, %v2879, %v2825
        %v2889 = vsel %vm2886, %v2880, %v2827
        %v2890 = vsel %vm2886, %v2881, %v2829
        %v2891 = vsel %vm2886, %v2882, %v2831
        %v2892 = vsel %vm2886, %v2883, %v2833
        %v2893 = vsel %vm2886, %v2884, %v2835
        %v2894 = vsel %vm2886, %v2885, %v2837
        %vm2895 = vcmask 195584
        %v2896 = vsel %vm2895, %v2887, %v2855
        %v2897 = vsel %vm2895, %v2888, %v2857
        %v2898 = vsel %vm2895, %v2889, %v2859
        %v2899 = vsel %vm2895, %v2890, %v2861
        %v2900 = vsel %vm2895, %v2891, %v2863
        %v2901 = vsel %vm2895, %v2892, %v2865
        %v2902 = vsel %vm2895, %v2893, %v2867
        %v2903 = vsel %vm2895, %v2894, %v2869
        %2912 = vst [vmem:[#allocation1] ss:$2 sm:$0xff] %v2896
        %s2913 = scalar_lea.vmem [#allocation1], 1
        %2914 = vst [vmem:[%s2913] ss:$2 sm:$0xff] %v2897
        %s2915 = scalar_lea.vmem [#allocation1], 16
        %2916 = vst [vmem:[%s2915] ss:$2 sm:$0xff] %v2898
        %s2917 = scalar_lea.vmem [#allocation1], 17
        %2918 = vst [vmem:[%s2917] ss:$2 sm:$0xff] %v2899
        %s2919 = scalar_lea.vmem [#allocation1], 32
        %2920 = vst [vmem:[%s2919] ss:$2 sm:$0xff] %v2900
        %s2921 = scalar_lea.vmem [#allocation1], 33
        %2922 = vst [vmem:[%s2921] ss:$2 sm:$0xff] %v2901
        %s2923 = scalar_lea.vmem [#allocation1], 48
        %2924 = vst [vmem:[%s2923] ss:$2 sm:$0xff] %v2902
        %s2925 = scalar_lea.vmem [#allocation1], 49
        %2926 = vst [vmem:[%s2925] ss:$2 sm:$0xff] %v2903
        %v2927 = vld.sshfl [vmem:[#allocation1] sm:$0xff pattern:$0x75316420]
        %v2928 = vld.sshfl [vmem:[#allocation1 + $0x10] sm:$0xff pattern:$0x75316420]
        %v2929 = vld.sshfl [vmem:[#allocation1 + $0x20] sm:$0xff pattern:$0x75316420]
        %v2930 = vld.sshfl [vmem:[#allocation1 + $0x30] sm:$0xff pattern:$0x75316420]
        %v2935 = vpack.c.bf16 %v2928, %v2927
        %v2936 = vpack.c.bf16 %v2930, %v2929
        %v2938 = vperm.slane %v896, 0
        %v2944 = vunpack.c.l.b16 %v892
        %v2945 = vunpack.c.l.b16 %v893
        %v2946 = vunpack.c.l.b16 %v894
        %v2947 = vunpack.c.l.b16 %v895
        %v2948 = vpack.c.b16 %v2945, %v2944
        %v2949 = vpack.c.b16 %v2947, %v2946
        %v2953 = vsel %vm932, %v2935, 0
        %v2956 = vsel %vm932, %v2936, 0
        %2958 = vmatpush.bf16.msra.mxu0 0
        %2959 = vmatpush.bf16.msra.mxu0 0
        %2960 = vmatpush.bf16.msra.mxu0 0
        %2961 = vmatpush.bf16.msra.mxu0 0
        %2962 = vmatpush.bf16.msra.mxu0 0
        %2963 = vmatpush.bf16.msra.mxu0 0
        %2964 = vmatpush.bf16.msra.mxu0 %v2949
        %2965 = vmatpush.bf16.msra.mxu0 %v2948
        %2966 = vmatmul.bf16.gmra.mxu0 %v2953
        %v2967 = vpop.f32.mrf.mxu0
        %v2968 = vadd.f32 %v2938, %v2967
        %v2969 = vpop.f32.mrf.mxu0
        %v2970 = vadd.f32 %v2938, %v2969
        %2971 = vmatmul.bf16.gmra.mxu0 %v2956
        %v2972 = vpop.f32.mrf.mxu0
        %v2973 = vadd.f32 %v2938, %v2972
        %v2974 = vpop.f32.mrf.mxu0
        %v2975 = vadd.f32 %v2938, %v2974
        %2976 = vdwg.mxu0
        %v2977 = vadd.f32 %v883, %v2968
        %v2978 = vadd.f32 %v884, %v2970
        %v2979 = vadd.f32 %v885, %v2973
        %v2980 = vadd.f32 %v886, %v2975
        %v2981 = vsel %vm932, %v2977, 0.0
        %2982 = vadd.xlane.f32.xlu0 %v2981
        %v2983 = vpop.xlane.xlu0 %2982
        %v2984 = vsel %vm932, %v2978, 0.0
        %2985 = vadd.xlane.f32.xlu0 %v2984
        %v2986 = vpop.xlane.xlu0 %2985
        %v2987 = vsel %vm932, %v2979, 0.0
        %2988 = vadd.xlane.f32.xlu0 %v2987
        %v2989 = vpop.xlane.xlu0 %2988
        %v2990 = vsel %vm932, %v2980, 0.0
        %2991 = vadd.xlane.f32.xlu0 %v2990
        %v2992 = vpop.xlane.xlu0 %2991
        %v2993 = vrcp.pop 32.0
        %v2994 = vmul.f32 32.0, %v2993
        %v2995 = vsub.f32 1.0, %v2994
        %v2996 = vmul.f32 %v2993, %v2995
        %v2997 = vadd.f32 %v2993, %v2996
        %vm2998 = vweird.f32 %v2993
        %v2999 = vsel %vm2998, %v2993, %v2997
        %v3000 = vmul.f32 %v2983, %v2999
        %v3001 = vmul.f32 %v2986, %v2999
        %v3002 = vmul.f32 %v2989, %v2999
        %v3003 = vmul.f32 %v2992, %v2999
        %v3004 = vsub.f32 %v2977, %v3000
        %v3005 = vsub.f32 %v2978, %v3001
        %v3006 = vsub.f32 %v2979, %v3002
        %v3007 = vsub.f32 %v2980, %v3003
        %v3008 = vmul.f32 %v3004, %v3004
        %v3009 = vmul.f32 %v3005, %v3005
        %v3010 = vmul.f32 %v3006, %v3006
        %v3011 = vmul.f32 %v3007, %v3007
        %v3012 = vsel %vm932, %v3008, 0.0
        %3013 = vadd.xlane.f32.xlu0 %v3012
        %v3014 = vpop.xlane.xlu0 %3013
        %v3015 = vsel %vm932, %v3009, 0.0
        %3016 = vadd.xlane.f32.xlu0 %v3015
        %v3017 = vpop.xlane.xlu0 %3016
        %v3018 = vsel %vm932, %v3010, 0.0
        %3019 = vadd.xlane.f32.xlu0 %v3018
        %v3020 = vpop.xlane.xlu0 %3019
        %v3021 = vsel %vm932, %v3011, 0.0
        %3022 = vadd.xlane.f32.xlu0 %v3021
        %v3023 = vpop.xlane.xlu0 %3022
        %v3024 = vmul.f32 %v3014, %v2999
        %v3025 = vmul.f32 %v3017, %v2999
        %v3026 = vmul.f32 %v3020, %v2999
        %v3027 = vmul.f32 %v3023, %v2999
        %v3028 = vadd.f32 %v3024, 1e-05
        %v3029 = vadd.f32 %v3025, 1e-05
        %v3030 = vadd.f32 %v3026, 1e-05
        %v3031 = vadd.f32 %v3027, 1e-05
        %v3032 = vrsqrt.pop %v3028
        %v3033 = vmul.f32 %v3032, %v3028
        %v3034 = vmul.f32 %v3033, %v3032
        %v3035 = vmul.f32 0.5, %v3034
        %v3036 = vsub.f32 1.5, %v3035
        %v3037 = vmul.f32 %v3032, %v3036
        %vm3038 = vweird.f32 %v3028
        %vm3039 = vweird.f32 %v3032
        %vm3040 = vmor %vm3038, %vm3039
        %v3041 = vsel %vm3040, %v3032, %v3037
        %v3042 = vrsqrt.pop %v3029
        %v3043 = vmul.f32 %v3042, %v3029
        %v3044 = vmul.f32 %v3043, %v3042
        %v3045 = vmul.f32 0.5, %v3044
        %v3046 = vsub.f32 1.5, %v3045
        %v3047 = vmul.f32 %v3042, %v3046
        %vm3048 = vweird.f32 %v3029
        %vm3049 = vweird.f32 %v3042
        %vm3050 = vmor %vm3048, %vm3049
        %v3051 = vsel %vm3050, %v3042, %v3047
        %v3052 = vrsqrt.pop %v3030
        %v3053 = vmul.f32 %v3052, %v3030
        %v3054 = vmul.f32 %v3053, %v3052
        %v3055 = vmul.f32 0.5, %v3054
        %v3056 = vsub.f32 1.5, %v3055
        %v3057 = vmul.f32 %v3052, %v3056
        %vm3058 = vweird.f32 %v3030
        %vm3059 = vweird.f32 %v3052
        %vm3060 = vmor %vm3058, %vm3059
        %v3061 = vsel %vm3060, %v3052, %v3057
        %v3062 = vrsqrt.pop %v3031
        %v3063 = vmul.f32 %v3062, %v3031
        %v3064 = vmul.f32 %v3063, %v3062
        %v3065 = vmul.f32 0.5, %v3064
        %v3066 = vsub.f32 1.5, %v3065
        %v3067 = vmul.f32 %v3062, %v3066
        %vm3068 = vweird.f32 %v3031
        %vm3069 = vweird.f32 %v3062
        %vm3070 = vmor %vm3068, %vm3069
        %v3071 = vsel %vm3070, %v3062, %v3067
        %v3072 = vmul.f32 %v3004, %v3041
        %v3073 = vmul.f32 %v3005, %v3051
        %v3074 = vmul.f32 %v3006, %v3061
        %v3075 = vmul.f32 %v3007, %v3071
        %v3077 = vperm.slane %v897, 0
        %v3079 = vmul.f32 %v3072, %v3077
        %v3080 = vmul.f32 %v3073, %v3077
        %v3081 = vmul.f32 %v3074, %v3077
        %v3082 = vmul.f32 %v3075, %v3077
        %v3084 = vperm.slane %v898, 0
        %v3086 = vadd.f32 %v3079, %v3084
        %v3087 = vadd.f32 %v3080, %v3084
        %v3088 = vadd.f32 %v3081, %v3084
        %v3089 = vadd.f32 %v3082, %v3084
        %v3090 = vpack.c.bf16 %v3087, %v3086
        %v3091 = vpack.c.bf16 %v3089, %v3088
        %v3093 = vperm.slane %v903, 0
        %v3099 = vunpack.c.l.b16 %v899
        %v3100 = vunpack.c.l.b16 %v900
        %v3101 = vunpack.c.l.b16 %v901
        %v3102 = vunpack.c.l.b16 %v902
        %v3103 = vpack.c.b16 %v3100, %v3099
        %v3104 = vpack.c.b16 %v3102, %v3101
        %v3108 = vsel %vm932, %v3090, 0
        %v3111 = vsel %vm932, %v3091, 0
        %3113 = vmatpush.bf16.msra.mxu0 0
        %3114 = vmatpush.bf16.msra.mxu0 0
        %3115 = vmatpush.bf16.msra.mxu0 0
        %3116 = vmatpush.bf16.msra.mxu0 0
        %3117 = vmatpush.bf16.msra.mxu0 0
        %3118 = vmatpush.bf16.msra.mxu0 0
        %3119 = vmatpush.bf16.msra.mxu0 %v3104
        %3120 = vmatpush.bf16.msra.mxu0 %v3103
        %3121 = vmatmul.bf16.gmra.mxu0 %v3108
        %v3122 = vpop.f32.mrf.mxu0
        %v3123 = vadd.f32 %v3093, %v3122
        %v3124 = vpop.f32.mrf.mxu0
        %v3125 = vadd.f32 %v3093, %v3124
        %3126 = vmatmul.bf16.gmra.mxu0 %v3111
        %v3127 = vpop.f32.mrf.mxu0
        %v3128 = vadd.f32 %v3093, %v3127
        %v3129 = vpop.f32.mrf.mxu0
        %v3130 = vadd.f32 %v3093, %v3129
        %3131 = vdwg.mxu0
        %v3132 = vmul.f32 %v3123, %v3123
        %v3133 = vmul.f32 %v3125, %v3125
        %v3134 = vmul.f32 %v3128, %v3128
        %v3135 = vmul.f32 %v3130, %v3130
        %v3136 = vmul.f32 %v3123, %v3132
        %v3137 = vmul.f32 %v3125, %v3133
        %v3138 = vmul.f32 %v3128, %v3134
        %v3139 = vmul.f32 %v3130, %v3135
        %v3140 = vmul.f32 %v3136, 0.044715
        %v3141 = vmul.f32 %v3137, 0.044715
        %v3142 = vmul.f32 %v3138, 0.044715
        %v3143 = vmul.f32 %v3139, 0.044715
        %v3144 = vadd.f32 %v3123, %v3140
        %v3145 = vadd.f32 %v3125, %v3141
        %v3146 = vadd.f32 %v3128, %v3142
        %v3147 = vadd.f32 %v3130, %v3143
        %v3148 = vmul.f32 %v3144, 0.7978846
        %v3149 = vmul.f32 %v3145, 0.7978846
        %v3150 = vmul.f32 %v3146, 0.7978846
        %v3151 = vmul.f32 %v3147, 0.7978846
        %v3152 = vtanh.pop %v3148
        %v3153 = vtanh.pop %v3149
        %v3154 = vtanh.pop %v3150
        %v3155 = vtanh.pop %v3151
        %v3156 = vadd.f32 %v3152, 1.0
        %v3157 = vadd.f32 %v3153, 1.0
        %v3158 = vadd.f32 %v3154, 1.0
        %v3159 = vadd.f32 %v3155, 1.0
        %v3160 = vmul.f32 %v3156, 0.5
        %v3161 = vmul.f32 %v3157, 0.5
        %v3162 = vmul.f32 %v3158, 0.5
        %v3163 = vmul.f32 %v3159, 0.5
        %v3164 = vmul.f32 %v3123, %v3160
        %v3165 = vmul.f32 %v3125, %v3161
        %v3166 = vmul.f32 %v3128, %v3162
        %v3167 = vmul.f32 %v3130, %v3163
        %v3168 = vpack.c.bf16 %v3165, %v3164
        %v3169 = vpack.c.bf16 %v3167, %v3166
        %v3171 = vperm.slane %v912, 0
        %v3181 = vunpack.c.l.b16 %v904
        %v3182 = vunpack.c.l.b16 %v905
        %v3183 = vunpack.c.l.b16 %v906
        %v3184 = vunpack.c.l.b16 %v907
        %v3185 = vunpack.c.l.b16 %v908
        %v3186 = vunpack.c.l.b16 %v909
        %v3187 = vunpack.c.l.b16 %v910
        %v3188 = vunpack.c.l.b16 %v911
        %v3189 = vpack.c.b16 %v3182, %v3181
        %v3190 = vpack.c.b16 %v3184, %v3183
        %v3191 = vpack.c.b16 %v3186, %v3185
        %v3192 = vpack.c.b16 %v3188, %v3187
        %vm3197 = vcmask 523264
        %v3199 = vsel %vm3197, %v3168, 0
        %v3202 = vsel %vm3197, %v3169, 0
        %3204 = vmatpush.bf16.msra.mxu0 0
        %3205 = vmatpush.bf16.msra.mxu0 0
        %3206 = vmatpush.bf16.msra.mxu0 0
        %3207 = vmatpush.bf16.msra.mxu0 0
        %3208 = vmatpush.bf16.msra.mxu0 %v3192
        %3209 = vmatpush.bf16.msra.mxu0 %v3191
        %3210 = vmatpush.bf16.msra.mxu0 %v3190
        %3211 = vmatpush.bf16.msra.mxu0 %v3189
        %3212 = vmatmul.bf16.gmra.mxu0 %v3199
        %v3213 = vpop.f32.mrf.mxu0
        %v3214 = vadd.f32 %v3171, %v3213
        %v3215 = vpop.f32.mrf.mxu0
        %v3216 = vadd.f32 %v3171, %v3215
        %3217 = vmatmul.bf16.gmra.mxu0 %v3202
        %v3218 = vpop.f32.mrf.mxu0
        %v3219 = vadd.f32 %v3171, %v3218
        %v3220 = vpop.f32.mrf.mxu0
        %v3221 = vadd.f32 %v3171, %v3220
        %3222 = vdwg.mxu0
        %v3223 = vadd.f32 %v3086, %v3214
        %v3224 = vadd.f32 %v3087, %v3216
        %v3225 = vadd.f32 %v3088, %v3219
        %v3226 = vadd.f32 %v3089, %v3221
        %v3227 = vsel %vm932, %v3223, 0.0
        %3228 = vadd.xlane.f32.xlu0 %v3227
        %v3229 = vpop.xlane.xlu0 %3228
        %v3230 = vsel %vm932, %v3224, 0.0
        %3231 = vadd.xlane.f32.xlu0 %v3230
        %v3232 = vpop.xlane.xlu0 %3231
        %v3233 = vsel %vm932, %v3225, 0.0
        %3234 = vadd.xlane.f32.xlu0 %v3233
        %v3235 = vpop.xlane.xlu0 %3234
        %v3236 = vsel %vm932, %v3226, 0.0
        %3237 = vadd.xlane.f32.xlu0 %v3236
        %v3238 = vpop.xlane.xlu0 %3237
        %v3239 = vmul.f32 %v3229, %v2999
        %v3240 = vmul.f32 %v3232, %v2999
        %v3241 = vmul.f32 %v3235, %v2999
        %v3242 = vmul.f32 %v3238, %v2999
        %v3243 = vsub.f32 %v3223, %v3239
        %v3244 = vsub.f32 %v3224, %v3240
        %v3245 = vsub.f32 %v3225, %v3241
        %v3246 = vsub.f32 %v3226, %v3242
        %v3247 = vmul.f32 %v3243, %v3243
        %v3248 = vmul.f32 %v3244, %v3244
        %v3249 = vmul.f32 %v3245, %v3245
        %v3250 = vmul.f32 %v3246, %v3246
        %v3251 = vsel %vm932, %v3247, 0.0
        %3252 = vadd.xlane.f32.xlu0 %v3251
        %v3253 = vpop.xlane.xlu0 %3252
        %v3254 = vsel %vm932, %v3248, 0.0
        %3255 = vadd.xlane.f32.xlu0 %v3254
        %v3256 = vpop.xlane.xlu0 %3255
        %v3257 = vsel %vm932, %v3249, 0.0
        %3258 = vadd.xlane.f32.xlu0 %v3257
        %v3259 = vpop.xlane.xlu0 %3258
        %v3260 = vsel %vm932, %v3250, 0.0
        %3261 = vadd.xlane.f32.xlu0 %v3260
        %v3262 = vpop.xlane.xlu0 %3261
        %v3263 = vmul.f32 %v3253, %v2999
        %v3264 = vmul.f32 %v3256, %v2999
        %v3265 = vmul.f32 %v3259, %v2999
        %v3266 = vmul.f32 %v3262, %v2999
        %v3267 = vadd.f32 %v3263, 1e-05
        %v3268 = vadd.f32 %v3264, 1e-05
        %v3269 = vadd.f32 %v3265, 1e-05
        %v3270 = vadd.f32 %v3266, 1e-05
        %v3271 = vrsqrt.pop %v3267
        %v3272 = vmul.f32 %v3271, %v3267
        %v3273 = vmul.f32 %v3272, %v3271
        %v3274 = vmul.f32 0.5, %v3273
        %v3275 = vsub.f32 1.5, %v3274
        %v3276 = vmul.f32 %v3271, %v3275
        %vm3277 = vweird.f32 %v3267
        %vm3278 = vweird.f32 %v3271
        %vm3279 = vmor %vm3277, %vm3278
        %v3280 = vsel %vm3279, %v3271, %v3276
        %v3281 = vrsqrt.pop %v3268
        %v3282 = vmul.f32 %v3281, %v3268
        %v3283 = vmul.f32 %v3282, %v3281
        %v3284 = vmul.f32 0.5, %v3283
        %v3285 = vsub.f32 1.5, %v3284
        %v3286 = vmul.f32 %v3281, %v3285
        %vm3287 = vweird.f32 %v3268
        %vm3288 = vweird.f32 %v3281
        %vm3289 = vmor %vm3287, %vm3288
        %v3290 = vsel %vm3289, %v3281, %v3286
        %v3291 = vrsqrt.pop %v3269
        %v3292 = vmul.f32 %v3291, %v3269
        %v3293 = vmul.f32 %v3292, %v3291
        %v3294 = vmul.f32 0.5, %v3293
        %v3295 = vsub.f32 1.5, %v3294
        %v3296 = vmul.f32 %v3291, %v3295
        %vm3297 = vweird.f32 %v3269
        %vm3298 = vweird.f32 %v3291
        %vm3299 = vmor %vm3297, %vm3298
        %v3300 = vsel %vm3299, %v3291, %v3296
        %v3301 = vrsqrt.pop %v3270
        %v3302 = vmul.f32 %v3301, %v3270
        %v3303 = vmul.f32 %v3302, %v3301
        %v3304 = vmul.f32 0.5, %v3303
        %v3305 = vsub.f32 1.5, %v3304
        %v3306 = vmul.f32 %v3301, %v3305
        %vm3307 = vweird.f32 %v3270
        %vm3308 = vweird.f32 %v3301
        %vm3309 = vmor %vm3307, %vm3308
        %v3310 = vsel %vm3309, %v3301, %v3306
        %v3311 = vmul.f32 %v3243, %v3280
        %v3312 = vmul.f32 %v3244, %v3290
        %v3313 = vmul.f32 %v3245, %v3300
        %v3314 = vmul.f32 %v3246, %v3310
        %v3316 = vperm.slane %v913, 0
        %v3318 = vmul.f32 %v3311, %v3316
        %v3319 = vmul.f32 %v3312, %v3316
        %v3320 = vmul.f32 %v3313, %v3316
        %v3321 = vmul.f32 %v3314, %v3316
        %v3323 = vperm.slane %v914, 0
        %v3325 = vadd.f32 %v3318, %v3323
        %v3326 = vadd.f32 %v3319, %v3323
        %v3327 = vadd.f32 %v3320, %v3323
        %v3328 = vadd.f32 %v3321, %v3323
        %3329 = vst.msk [vmem:[#allocation2] sm:$0xff] %vm932, %v3325
        %3330 = vst.msk [vmem:[#allocation2 + $0x8] sm:$0xff] %vm932, %v3326
        %3331 = vst.msk [vmem:[#allocation2 + $0x10] sm:$0xff] %vm932, %v3327
        %3332 = vst.msk [vmem:[#allocation2 + $0x18] sm:$0xff] %vm932, %v3328
        %p3333 = scmp.eq.s32.totalorder %s38, 1
        // Predicated region
        $region105: #{tpu_custom_call.1} parent=95 // pred_check
          %p3334 = pneg %p3333
        $region106: #{tpu_custom_call.1} parent=95 // pred_check_branch
          %3336 = sbr.rel (%p3334) target = $region108
        $region107: #{tpu_custom_call.1} parent=95 // pred_region
          %v3337 = vld [vmem:[%s15] sm:$0x1]
          %v3338 = vld [vmem:[%s16] sm:$0x1]
          %v3339 = vsel %vm932, %v3325, 0.0
          %3340 = vadd.xlane.f32.xlu0 %v3339
          %v3341 = vpop.xlane.xlu0 %3340
          %v3342 = vsel %vm932, %v3326, 0.0
          %3343 = vadd.xlane.f32.xlu0 %v3342
          %v3344 = vpop.xlane.xlu0 %3343
          %v3345 = vsel %vm932, %v3327, 0.0
          %3346 = vadd.xlane.f32.xlu0 %v3345
          %v3347 = vpop.xlane.xlu0 %3346
          %v3348 = vsel %vm932, %v3328, 0.0
          %3349 = vadd.xlane.f32.xlu0 %v3348
          %v3350 = vpop.xlane.xlu0 %3349
          %v3351 = vmul.f32 %v3341, %v2999
          %v3352 = vmul.f32 %v3344, %v2999
          %v3353 = vmul.f32 %v3347, %v2999
          %v3354 = vmul.f32 %v3350, %v2999
          %v3355 = vsub.f32 %v3325, %v3351
          %v3356 = vsub.f32 %v3326, %v3352
          %v3357 = vsub.f32 %v3327, %v3353
          %v3358 = vsub.f32 %v3328, %v3354
          %v3359 = vmul.f32 %v3355, %v3355
          %v3360 = vmul.f32 %v3356, %v3356
          %v3361 = vmul.f32 %v3357, %v3357
          %v3362 = vmul.f32 %v3358, %v3358
          %v3363 = vsel %vm932, %v3359, 0.0
          %3364 = vadd.xlane.f32.xlu0 %v3363
          %v3365 = vpop.xlane.xlu0 %3364
          %v3366 = vsel %vm932, %v3360, 0.0
          %3367 = vadd.xlane.f32.xlu0 %v3366
          %v3368 = vpop.xlane.xlu0 %3367
          %v3369 = vsel %vm932, %v3361, 0.0
          %3370 = vadd.xlane.f32.xlu0 %v3369
          %v3371 = vpop.xlane.xlu0 %3370
          %v3372 = vsel %vm932, %v3362, 0.0
          %3373 = vadd.xlane.f32.xlu0 %v3372
          %v3374 = vpop.xlane.xlu0 %3373
          %v3375 = vmul.f32 %v3365, %v2999
          %v3376 = vmul.f32 %v3368, %v2999
          %v3377 = vmul.f32 %v3371, %v2999
          %v3378 = vmul.f32 %v3374, %v2999
          %v3379 = vadd.f32 %v3375, 1e-05
          %v3380 = vadd.f32 %v3376, 1e-05
          %v3381 = vadd.f32 %v3377, 1e-05
          %v3382 = vadd.f32 %v3378, 1e-05
          %v3383 = vrsqrt.pop %v3379
          %v3384 = vmul.f32 %v3383, %v3379
          %v3385 = vmul.f32 %v3384, %v3383
          %v3386 = vmul.f32 0.5, %v3385
          %v3387 = vsub.f32 1.5, %v3386
          %v3388 = vmul.f32 %v3383, %v3387
          %vm3389 = vweird.f32 %v3379
          %vm3390 = vweird.f32 %v3383
          %vm3391 = vmor %vm3389, %vm3390
          %v3392 = vsel %vm3391, %v3383, %v3388
          %v3393 = vrsqrt.pop %v3380
          %v3394 = vmul.f32 %v3393, %v3380
          %v3395 = vmul.f32 %v3394, %v3393
          %v3396 = vmul.f32 0.5, %v3395
          %v3397 = vsub.f32 1.5, %v3396
          %v3398 = vmul.f32 %v3393, %v3397
          %vm3399 = vweird.f32 %v3380
          %vm3400 = vweird.f32 %v3393
          %vm3401 = vmor %vm3399, %vm3400
          %v3402 = vsel %vm3401, %v3393, %v3398
          %v3403 = vrsqrt.pop %v3381
          %v3404 = vmul.f32 %v3403, %v3381
          %v3405 = vmul.f32 %v3404, %v3403
          %v3406 = vmul.f32 0.5, %v3405
          %v3407 = vsub.f32 1.5, %v3406
          %v3408 = vmul.f32 %v3403, %v3407
          %vm3409 = vweird.f32 %v3381
          %vm3410 = vweird.f32 %v3403
          %vm3411 = vmor %vm3409, %vm3410
          %v3412 = vsel %vm3411, %v3403, %v3408
          %v3413 = vrsqrt.pop %v3382
          %v3414 = vmul.f32 %v3413, %v3382
          %v3415 = vmul.f32 %v3414, %v3413
          %v3416 = vmul.f32 0.5, %v3415
          %v3417 = vsub.f32 1.5, %v3416
          %v3418 = vmul.f32 %v3413, %v3417
          %vm3419 = vweird.f32 %v3382
          %vm3420 = vweird.f32 %v3413
          %vm3421 = vmor %vm3419, %vm3420
          %v3422 = vsel %vm3421, %v3413, %v3418
          %v3423 = vmul.f32 %v3355, %v3392
          %v3424 = vmul.f32 %v3356, %v3402
          %v3425 = vmul.f32 %v3357, %v3412
          %v3426 = vmul.f32 %v3358, %v3422
          %v3428 = vperm.slane %v3337, 0
          %v3430 = vmul.f32 %v3423, %v3428
          %v3431 = vmul.f32 %v3424, %v3428
          %v3432 = vmul.f32 %v3425, %v3428
          %v3433 = vmul.f32 %v3426, %v3428
          %v3435 = vperm.slane %v3338, 0
          %v3437 = vadd.f32 %v3430, %v3435
          %v3438 = vadd.f32 %v3431, %v3435
          %v3439 = vadd.f32 %v3432, %v3435
          %v3440 = vadd.f32 %v3433, %v3435
          %v3441 = vpack.c.bf16 %v3438, %v3437
          %v3442 = vpack.c.bf16 %v3440, %v3439
          %v3443 = vld [vmem:[%s17] sm:$0xf]
          %v3444 = vld [vmem:[%s17 + $0x4] sm:$0xf]
          %v3445 = vld [vmem:[%s17 + $0x8] sm:$0xf]
          %v3446 = vld [vmem:[%s17 + $0xc] sm:$0xf]
          %v3447 = vld [vmem:[%s18] sm:$0x1]
          %v3449 = vperm.slane %v3447, 0
          %v3455 = vunpack.c.l.b16 %v3443
          %v3456 = vunpack.c.l.b16 %v3444
          %v3457 = vunpack.c.l.b16 %v3445
          %v3458 = vunpack.c.l.b16 %v3446
          %v3459 = vpack.c.b16 %v3456, %v3455
          %v3460 = vpack.c.b16 %v3458, %v3457
          %v3464 = vsel %vm932, %v3441, 0
          %v3467 = vsel %vm932, %v3442, 0
          %3469 = vmatpush.bf16.msra.mxu0 0
          %3470 = vmatpush.bf16.msra.mxu0 0
          %3471 = vmatpush.bf16.msra.mxu0 0
          %3472 = vmatpush.bf16.msra.mxu0 0
          %3473 = vmatpush.bf16.msra.mxu0 0
          %3474 = vmatpush.bf16.msra.mxu0 0
          %3475 = vmatpush.bf16.msra.mxu0 %v3460
          %3476 = vmatpush.bf16.msra.mxu0 %v3459
          %3477 = vmatmul.bf16.gmra.mxu0 %v3464
          %v3478 = vpop.f32.mrf.mxu0
          %v3479 = vadd.f32 %v3449, %v3478
          %v3480 = vpop.f32.mrf.mxu0
          %v3481 = vadd.f32 %v3449, %v3480
          %3482 = vmatmul.bf16.gmra.mxu0 %v3467
          %v3483 = vpop.f32.mrf.mxu0
          %v3484 = vadd.f32 %v3449, %v3483
          %v3485 = vpop.f32.mrf.mxu0
          %v3486 = vadd.f32 %v3449, %v3485
          %3487 = vdwg.mxu0
          %3488 = vst.msk [vmem:[%s830] sm:$0xff] %vm1270, %v3479
          %3489 = vst.msk [vmem:[%s830 + $0x8] sm:$0xff] %vm1270, %v3481
          %3490 = vst.msk [vmem:[%s830 + $0x10] sm:$0xff] %vm1270, %v3484
          %3491 = vst.msk [vmem:[%s830 + $0x18] sm:$0xff] %vm1270, %v3486
        $region108: #{tpu_custom_call.1} parent=95 // pred_fallthru
          _
        %s3492 = smul.u32 4, %s37
        %p3493 = scmp.lt.s32.totalorder %s3492, 3
        %s3494 = scalar_select %p3493, %s3492, 3
        %s3495 = smul.addr %s3494, 8
        %s3496 = scalar_lea.vmem %s19, %s3495
        // Predicated region
        $region109: #{tpu_custom_call.1} parent=95 // pred_check
          %p3497 = pneg %p527
        $region110: #{tpu_custom_call.1} parent=95 // pred_check_branch
          %3499 = sbr.rel (%p3497) target = $region112
        $region111: #{tpu_custom_call.1} parent=95 // pred_region
          %s3500 = smul.u32 4, %s37
        $region112: #{tpu_custom_call.1} parent=95 // pred_fallthru
          _
        // Predicated region
        $region113: #{tpu_custom_call.1} parent=95 // pred_check
          %p3501 = pneg %p527
        $region114: #{tpu_custom_call.1} parent=95 // pred_check_branch
          %3503 = sbr.rel (%p3501) target = $region116
        $region115: #{tpu_custom_call.1} parent=95 // pred_region
          %s3504 = smul.u32 4, %s37
          %p3505 = scmp.lt.s32.totalorder %s3504, 3
          %s3506 = scalar_select %p3505, %s3504, 3
          %s3507 = smul.addr %s3506, 8
          %s3508 = scalar_lea.vmem %s19, %s3507
        $region116: #{tpu_custom_call.1} parent=95 // pred_fallthru
          _
      $region96: #{tpu_custom_call.1} parent=5 // pred_fallthru
        _
      %p3509 = scmp.le.s32.totalorder 2, %s28
      // Predicated region
      $region117: #{tpu_custom_call.1} parent=5 // pred_check
        %p3510 = pneg %p3509
      $region118: #{tpu_custom_call.1} parent=5 // pred_check_branch
        %3512 = sbr.rel (%p3510) target = $region120
      $region119: #{tpu_custom_call.1} parent=5 // pred_region
        %s3513 = ssub.s32 %s28, 2
      $region120: #{tpu_custom_call.1} parent=5 // pred_fallthru
        _
    $region6: #{tpu_custom_call.1} parent=1 // loop_footer
      %s32 = sadd.s32 1, %s28
    $region7: #{tpu_custom_call.1} parent=1 // loop_footer_branch
      %27 = sbr.rel target = $region3
    $region8: #{tpu_custom_call.1} parent=1 // loop_exit
      _
    %3514 = vsyncpa [#allocation4], 1
    %s3515 = scalar_lea.sflag [#allocation4], 1
    %3516 = vsyncpa %s3515, 1

</llo_original>
